<compile_context>
chip_gen: v7x
topology: tpu7x:2x2x1
jax: 0.10.0
libtpu: 0.0.40
codegen_flags: <defaults>
</compile_context>

<pallas_src>
import math
import functools

import jax
import jax.numpy as jnp
from jax import lax
from jax.experimental import pallas as pl
from jax.experimental.pallas import tpu as pltpu


_NEG_INF = -1e9


def _layer_norm(v, g, b, eps=1e-5):
    mu = jnp.mean(v, axis=-1, keepdims=True)
    var = jnp.mean((v - mu) ** 2, axis=-1, keepdims=True)
    return (v - mu) * lax.rsqrt(var + eps) * g + b


def _decoder_layer_kernel(*refs, n_head, d_k, store_attn):
    (xq_ref, k1_ref, v1_ref, k2_ref, v2_ref, sbias_ref, xbias_ref,
     wq1_ref, bq1_ref, wo1_ref, bo1_ref,
     wq2_ref, bq2_ref, wo2_ref, bo2_ref,
     wf1_ref, bf1_ref, wf2_ref, bf2_ref,
     g0_ref, be0_ref, g1_ref, be1_ref, g2_ref, be2_ref) = refs[:25]
    if store_attn:
        out_ref, sattn_ref, xattn_ref, ctx_ref = refs[25:]
    else:
        out_ref, ctx_ref = refs[25:]
        sattn_ref = None
        xattn_ref = None

    xq_bf = xq_ref[0]                                   # [tq, D] bf16 query tile
    sbias = sbias_ref[0].astype(jnp.float32)            # [tq, T] additive bias
    xbias = xbias_ref[0].astype(jnp.float32)            # [tq, S] additive bias

    def mha(q_in_bf, k_ref, v_ref, bias, wq_ref, bq_ref, wo_ref, bo_ref, attn_ref):
        # Heads are statically unrolled: per-iteration live values are small
        # ([tq, d_k] q/ctx, [tq, L] scores) and there is no f32 [tq, D]
        # accumulator carried across heads any more (the per-head context goes
        # straight into the bf16 VMEM slab).
        for h in range(n_head):
            # Per-head Q projection: K = D matmul on the MXU, no lane slicing.
            # wq_ref / bq_ref are pre-scaled by 1/sqrt(d_k) on the host.
            q_h = (jnp.dot(q_in_bf, wq_ref[h], preferred_element_type=jnp.float32)
                   + bq_ref[h])                                       # [tq, d_k]
            k_h = k_ref[0, h]                                         # [L, d_k] bf16
            v_h = v_ref[0, h]                                         # [L, d_k] bf16
            s = lax.dot_general(q_h.astype(jnp.bfloat16), k_h,
                                (((1,), (1,)), ((), ())),
                                preferred_element_type=jnp.float32)   # [tq, L]
            s = s + bias
            s = s - jnp.max(s, axis=-1, keepdims=True)
            e = jnp.exp(s)
            p = e * pl.reciprocal(jnp.sum(e, axis=-1, keepdims=True), approx=True)
            if attn_ref is not None:
                attn_ref[0, h] = p.astype(attn_ref.dtype)
            ctx = jnp.dot(p.astype(jnp.bfloat16), v_h,
                          preferred_element_type=jnp.float32)         # [tq, d_k]
            # Head h occupies columns [h*d_k, (h+1)*d_k) of the context slab.
            ctx_ref[:, h * d_k:(h + 1) * d_k] = ctx.astype(jnp.bfloat16)
        # Single full-width output projection (one K = D MXU pass instead of
        # n_head small K = d_k passes + f32 accumulation).
        return (jnp.dot(ctx_ref[...], wo_ref[...],
                        preferred_element_type=jnp.float32) + bo_ref[...])

    # --- block 1: masked multi-head self-attention (post-norm) -----------------
    residual = xq_bf.astype(jnp.float32)
    a = mha(xq_bf, k1_ref, v1_ref, sbias,
            wq1_ref, bq1_ref, wo1_ref, bo1_ref, sattn_ref)
    # TODO(synk): attention/residual/relu dropouts are identity (eval mode).
    x = _layer_norm(residual + a, g0_ref[...], be0_ref[...])

    # --- block 2: encoder-decoder attention (k = v = enc_output, q = x) --------
    residual = x
    a = mha(x.astype(jnp.bfloat16), k2_ref, v2_ref, xbias,
            wq2_ref, bq2_ref, wo2_ref, bo2_ref, xattn_ref)
    x = _layer_norm(residual + a, g1_ref[...], be1_ref[...])

    # --- block 3: position-wise feed-forward ------------------------------------
    residual = x
    hdn = jnp.maximum(
        jnp.dot(x.astype(jnp.bfloat16), wf1_ref[...],
                preferred_element_type=jnp.float32) + bf1_ref[...],
        0.0)
    f = jnp.dot(hdn.astype(jnp.bfloat16), wf2_ref[...],
                preferred_element_type=jnp.float32) + bf2_ref[...]
    x = _layer_norm(residual + f, g2_ref[...], be2_ref[...])

    out_ref[0] = x.astype(out_ref.dtype)


def self_att_decoder_layer(x, enc_output, trg_self_attn_mask, trg_src_attn_mask,
                           params, n_head, *, q_tile=None, return_attn=True,
                           attn_dtype=jnp.float32,
                           vmem_limit_bytes=32 * 1024 * 1024):
    """Forward pass of SelfAttDecoderLayer (decoder_normalize_before=False).

    x:                   [B, T, D]
    enc_output:          [B, S, D]
    trg_self_attn_mask:  [B, T, T]  (padding mask; > 0 => masked; the causal
                                     future mask is added here, like the module)
    trg_src_attn_mask:   [B, T, S]  (> 0 => masked)

    Returns (dec_output, trg_self_attns, trg_src_attns); the attention maps are
    None when return_attn=False (skipping them removes the dominant HBM write
    traffic for long sequences, especially on v5e).
    """
    B, T, D = x.shape
    S = enc_output.shape[1]
    assert D % n_head == 0
    d_k = D // n_head

    # Query-tile heuristic.  On v6e/v5e 256 amortizes per-step overhead; on v7x
    # (64 MiB VMEM/TC) prefer 128 or less for very large D / T.  For long
    # sequences with T % 128 != 0, pad T/S to a multiple of 128 upstream instead
    # of falling back to a whole-sequence tile.
    if q_tile is None:
        if T % 256 == 0:
            q_tile = 256
        elif T % 128 == 0:
            q_tile = 128
        else:
            q_tile = T
    assert T % q_tile == 0
    n_qt = T // q_tile

    bf16 = jnp.bfloat16
    f32 = jnp.float32
    scale = 1.0 / math.sqrt(d_k)

    x_bf = x.astype(bf16)

    # ---- hoisted K/V projections: once per batch, outside the grid loop -------
    def head_major(y):  # [B, L, D] -> [B, H, L, d_k]
        b_, l_, _ = y.shape
        return y.reshape(b_, l_, n_head, d_k).transpose(0, 2, 1, 3)

    k1 = head_major(x @ params["wk1"] + params["bk1"]).astype(bf16)            # [B,H,T,dk]
    v1 = head_major(x @ params["wv1"] + params["bv1"]).astype(bf16)
    k2 = head_major(enc_output @ params["wk2"] + params["bk2"]).astype(bf16)   # [B,H,S,dk]
    v2 = head_major(enc_output @ params["wv2"] + params["bv2"]).astype(bf16)

    # ---- additive mask biases (padding + causal), precomputed host-side -------
    future = jnp.triu(jnp.ones((T, T), f32), k=1)
    self_bias = jnp.where(
        (trg_self_attn_mask.astype(f32) + future[None]) > 0, _NEG_INF, 0.0
    ).astype(bf16)                                                              # [B,T,T]
    cross_bias = jnp.where(
        trg_src_attn_mask.astype(f32) > 0, _NEG_INF, 0.0).astype(bf16)          # [B,T,S]

    # ---- weight prep: fold 1/sqrt(d_k) into Wq/bq, head-major Wq, bf16 matmuls -
    wq1_hm = (params["wq1"] * scale).reshape(D, n_head, d_k).transpose(1, 0, 2).astype(bf16)
    bq1_hm = (params["bq1"] * scale).reshape(n_head, 1, d_k).astype(f32)
    wq2_hm = (params["wq2"] * scale).reshape(D, n_head, d_k).transpose(1, 0, 2).astype(bf16)
    bq2_hm = (params["bq2"] * scale).reshape(n_head, 1, d_k).astype(f32)

    weights = [
        wq1_hm, bq1_hm, params["wo1"].astype(bf16), params["bo1"].astype(f32),
        wq2_hm, bq2_hm, params["wo2"].astype(bf16), params["bo2"].astype(f32),
        params["wf1"].astype(bf16), params["bf1"].astype(f32),
        params["wf2"].astype(bf16), params["bf2"].astype(f32),
        params["g0"].astype(f32), params["be0"].astype(f32),
        params["g1"].astype(f32), params["be1"].astype(f32),
        params["g2"].astype(f32), params["be2"].astype(f32),
    ]

    def bcast_spec(shape):
        nd = len(shape)
        return pl.BlockSpec(tuple(shape), lambda b, t, _nd=nd: (0,) * _nd)

    in_specs = [
        pl.BlockSpec((1, q_tile, D), lambda b, t: (b, t, 0)),          # x query tile
        pl.BlockSpec((1, n_head, T, d_k), lambda b, t: (b, 0, 0, 0)),  # K1 (const in t)
        pl.BlockSpec((1, n_head, T, d_k), lambda b, t: (b, 0, 0, 0)),  # V1
        pl.BlockSpec((1, n_head, S, d_k), lambda b, t: (b, 0, 0, 0)),  # K2
        pl.BlockSpec((1, n_head, S, d_k), lambda b, t: (b, 0, 0, 0)),  # V2
        pl.BlockSpec((1, q_tile, T), lambda b, t: (b, t, 0)),          # self bias tile
        pl.BlockSpec((1, q_tile, S), lambda b, t: (b, t, 0)),          # cross bias tile
    ] + [bcast_spec(w.shape) for w in weights]

    out_shape = [jax.ShapeDtypeStruct((B, T, D), x.dtype)]
    out_specs = [pl.BlockSpec((1, q_tile, D), lambda b, t: (b, t, 0))]
    if return_attn:
        out_shape += [jax.ShapeDtypeStruct((B, n_head, T, T), attn_dtype),
                      jax.ShapeDtypeStruct((B, n_head, T, S), attn_dtype)]
        out_specs += [pl.BlockSpec((1, n_head, q_tile, T), lambda b, t: (b, 0, t, 0)),
                      pl.BlockSpec((1, n_head, q_tile, S), lambda b, t: (b, 0, t, 0))]

    kernel = functools.partial(_decoder_layer_kernel,
                               n_head=n_head, d_k=d_k, store_attn=return_attn)

    outs = pl.pallas_call(
        kernel,
        out_shape=tuple(out_shape),
        grid_spec=pltpu.PrefetchScalarGridSpec(
            num_scalar_prefetch=0,
            grid=(B, n_qt),
            in_specs=in_specs,
            out_specs=out_specs,
            scratch_shapes=[pltpu.VMEM((q_tile, D), bf16)],   # context slab
        ),
        compiler_params=pltpu.CompilerParams(
            dimension_semantics=("parallel", "parallel"),
            vmem_limit_bytes=vmem_limit_bytes,
        ),
    )(x_bf, k1, v1, k2, v2, self_bias, cross_bias, *weights)

    if return_attn:
        return outs
    return outs[0], None, None


def init_params(key, d_model, d_ff):
    """Deterministic synthetic weights matching the module's parameter shapes."""
    params = {}
    shapes = {
        # self-attention projections
        "wq1": (d_model, d_model), "wk1": (d_model, d_model),
        "wv1": (d_model, d_model), "wo1": (d_model, d_model),
        # cross-attention projections
        "wq2": (d_model, d_model), "wk2": (d_model, d_model),
        "wv2": (d_model, d_model), "wo2": (d_model, d_model),
        # position-wise FFN
        "wf1": (d_model, d_ff), "wf2": (d_ff, d_model),
    }
    keys = jax.random.split(key, len(shapes))
    for k_rng, (name, shp) in zip(keys, sorted(shapes.items())):
        params[name] = 0.02 * jax.random.normal(k_rng, shp, jnp.float32)
    # biases kept 2-D [1, dim] for lane-friendly broadcasting
    for name, dim in [("bq1", d_model), ("bk1", d_model), ("bv1", d_model),
                      ("bo1", d_model), ("bq2", d_model), ("bk2", d_model),
                      ("bv2", d_model), ("bo2", d_model),
                      ("bf1", d_ff), ("bf2", d_model)]:
        params[name] = jnp.zeros((1, dim), jnp.float32)
    # layer norm affine params (elementwise_affine=True)
    for i in range(3):
        params[f"g{i}"] = jnp.ones((1, d_model), jnp.float32)
        params[f"be{i}"] = jnp.zeros((1, d_model), jnp.float32)
    return params


if __name__ == "__main__":
    B, T, S, D, H, FF = 2, 8, 8, 32, 4, 64

    key = jax.random.PRNGKey(0)
    kx, ke, kp = jax.random.split(key, 3)
    x = jax.random.normal(kx, (B, T, D), jnp.float32)
    enc = jax.random.normal(ke, (B, S, D), jnp.float32)
    params = init_params(kp, D, FF)

    # Padding masks (LongTensor semantics: value > 0 => masked key position).
    # The causal/future mask is added by the wrapper, like the PyTorch module.
    trg_self_pad = jnp.zeros((B, T, T), jnp.float32)
    trg_src_pad = jnp.zeros((B, T, S), jnp.float32).at[1, :, S - 1].set(1.0)

    dec_out, self_attns, src_attns = self_att_decoder_layer(
        x, enc, trg_self_pad, trg_src_pad, params, n_head=H)
    jax.block_until_ready((dec_out, self_attns, src_attns))

    assert dec_out.shape == (B, T, D)
    assert self_attns.shape == (B, H, T, T)
    assert src_attns.shape == (B, H, T, S)
    assert bool(jnp.all(jnp.isfinite(dec_out)))
    assert bool(jnp.all(jnp.isfinite(self_attns)))
    assert bool(jnp.all(jnp.isfinite(src_attns)))
    print("KERNEL_OK")
</pallas_src>

<mosaic_0001>
module attributes {stable_mosaic.version = 11 : i64} {
  func.func @_decoder_layer_kernel(%arg0: i32, %arg1: i32, %arg2: memref<1x8x32xbf16, #tpu.memory_space<vmem>>, %arg3: memref<1x4x8x8xbf16, #tpu.memory_space<vmem>>, %arg4: memref<1x4x8x8xbf16, #tpu.memory_space<vmem>>, %arg5: memref<1x4x8x8xbf16, #tpu.memory_space<vmem>>, %arg6: memref<1x4x8x8xbf16, #tpu.memory_space<vmem>>, %arg7: memref<1x8x8xbf16, #tpu.memory_space<vmem>>, %arg8: memref<1x8x8xbf16, #tpu.memory_space<vmem>>, %arg9: memref<4x32x8xbf16, #tpu.memory_space<vmem>>, %arg10: memref<4x1x8xf32, #tpu.memory_space<vmem>>, %arg11: memref<32x32xbf16, #tpu.memory_space<vmem>>, %arg12: memref<1x32xf32, #tpu.memory_space<vmem>>, %arg13: memref<4x32x8xbf16, #tpu.memory_space<vmem>>, %arg14: memref<4x1x8xf32, #tpu.memory_space<vmem>>, %arg15: memref<32x32xbf16, #tpu.memory_space<vmem>>, %arg16: memref<1x32xf32, #tpu.memory_space<vmem>>, %arg17: memref<32x64xbf16, #tpu.memory_space<vmem>>, %arg18: memref<1x64xf32, #tpu.memory_space<vmem>>, %arg19: memref<64x32xbf16, #tpu.memory_space<vmem>>, %arg20: memref<1x32xf32, #tpu.memory_space<vmem>>, %arg21: memref<1x32xf32, #tpu.memory_space<vmem>>, %arg22: memref<1x32xf32, #tpu.memory_space<vmem>>, %arg23: memref<1x32xf32, #tpu.memory_space<vmem>>, %arg24: memref<1x32xf32, #tpu.memory_space<vmem>>, %arg25: memref<1x32xf32, #tpu.memory_space<vmem>>, %arg26: memref<1x32xf32, #tpu.memory_space<vmem>>, %arg27: memref<1x8x32xf32, #tpu.memory_space<vmem>>, %arg28: memref<1x4x8x8xf32, #tpu.memory_space<vmem>>, %arg29: memref<1x4x8x8xf32, #tpu.memory_space<vmem>>, %arg30: memref<8x32xbf16, #tpu.memory_space<vmem>>) attributes {dimension_semantics = [#tpu.dimension_semantics<parallel>, #tpu.dimension_semantics<parallel>], iteration_bounds = array<i64: 2, 1>, scalar_prefetch = 0 : i64, scratch_operands = 1 : i64, tpu.core_type = #tpu.core_type<tc>, window_params = [{transform_indices = @transform_0, window_bounds = array<i64: 1, 8, 32>}, {transform_indices = @transform_1, window_bounds = array<i64: 1, 4, 8, 8>}, {transform_indices = @transform_2, window_bounds = array<i64: 1, 4, 8, 8>}, {transform_indices = @transform_3, window_bounds = array<i64: 1, 4, 8, 8>}, {transform_indices = @transform_4, window_bounds = array<i64: 1, 4, 8, 8>}, {transform_indices = @transform_5, window_bounds = array<i64: 1, 8, 8>}, {transform_indices = @transform_6, window_bounds = array<i64: 1, 8, 8>}, {pipeline_mode = #tpu.pipeline_mode<synchronous>, transform_indices = @transform_7, window_bounds = array<i64: 4, 32, 8>}, {pipeline_mode = #tpu.pipeline_mode<synchronous>, transform_indices = @transform_8, window_bounds = array<i64: 4, 1, 8>}, {pipeline_mode = #tpu.pipeline_mode<synchronous>, transform_indices = @transform_9, window_bounds = array<i64: 32, 32>}, {pipeline_mode = #tpu.pipeline_mode<synchronous>, transform_indices = @transform_10, window_bounds = array<i64: 1, 32>}, {pipeline_mode = #tpu.pipeline_mode<synchronous>, transform_indices = @transform_11, window_bounds = array<i64: 4, 32, 8>}, {pipeline_mode = #tpu.pipeline_mode<synchronous>, transform_indices = @transform_12, window_bounds = array<i64: 4, 1, 8>}, {pipeline_mode = #tpu.pipeline_mode<synchronous>, transform_indices = @transform_13, window_bounds = array<i64: 32, 32>}, {pipeline_mode = #tpu.pipeline_mode<synchronous>, transform_indices = @transform_14, window_bounds = array<i64: 1, 32>}, {pipeline_mode = #tpu.pipeline_mode<synchronous>, transform_indices = @transform_15, window_bounds = array<i64: 32, 64>}, {pipeline_mode = #tpu.pipeline_mode<synchronous>, transform_indices = @transform_16, window_bounds = array<i64: 1, 64>}, {pipeline_mode = #tpu.pipeline_mode<synchronous>, transform_indices = @transform_17, window_bounds = array<i64: 64, 32>}, {pipeline_mode = #tpu.pipeline_mode<synchronous>, transform_indices = @transform_18, window_bounds = array<i64: 1, 32>}, {pipeline_mode = #tpu.pipeline_mode<synchronous>, transform_indices = @transform_19, window_bounds = array<i64: 1, 32>}, {pipeline_mode = #tpu.pipeline_mode<synchronous>, transform_indices = @transform_20, window_bounds = array<i64: 1, 32>}, {pipeline_mode = #tpu.pipeline_mode<synchronous>, transform_indices = @transform_21, window_bounds = array<i64: 1, 32>}, {pipeline_mode = #tpu.pipeline_mode<synchronous>, transform_indices = @transform_22, window_bounds = array<i64: 1, 32>}, {pipeline_mode = #tpu.pipeline_mode<synchronous>, transform_indices = @transform_23, window_bounds = array<i64: 1, 32>}, {pipeline_mode = #tpu.pipeline_mode<synchronous>, transform_indices = @transform_24, window_bounds = array<i64: 1, 32>}, {transform_indices = @transform_25, window_bounds = array<i64: 1, 8, 32>}, {transform_indices = @transform_26, window_bounds = array<i64: 1, 4, 8, 8>}, {transform_indices = @transform_27, window_bounds = array<i64: 1, 4, 8, 8>}]} {
    %c0 = arith.constant 0 : index
    %c0_0 = arith.constant 0 : index
    %c0_1 = arith.constant 0 : index
    %0 = vector.load %arg2[%c0, %c0_0, %c0_1] : memref<1x8x32xbf16, #tpu.memory_space<vmem>>, vector<1x8x32xbf16>
    %1 = vector.shape_cast %0 : vector<1x8x32xbf16> to vector<8x32xbf16>
    %c0_2 = arith.constant 0 : index
    %c0_3 = arith.constant 0 : index
    %c0_4 = arith.constant 0 : index
    %2 = vector.load %arg7[%c0_2, %c0_3, %c0_4] : memref<1x8x8xbf16, #tpu.memory_space<vmem>>, vector<1x8x8xbf16>
    %3 = vector.shape_cast %2 : vector<1x8x8xbf16> to vector<8x8xbf16>
    %4 = arith.extf %3 : vector<8x8xbf16> to vector<8x8xf32>
    %c0_5 = arith.constant 0 : index
    %c0_6 = arith.constant 0 : index
    %c0_7 = arith.constant 0 : index
    %5 = vector.load %arg8[%c0_5, %c0_6, %c0_7] : memref<1x8x8xbf16, #tpu.memory_space<vmem>>, vector<1x8x8xbf16>
    %6 = vector.shape_cast %5 : vector<1x8x8xbf16> to vector<8x8xbf16>
    %7 = arith.extf %6 : vector<8x8xbf16> to vector<8x8xf32>
    %8 = arith.extf %1 : vector<8x32xbf16> to vector<8x32xf32>
    %c0_8 = arith.constant 0 : index
    %c0_9 = arith.constant 0 : index
    %c0_10 = arith.constant 0 : index
    %9 = vector.load %arg9[%c0_8, %c0_9, %c0_10] : memref<4x32x8xbf16, #tpu.memory_space<vmem>>, vector<1x32x8xbf16>
    %10 = vector.shape_cast %9 : vector<1x32x8xbf16> to vector<32x8xbf16>
    %cst = arith.constant dense<0.000000e+00> : vector<8x8xf32>
    %11 = tpu.matmul %1, %10, %cst {dimension_numbers = #tpu.dot_dimension_numbers<[1], [0], [0], [1], [0, 0, 1, 1], [], []>} : vector<8x32xbf16>, vector<32x8xbf16>, vector<8x8xf32> -> vector<8x8xf32>
    %c0_11 = arith.constant 0 : index
    %c0_12 = arith.constant 0 : index
    %c0_13 = arith.constant 0 : index
    %12 = vector.load %arg10[%c0_11, %c0_12, %c0_13] : memref<4x1x8xf32, #tpu.memory_space<vmem>>, vector<1x1x8xf32>
    %13 = vector.shape_cast %12 : vector<1x1x8xf32> to vector<1x8xf32>
    %14 = vector.broadcast %13 : vector<1x8xf32> to vector<8x8xf32>
    %15 = arith.addf %11, %14 : vector<8x8xf32>
    %c0_14 = arith.constant 0 : index
    %c0_15 = arith.constant 0 : index
    %c0_16 = arith.constant 0 : index
    %c0_17 = arith.constant 0 : index
    %16 = vector.load %arg3[%c0_14, %c0_15, %c0_16, %c0_17] : memref<1x4x8x8xbf16, #tpu.memory_space<vmem>>, vector<1x1x8x8xbf16>
    %17 = vector.shape_cast %16 : vector<1x1x8x8xbf16> to vector<8x8xbf16>
    %c0_18 = arith.constant 0 : index
    %c0_19 = arith.constant 0 : index
    %c0_20 = arith.constant 0 : index
    %c0_21 = arith.constant 0 : index
    %18 = vector.load %arg4[%c0_18, %c0_19, %c0_20, %c0_21] : memref<1x4x8x8xbf16, #tpu.memory_space<vmem>>, vector<1x1x8x8xbf16>
    %19 = vector.shape_cast %18 : vector<1x1x8x8xbf16> to vector<8x8xbf16>
    %20 = arith.truncf %15 : vector<8x8xf32> to vector<8x8xbf16>
    %cst_22 = arith.constant dense<0.000000e+00> : vector<8x8xf32>
    %21 = tpu.matmul %20, %17, %cst_22 {dimension_numbers = #tpu.dot_dimension_numbers<[1], [1], [0], [0], [0, 0, 1, 0], [], []>} : vector<8x8xbf16>, vector<8x8xbf16>, vector<8x8xf32> -> vector<8x8xf32>
    %22 = arith.addf %21, %4 : vector<8x8xf32>
    %cst_23 = arith.constant dense<0xFF800000> : vector<8xf32>
    %23 = vector.multi_reduction <maximumf>, %22, %cst_23 [1] : vector<8x8xf32> to vector<8xf32>
    %24 = vector.shape_cast %23 : vector<8xf32> to vector<8x1xf32>
    %25 = vector.broadcast %24 : vector<8x1xf32> to vector<8x8xf32>
    %26 = arith.subf %22, %25 : vector<8x8xf32>
    %27 = math.exp %26 : vector<8x8xf32>
    %cst_24 = arith.constant dense<0.000000e+00> : vector<8xf32>
    %28 = vector.multi_reduction <add>, %27, %cst_24 [1] : vector<8x8xf32> to vector<8xf32>
    %29 = vector.shape_cast %28 : vector<8xf32> to vector<8x1xf32>
    %30 = tpu.reciprocal %29 {approx = true} : vector<8x1xf32> -> vector<8x1xf32>
    %31 = vector.broadcast %30 : vector<8x1xf32> to vector<8x8xf32>
    %32 = arith.mulf %27, %31 : vector<8x8xf32>
    %c0_25 = arith.constant 0 : index
    %c0_26 = arith.constant 0 : index
    %c0_27 = arith.constant 0 : index
    %c0_28 = arith.constant 0 : index
    %33 = vector.load %arg28[%c0_25, %c0_26, %c0_27, %c0_28] : memref<1x4x8x8xf32, #tpu.memory_space<vmem>>, vector<1x1x8x8xf32>
    %34 = vector.shape_cast %33 : vector<1x1x8x8xf32> to vector<8x8xf32>
    %35 = vector.shape_cast %32 : vector<8x8xf32> to vector<1x1x8x8xf32>
    tpu.vector_store %arg28[%c0_25, %c0_26, %c0_27, %c0_28], %35 {strides = array<i32>} : memref<1x4x8x8xf32, #tpu.memory_space<vmem>>, vector<1x1x8x8xf32>,
    %36 = arith.truncf %32 : vector<8x8xf32> to vector<8x8xbf16>
    %cst_29 = arith.constant dense<0.000000e+00> : vector<8x8xf32>
    %37 = tpu.matmul %36, %19, %cst_29 {dimension_numbers = #tpu.dot_dimension_numbers<[1], [0], [0], [1], [0, 0, 1, 1], [], []>} : vector<8x8xbf16>, vector<8x8xbf16>, vector<8x8xf32> -> vector<8x8xf32>
    %38 = arith.truncf %37 : vector<8x8xf32> to vector<8x8xbf16>
    %c0_30 = arith.constant 0 : index
    %c0_31 = arith.constant 0 : index
    %39 = vector.load %arg30[%c0_30, %c0_31] : memref<8x32xbf16, #tpu.memory_space<vmem>>, vector<8x8xbf16>
    tpu.vector_store %arg30[%c0_30, %c0_31], %38 {strides = array<i32>} : memref<8x32xbf16, #tpu.memory_space<vmem>>, vector<8x8xbf16>,
    %c1 = arith.constant 1 : index
    %c0_32 = arith.constant 0 : index
    %c0_33 = arith.constant 0 : index
    %40 = vector.load %arg9[%c1, %c0_32, %c0_33] : memref<4x32x8xbf16, #tpu.memory_space<vmem>>, vector<1x32x8xbf16>
    %41 = vector.shape_cast %40 : vector<1x32x8xbf16> to vector<32x8xbf16>
    %cst_34 = arith.constant dense<0.000000e+00> : vector<8x8xf32>
    %42 = tpu.matmul %1, %41, %cst_34 {dimension_numbers = #tpu.dot_dimension_numbers<[1], [0], [0], [1], [0, 0, 1, 1], [], []>} : vector<8x32xbf16>, vector<32x8xbf16>, vector<8x8xf32> -> vector<8x8xf32>
    %c1_35 = arith.constant 1 : index
    %c0_36 = arith.constant 0 : index
    %c0_37 = arith.constant 0 : index
    %43 = vector.load %arg10[%c1_35, %c0_36, %c0_37] : memref<4x1x8xf32, #tpu.memory_space<vmem>>, vector<1x1x8xf32>
    %44 = vector.shape_cast %43 : vector<1x1x8xf32> to vector<1x8xf32>
    %45 = vector.broadcast %44 : vector<1x8xf32> to vector<8x8xf32>
    %46 = arith.addf %42, %45 : vector<8x8xf32>
    %c0_38 = arith.constant 0 : index
    %c1_39 = arith.constant 1 : index
    %c0_40 = arith.constant 0 : index
    %c0_41 = arith.constant 0 : index
    %47 = vector.load %arg3[%c0_38, %c1_39, %c0_40, %c0_41] : memref<1x4x8x8xbf16, #tpu.memory_space<vmem>>, vector<1x1x8x8xbf16>
    %48 = vector.shape_cast %47 : vector<1x1x8x8xbf16> to vector<8x8xbf16>
    %c0_42 = arith.constant 0 : index
    %c1_43 = arith.constant 1 : index
    %c0_44 = arith.constant 0 : index
    %c0_45 = arith.constant 0 : index
    %49 = vector.load %arg4[%c0_42, %c1_43, %c0_44, %c0_45] : memref<1x4x8x8xbf16, #tpu.memory_space<vmem>>, vector<1x1x8x8xbf16>
    %50 = vector.shape_cast %49 : vector<1x1x8x8xbf16> to vector<8x8xbf16>
    %51 = arith.truncf %46 : vector<8x8xf32> to vector<8x8xbf16>
    %cst_46 = arith.constant dense<0.000000e+00> : vector<8x8xf32>
    %52 = tpu.matmul %51, %48, %cst_46 {dimension_numbers = #tpu.dot_dimension_numbers<[1], [1], [0], [0], [0, 0, 1, 0], [], []>} : vector<8x8xbf16>, vector<8x8xbf16>, vector<8x8xf32> -> vector<8x8xf32>
    %53 = arith.addf %52, %4 : vector<8x8xf32>
    %cst_47 = arith.constant dense<0xFF800000> : vector<8xf32>
    %54 = vector.multi_reduction <maximumf>, %53, %cst_47 [1] : vector<8x8xf32> to vector<8xf32>
    %55 = vector.shape_cast %54 : vector<8xf32> to vector<8x1xf32>
    %56 = vector.broadcast %55 : vector<8x1xf32> to vector<8x8xf32>
    %57 = arith.subf %53, %56 : vector<8x8xf32>
    %58 = math.exp %57 : vector<8x8xf32>
    %cst_48 = arith.constant dense<0.000000e+00> : vector<8xf32>
    %59 = vector.multi_reduction <add>, %58, %cst_48 [1] : vector<8x8xf32> to vector<8xf32>
    %60 = vector.shape_cast %59 : vector<8xf32> to vector<8x1xf32>
    %61 = tpu.reciprocal %60 {approx = true} : vector<8x1xf32> -> vector<8x1xf32>
    %62 = vector.broadcast %61 : vector<8x1xf32> to vector<8x8xf32>
    %63 = arith.mulf %58, %62 : vector<8x8xf32>
    %c0_49 = arith.constant 0 : index
    %c1_50 = arith.constant 1 : index
    %c0_51 = arith.constant 0 : index
    %c0_52 = arith.constant 0 : index
    %64 = vector.load %arg28[%c0_49, %c1_50, %c0_51, %c0_52] : memref<1x4x8x8xf32, #tpu.memory_space<vmem>>, vector<1x1x8x8xf32>
    %65 = vector.shape_cast %64 : vector<1x1x8x8xf32> to vector<8x8xf32>
    %66 = vector.shape_cast %63 : vector<8x8xf32> to vector<1x1x8x8xf32>
    tpu.vector_store %arg28[%c0_49, %c1_50, %c0_51, %c0_52], %66 {strides = array<i32>} : memref<1x4x8x8xf32, #tpu.memory_space<vmem>>, vector<1x1x8x8xf32>,
    %67 = arith.truncf %63 : vector<8x8xf32> to vector<8x8xbf16>
    %cst_53 = arith.constant dense<0.000000e+00> : vector<8x8xf32>
    %68 = tpu.matmul %67, %50, %cst_53 {dimension_numbers = #tpu.dot_dimension_numbers<[1], [0], [0], [1], [0, 0, 1, 1], [], []>} : vector<8x8xbf16>, vector<8x8xbf16>, vector<8x8xf32> -> vector<8x8xf32>
    %69 = arith.truncf %68 : vector<8x8xf32> to vector<8x8xbf16>
    %c0_54 = arith.constant 0 : index
    %c8 = arith.constant 8 : index
    %70 = vector.load %arg30[%c0_54, %c8] : memref<8x32xbf16, #tpu.memory_space<vmem>>, vector<8x8xbf16>
    tpu.vector_store %arg30[%c0_54, %c8], %69 {strides = array<i32>} : memref<8x32xbf16, #tpu.memory_space<vmem>>, vector<8x8xbf16>,
    %c2 = arith.constant 2 : index
    %c0_55 = arith.constant 0 : index
    %c0_56 = arith.constant 0 : index
    %71 = vector.load %arg9[%c2, %c0_55, %c0_56] : memref<4x32x8xbf16, #tpu.memory_space<vmem>>, vector<1x32x8xbf16>
    %72 = vector.shape_cast %71 : vector<1x32x8xbf16> to vector<32x8xbf16>
    %cst_57 = arith.constant dense<0.000000e+00> : vector<8x8xf32>
    %73 = tpu.matmul %1, %72, %cst_57 {dimension_numbers = #tpu.dot_dimension_numbers<[1], [0], [0], [1], [0, 0, 1, 1], [], []>} : vector<8x32xbf16>, vector<32x8xbf16>, vector<8x8xf32> -> vector<8x8xf32>
    %c2_58 = arith.constant 2 : index
    %c0_59 = arith.constant 0 : index
    %c0_60 = arith.constant 0 : index
    %74 = vector.load %arg10[%c2_58, %c0_59, %c0_60] : memref<4x1x8xf32, #tpu.memory_space<vmem>>, vector<1x1x8xf32>
    %75 = vector.shape_cast %74 : vector<1x1x8xf32> to vector<1x8xf32>
    %76 = vector.broadcast %75 : vector<1x8xf32> to vector<8x8xf32>
    %77 = arith.addf %73, %76 : vector<8x8xf32>
    %c0_61 = arith.constant 0 : index
    %c2_62 = arith.constant 2 : index
    %c0_63 = arith.constant 0 : index
    %c0_64 = arith.constant 0 : index
    %78 = vector.load %arg3[%c0_61, %c2_62, %c0_63, %c0_64] : memref<1x4x8x8xbf16, #tpu.memory_space<vmem>>, vector<1x1x8x8xbf16>
    %79 = vector.shape_cast %78 : vector<1x1x8x8xbf16> to vector<8x8xbf16>
    %c0_65 = arith.constant 0 : index
    %c2_66 = arith.constant 2 : index
    %c0_67 = arith.constant 0 : index
    %c0_68 = arith.constant 0 : index
    %80 = vector.load %arg4[%c0_65, %c2_66, %c0_67, %c0_68] : memref<1x4x8x8xbf16, #tpu.memory_space<vmem>>, vector<1x1x8x8xbf16>
    %81 = vector.shape_cast %80 : vector<1x1x8x8xbf16> to vector<8x8xbf16>
    %82 = arith.truncf %77 : vector<8x8xf32> to vector<8x8xbf16>
    %cst_69 = arith.constant dense<0.000000e+00> : vector<8x8xf32>
    %83 = tpu.matmul %82, %79, %cst_69 {dimension_numbers = #tpu.dot_dimension_numbers<[1], [1], [0], [0], [0, 0, 1, 0], [], []>} : vector<8x8xbf16>, vector<8x8xbf16>, vector<8x8xf32> -> vector<8x8xf32>
    %84 = arith.addf %83, %4 : vector<8x8xf32>
    %cst_70 = arith.constant dense<0xFF800000> : vector<8xf32>
    %85 = vector.multi_reduction <maximumf>, %84, %cst_70 [1] : vector<8x8xf32> to vector<8xf32>
    %86 = vector.shape_cast %85 : vector<8xf32> to vector<8x1xf32>
    %87 = vector.broadcast %86 : vector<8x1xf32> to vector<8x8xf32>
    %88 = arith.subf %84, %87 : vector<8x8xf32>
    %89 = math.exp %88 : vector<8x8xf32>
    %cst_71 = arith.constant dense<0.000000e+00> : vector<8xf32>
    %90 = vector.multi_reduction <add>, %89, %cst_71 [1] : vector<8x8xf32> to vector<8xf32>
    %91 = vector.shape_cast %90 : vector<8xf32> to vector<8x1xf32>
    %92 = tpu.reciprocal %91 {approx = true} : vector<8x1xf32> -> vector<8x1xf32>
    %93 = vector.broadcast %92 : vector<8x1xf32> to vector<8x8xf32>
    %94 = arith.mulf %89, %93 : vector<8x8xf32>
    %c0_72 = arith.constant 0 : index
    %c2_73 = arith.constant 2 : index
    %c0_74 = arith.constant 0 : index
    %c0_75 = arith.constant 0 : index
    %95 = vector.load %arg28[%c0_72, %c2_73, %c0_74, %c0_75] : memref<1x4x8x8xf32, #tpu.memory_space<vmem>>, vector<1x1x8x8xf32>
    %96 = vector.shape_cast %95 : vector<1x1x8x8xf32> to vector<8x8xf32>
    %97 = vector.shape_cast %94 : vector<8x8xf32> to vector<1x1x8x8xf32>
    tpu.vector_store %arg28[%c0_72, %c2_73, %c0_74, %c0_75], %97 {strides = array<i32>} : memref<1x4x8x8xf32, #tpu.memory_space<vmem>>, vector<1x1x8x8xf32>,
    %98 = arith.truncf %94 : vector<8x8xf32> to vector<8x8xbf16>
    %cst_76 = arith.constant dense<0.000000e+00> : vector<8x8xf32>
    %99 = tpu.matmul %98, %81, %cst_76 {dimension_numbers = #tpu.dot_dimension_numbers<[1], [0], [0], [1], [0, 0, 1, 1], [], []>} : vector<8x8xbf16>, vector<8x8xbf16>, vector<8x8xf32> -> vector<8x8xf32>
    %100 = arith.truncf %99 : vector<8x8xf32> to vector<8x8xbf16>
    %c0_77 = arith.constant 0 : index
    %c16 = arith.constant 16 : index
    %101 = vector.load %arg30[%c0_77, %c16] : memref<8x32xbf16, #tpu.memory_space<vmem>>, vector<8x8xbf16>
    tpu.vector_store %arg30[%c0_77, %c16], %100 {strides = array<i32>} : memref<8x32xbf16, #tpu.memory_space<vmem>>, vector<8x8xbf16>,
    %c3 = arith.constant 3 : index
    %c0_78 = arith.constant 0 : index
    %c0_79 = arith.constant 0 : index
    %102 = vector.load %arg9[%c3, %c0_78, %c0_79] : memref<4x32x8xbf16, #tpu.memory_space<vmem>>, vector<1x32x8xbf16>
    %103 = vector.shape_cast %102 : vector<1x32x8xbf16> to vector<32x8xbf16>
    %cst_80 = arith.constant dense<0.000000e+00> : vector<8x8xf32>
    %104 = tpu.matmul %1, %103, %cst_80 {dimension_numbers = #tpu.dot_dimension_numbers<[1], [0], [0], [1], [0, 0, 1, 1], [], []>} : vector<8x32xbf16>, vector<32x8xbf16>, vector<8x8xf32> -> vector<8x8xf32>
    %c3_81 = arith.constant 3 : index
    %c0_82 = arith.constant 0 : index
    %c0_83 = arith.constant 0 : index
    %105 = vector.load %arg10[%c3_81, %c0_82, %c0_83] : memref<4x1x8xf32, #tpu.memory_space<vmem>>, vector<1x1x8xf32>
    %106 = vector.shape_cast %105 : vector<1x1x8xf32> to vector<1x8xf32>
    %107 = vector.broadcast %106 : vector<1x8xf32> to vector<8x8xf32>
    %108 = arith.addf %104, %107 : vector<8x8xf32>
    %c0_84 = arith.constant 0 : index
    %c3_85 = arith.constant 3 : index
    %c0_86 = arith.constant 0 : index
    %c0_87 = arith.constant 0 : index
    %109 = vector.load %arg3[%c0_84, %c3_85, %c0_86, %c0_87] : memref<1x4x8x8xbf16, #tpu.memory_space<vmem>>, vector<1x1x8x8xbf16>
    %110 = vector.shape_cast %109 : vector<1x1x8x8xbf16> to vector<8x8xbf16>
    %c0_88 = arith.constant 0 : index
    %c3_89 = arith.constant 3 : index
    %c0_90 = arith.constant 0 : index
    %c0_91 = arith.constant 0 : index
    %111 = vector.load %arg4[%c0_88, %c3_89, %c0_90, %c0_91] : memref<1x4x8x8xbf16, #tpu.memory_space<vmem>>, vector<1x1x8x8xbf16>
    %112 = vector.shape_cast %111 : vector<1x1x8x8xbf16> to vector<8x8xbf16>
    %113 = arith.truncf %108 : vector<8x8xf32> to vector<8x8xbf16>
    %cst_92 = arith.constant dense<0.000000e+00> : vector<8x8xf32>
    %114 = tpu.matmul %113, %110, %cst_92 {dimension_numbers = #tpu.dot_dimension_numbers<[1], [1], [0], [0], [0, 0, 1, 0], [], []>} : vector<8x8xbf16>, vector<8x8xbf16>, vector<8x8xf32> -> vector<8x8xf32>
    %115 = arith.addf %114, %4 : vector<8x8xf32>
    %cst_93 = arith.constant dense<0xFF800000> : vector<8xf32>
    %116 = vector.multi_reduction <maximumf>, %115, %cst_93 [1] : vector<8x8xf32> to vector<8xf32>
    %117 = vector.shape_cast %116 : vector<8xf32> to vector<8x1xf32>
    %118 = vector.broadcast %117 : vector<8x1xf32> to vector<8x8xf32>
    %119 = arith.subf %115, %118 : vector<8x8xf32>
    %120 = math.exp %119 : vector<8x8xf32>
    %cst_94 = arith.constant dense<0.000000e+00> : vector<8xf32>
    %121 = vector.multi_reduction <add>, %120, %cst_94 [1] : vector<8x8xf32> to vector<8xf32>
    %122 = vector.shape_cast %121 : vector<8xf32> to vector<8x1xf32>
    %123 = tpu.reciprocal %122 {approx = true} : vector<8x1xf32> -> vector<8x1xf32>
    %124 = vector.broadcast %123 : vector<8x1xf32> to vector<8x8xf32>
    %125 = arith.mulf %120, %124 : vector<8x8xf32>
    %c0_95 = arith.constant 0 : index
    %c3_96 = arith.constant 3 : index
    %c0_97 = arith.constant 0 : index
    %c0_98 = arith.constant 0 : index
    %126 = vector.load %arg28[%c0_95, %c3_96, %c0_97, %c0_98] : memref<1x4x8x8xf32, #tpu.memory_space<vmem>>, vector<1x1x8x8xf32>
    %127 = vector.shape_cast %126 : vector<1x1x8x8xf32> to vector<8x8xf32>
    %128 = vector.shape_cast %125 : vector<8x8xf32> to vector<1x1x8x8xf32>
    tpu.vector_store %arg28[%c0_95, %c3_96, %c0_97, %c0_98], %128 {strides = array<i32>} : memref<1x4x8x8xf32, #tpu.memory_space<vmem>>, vector<1x1x8x8xf32>,
    %129 = arith.truncf %125 : vector<8x8xf32> to vector<8x8xbf16>
    %cst_99 = arith.constant dense<0.000000e+00> : vector<8x8xf32>
    %130 = tpu.matmul %129, %112, %cst_99 {dimension_numbers = #tpu.dot_dimension_numbers<[1], [0], [0], [1], [0, 0, 1, 1], [], []>} : vector<8x8xbf16>, vector<8x8xbf16>, vector<8x8xf32> -> vector<8x8xf32>
    %131 = arith.truncf %130 : vector<8x8xf32> to vector<8x8xbf16>
    %c0_100 = arith.constant 0 : index
    %c24 = arith.constant 24 : index
    %132 = vector.load %arg30[%c0_100, %c24] : memref<8x32xbf16, #tpu.memory_space<vmem>>, vector<8x8xbf16>
    tpu.vector_store %arg30[%c0_100, %c24], %131 {strides = array<i32>} : memref<8x32xbf16, #tpu.memory_space<vmem>>, vector<8x8xbf16>,
    %c0_101 = arith.constant 0 : index
    %c0_102 = arith.constant 0 : index
    %133 = vector.load %arg30[%c0_101, %c0_102] : memref<8x32xbf16, #tpu.memory_space<vmem>>, vector<8x32xbf16>
    %c0_103 = arith.constant 0 : index
    %c0_104 = arith.constant 0 : index
    %134 = vector.load %arg11[%c0_103, %c0_104] : memref<32x32xbf16, #tpu.memory_space<vmem>>, vector<32x32xbf16>
    %cst_105 = arith.constant dense<0.000000e+00> : vector<8x32xf32>
    %135 = tpu.matmul %133, %134, %cst_105 {dimension_numbers = #tpu.dot_dimension_numbers<[1], [0], [0], [1], [0, 0, 1, 1], [], []>} : vector<8x32xbf16>, vector<32x32xbf16>, vector<8x32xf32> -> vector<8x32xf32>
    %c0_106 = arith.constant 0 : index
    %c0_107 = arith.constant 0 : index
    %136 = vector.load %arg12[%c0_106, %c0_107] : memref<1x32xf32, #tpu.memory_space<vmem>>, vector<1x32xf32>
    %137 = vector.broadcast %136 : vector<1x32xf32> to vector<8x32xf32>
    %138 = arith.addf %135, %137 : vector<8x32xf32>
    %139 = arith.addf %8, %138 : vector<8x32xf32>
    %c0_108 = arith.constant 0 : index
    %c0_109 = arith.constant 0 : index
    %140 = vector.load %arg21[%c0_108, %c0_109] : memref<1x32xf32, #tpu.memory_space<vmem>>, vector<1x32xf32>
    %c0_110 = arith.constant 0 : index
    %c0_111 = arith.constant 0 : index
    %141 = vector.load %arg22[%c0_110, %c0_111] : memref<1x32xf32, #tpu.memory_space<vmem>>, vector<1x32xf32>
    %cst_112 = arith.constant dense<0.000000e+00> : vector<8xf32>
    %142 = vector.multi_reduction <add>, %139, %cst_112 [1] : vector<8x32xf32> to vector<8xf32>
    %143 = vector.shape_cast %142 : vector<8xf32> to vector<8x1xf32>
    %cst_113 = arith.constant 3.200000e+01 : f32
    %144 = vector.broadcast %cst_113 : f32 to vector<8x1xf32>
    %145 = arith.divf %143, %144 : vector<8x1xf32>
    %146 = vector.broadcast %145 : vector<8x1xf32> to vector<8x32xf32>
    %147 = arith.subf %139, %146 : vector<8x32xf32>
    %148 = arith.mulf %147, %147 : vector<8x32xf32>
    %cst_114 = arith.constant dense<0.000000e+00> : vector<8xf32>
    %149 = vector.multi_reduction <add>, %148, %cst_114 [1] : vector<8x32xf32> to vector<8xf32>
    %150 = vector.shape_cast %149 : vector<8xf32> to vector<8x1xf32>
    %cst_115 = arith.constant 3.200000e+01 : f32
    %151 = vector.broadcast %cst_115 : f32 to vector<8x1xf32>
    %152 = arith.divf %150, %151 : vector<8x1xf32>
    %153 = vector.broadcast %145 : vector<8x1xf32> to vector<8x32xf32>
    %154 = arith.subf %139, %153 : vector<8x32xf32>
    %cst_116 = arith.constant 9.99999974E-6 : f32
    %155 = vector.broadcast %cst_116 : f32 to vector<8x1xf32>
    %156 = arith.addf %152, %155 : vector<8x1xf32>
    %157 = math.rsqrt %156 : vector<8x1xf32>
    %158 = vector.broadcast %157 : vector<8x1xf32> to vector<8x32xf32>
    %159 = arith.mulf %154, %158 : vector<8x32xf32>
    %160 = vector.broadcast %140 : vector<1x32xf32> to vector<8x32xf32>
    %161 = arith.mulf %159, %160 : vector<8x32xf32>
    %162 = vector.broadcast %141 : vector<1x32xf32> to vector<8x32xf32>
    %163 = arith.addf %161, %162 : vector<8x32xf32>
    %164 = arith.truncf %163 : vector<8x32xf32> to vector<8x32xbf16>
    %c0_117 = arith.constant 0 : index
    %c0_118 = arith.constant 0 : index
    %c0_119 = arith.constant 0 : index
    %165 = vector.load %arg13[%c0_117, %c0_118, %c0_119] : memref<4x32x8xbf16, #tpu.memory_space<vmem>>, vector<1x32x8xbf16>
    %166 = vector.shape_cast %165 : vector<1x32x8xbf16> to vector<32x8xbf16>
    %cst_120 = arith.constant dense<0.000000e+00> : vector<8x8xf32>
    %167 = tpu.matmul %164, %166, %cst_120 {dimension_numbers = #tpu.dot_dimension_numbers<[1], [0], [0], [1], [0, 0, 1, 1], [], []>} : vector<8x32xbf16>, vector<32x8xbf16>, vector<8x8xf32> -> vector<8x8xf32>
    %c0_121 = arith.constant 0 : index
    %c0_122 = arith.constant 0 : index
    %c0_123 = arith.constant 0 : index
    %168 = vector.load %arg14[%c0_121, %c0_122, %c0_123] : memref<4x1x8xf32, #tpu.memory_space<vmem>>, vector<1x1x8xf32>
    %169 = vector.shape_cast %168 : vector<1x1x8xf32> to vector<1x8xf32>
    %170 = vector.broadcast %169 : vector<1x8xf32> to vector<8x8xf32>
    %171 = arith.addf %167, %170 : vector<8x8xf32>
    %c0_124 = arith.constant 0 : index
    %c0_125 = arith.constant 0 : index
    %c0_126 = arith.constant 0 : index
    %c0_127 = arith.constant 0 : index
    %172 = vector.load %arg5[%c0_124, %c0_125, %c0_126, %c0_127] : memref<1x4x8x8xbf16, #tpu.memory_space<vmem>>, vector<1x1x8x8xbf16>
    %173 = vector.shape_cast %172 : vector<1x1x8x8xbf16> to vector<8x8xbf16>
    %c0_128 = arith.constant 0 : index
    %c0_129 = arith.constant 0 : index
    %c0_130 = arith.constant 0 : index
    %c0_131 = arith.constant 0 : index
    %174 = vector.load %arg6[%c0_128, %c0_129, %c0_130, %c0_131] : memref<1x4x8x8xbf16, #tpu.memory_space<vmem>>, vector<1x1x8x8xbf16>
    %175 = vector.shape_cast %174 : vector<1x1x8x8xbf16> to vector<8x8xbf16>
    %176 = arith.truncf %171 : vector<8x8xf32> to vector<8x8xbf16>
    %cst_132 = arith.constant dense<0.000000e+00> : vector<8x8xf32>
    %177 = tpu.matmul %176, %173, %cst_132 {dimension_numbers = #tpu.dot_dimension_numbers<[1], [1], [0], [0], [0, 0, 1, 0], [], []>} : vector<8x8xbf16>, vector<8x8xbf16>, vector<8x8xf32> -> vector<8x8xf32>
    %178 = arith.addf %177, %7 : vector<8x8xf32>
    %cst_133 = arith.constant dense<0xFF800000> : vector<8xf32>
    %179 = vector.multi_reduction <maximumf>, %178, %cst_133 [1] : vector<8x8xf32> to vector<8xf32>
    %180 = vector.shape_cast %179 : vector<8xf32> to vector<8x1xf32>
    %181 = vector.broadcast %180 : vector<8x1xf32> to vector<8x8xf32>
    %182 = arith.subf %178, %181 : vector<8x8xf32>
    %183 = math.exp %182 : vector<8x8xf32>
    %cst_134 = arith.constant dense<0.000000e+00> : vector<8xf32>
    %184 = vector.multi_reduction <add>, %183, %cst_134 [1] : vector<8x8xf32> to vector<8xf32>
    %185 = vector.shape_cast %184 : vector<8xf32> to vector<8x1xf32>
    %186 = tpu.reciprocal %185 {approx = true} : vector<8x1xf32> -> vector<8x1xf32>
    %187 = vector.broadcast %186 : vector<8x1xf32> to vector<8x8xf32>
    %188 = arith.mulf %183, %187 : vector<8x8xf32>
    %c0_135 = arith.constant 0 : index
    %c0_136 = arith.constant 0 : index
    %c0_137 = arith.constant 0 : index
    %c0_138 = arith.constant 0 : index
    %189 = vector.load %arg29[%c0_135, %c0_136, %c0_137, %c0_138] : memref<1x4x8x8xf32, #tpu.memory_space<vmem>>, vector<1x1x8x8xf32>
    %190 = vector.shape_cast %189 : vector<1x1x8x8xf32> to vector<8x8xf32>
    %191 = vector.shape_cast %188 : vector<8x8xf32> to vector<1x1x8x8xf32>
    tpu.vector_store %arg29[%c0_135, %c0_136, %c0_137, %c0_138], %191 {strides = array<i32>} : memref<1x4x8x8xf32, #tpu.memory_space<vmem>>, vector<1x1x8x8xf32>,
    %192 = arith.truncf %188 : vector<8x8xf32> to vector<8x8xbf16>
    %cst_139 = arith.constant dense<0.000000e+00> : vector<8x8xf32>
    %193 = tpu.matmul %192, %175, %cst_139 {dimension_numbers = #tpu.dot_dimension_numbers<[1], [0], [0], [1], [0, 0, 1, 1], [], []>} : vector<8x8xbf16>, vector<8x8xbf16>, vector<8x8xf32> -> vector<8x8xf32>
    %194 = arith.truncf %193 : vector<8x8xf32> to vector<8x8xbf16>
    %c0_140 = arith.constant 0 : index
    %c0_141 = arith.constant 0 : index
    %195 = vector.load %arg30[%c0_140, %c0_141] : memref<8x32xbf16, #tpu.memory_space<vmem>>, vector<8x8xbf16>
    tpu.vector_store %arg30[%c0_140, %c0_141], %194 {strides = array<i32>} : memref<8x32xbf16, #tpu.memory_space<vmem>>, vector<8x8xbf16>,
    %c1_142 = arith.constant 1 : index
    %c0_143 = arith.constant 0 : index
    %c0_144 = arith.constant 0 : index
    %196 = vector.load %arg13[%c1_142, %c0_143, %c0_144] : memref<4x32x8xbf16, #tpu.memory_space<vmem>>, vector<1x32x8xbf16>
    %197 = vector.shape_cast %196 : vector<1x32x8xbf16> to vector<32x8xbf16>
    %cst_145 = arith.constant dense<0.000000e+00> : vector<8x8xf32>
    %198 = tpu.matmul %164, %197, %cst_145 {dimension_numbers = #tpu.dot_dimension_numbers<[1], [0], [0], [1], [0, 0, 1, 1], [], []>} : vector<8x32xbf16>, vector<32x8xbf16>, vector<8x8xf32> -> vector<8x8xf32>
    %c1_146 = arith.constant 1 : index
    %c0_147 = arith.constant 0 : index
    %c0_148 = arith.constant 0 : index
    %199 = vector.load %arg14[%c1_146, %c0_147, %c0_148] : memref<4x1x8xf32, #tpu.memory_space<vmem>>, vector<1x1x8xf32>
    %200 = vector.shape_cast %199 : vector<1x1x8xf32> to vector<1x8xf32>
    %201 = vector.broadcast %200 : vector<1x8xf32> to vector<8x8xf32>
    %202 = arith.addf %198, %201 : vector<8x8xf32>
    %c0_149 = arith.constant 0 : index
    %c1_150 = arith.constant 1 : index
    %c0_151 = arith.constant 0 : index
    %c0_152 = arith.constant 0 : index
    %203 = vector.load %arg5[%c0_149, %c1_150, %c0_151, %c0_152] : memref<1x4x8x8xbf16, #tpu.memory_space<vmem>>, vector<1x1x8x8xbf16>
    %204 = vector.shape_cast %203 : vector<1x1x8x8xbf16> to vector<8x8xbf16>
    %c0_153 = arith.constant 0 : index
    %c1_154 = arith.constant 1 : index
    %c0_155 = arith.constant 0 : index
    %c0_156 = arith.constant 0 : index
    %205 = vector.load %arg6[%c0_153, %c1_154, %c0_155, %c0_156] : memref<1x4x8x8xbf16, #tpu.memory_space<vmem>>, vector<1x1x8x8xbf16>
    %206 = vector.shape_cast %205 : vector<1x1x8x8xbf16> to vector<8x8xbf16>
    %207 = arith.truncf %202 : vector<8x8xf32> to vector<8x8xbf16>
    %cst_157 = arith.constant dense<0.000000e+00> : vector<8x8xf32>
    %208 = tpu.matmul %207, %204, %cst_157 {dimension_numbers = #tpu.dot_dimension_numbers<[1], [1], [0], [0], [0, 0, 1, 0], [], []>} : vector<8x8xbf16>, vector<8x8xbf16>, vector<8x8xf32> -> vector<8x8xf32>
    %209 = arith.addf %208, %7 : vector<8x8xf32>
    %cst_158 = arith.constant dense<0xFF800000> : vector<8xf32>
    %210 = vector.multi_reduction <maximumf>, %209, %cst_158 [1] : vector<8x8xf32> to vector<8xf32>
    %211 = vector.shape_cast %210 : vector<8xf32> to vector<8x1xf32>
    %212 = vector.broadcast %211 : vector<8x1xf32> to vector<8x8xf32>
    %213 = arith.subf %209, %212 : vector<8x8xf32>
    %214 = math.exp %213 : vector<8x8xf32>
    %cst_159 = arith.constant dense<0.000000e+00> : vector<8xf32>
    %215 = vector.multi_reduction <add>, %214, %cst_159 [1] : vector<8x8xf32> to vector<8xf32>
    %216 = vector.shape_cast %215 : vector<8xf32> to vector<8x1xf32>
    %217 = tpu.reciprocal %216 {approx = true} : vector<8x1xf32> -> vector<8x1xf32>
    %218 = vector.broadcast %217 : vector<8x1xf32> to vector<8x8xf32>
    %219 = arith.mulf %214, %218 : vector<8x8xf32>
    %c0_160 = arith.constant 0 : index
    %c1_161 = arith.constant 1 : index
    %c0_162 = arith.constant 0 : index
    %c0_163 = arith.constant 0 : index
    %220 = vector.load %arg29[%c0_160, %c1_161, %c0_162, %c0_163] : memref<1x4x8x8xf32, #tpu.memory_space<vmem>>, vector<1x1x8x8xf32>
    %221 = vector.shape_cast %220 : vector<1x1x8x8xf32> to vector<8x8xf32>
    %222 = vector.shape_cast %219 : vector<8x8xf32> to vector<1x1x8x8xf32>
    tpu.vector_store %arg29[%c0_160, %c1_161, %c0_162, %c0_163], %222 {strides = array<i32>} : memref<1x4x8x8xf32, #tpu.memory_space<vmem>>, vector<1x1x8x8xf32>,
    %223 = arith.truncf %219 : vector<8x8xf32> to vector<8x8xbf16>
    %cst_164 = arith.constant dense<0.000000e+00> : vector<8x8xf32>
    %224 = tpu.matmul %223, %206, %cst_164 {dimension_numbers = #tpu.dot_dimension_numbers<[1], [0], [0], [1], [0, 0, 1, 1], [], []>} : vector<8x8xbf16>, vector<8x8xbf16>, vector<8x8xf32> -> vector<8x8xf32>
    %225 = arith.truncf %224 : vector<8x8xf32> to vector<8x8xbf16>
    %c0_165 = arith.constant 0 : index
    %c8_166 = arith.constant 8 : index
    %226 = vector.load %arg30[%c0_165, %c8_166] : memref<8x32xbf16, #tpu.memory_space<vmem>>, vector<8x8xbf16>
    tpu.vector_store %arg30[%c0_165, %c8_166], %225 {strides = array<i32>} : memref<8x32xbf16, #tpu.memory_space<vmem>>, vector<8x8xbf16>,
    %c2_167 = arith.constant 2 : index
    %c0_168 = arith.constant 0 : index
    %c0_169 = arith.constant 0 : index
    %227 = vector.load %arg13[%c2_167, %c0_168, %c0_169] : memref<4x32x8xbf16, #tpu.memory_space<vmem>>, vector<1x32x8xbf16>
    %228 = vector.shape_cast %227 : vector<1x32x8xbf16> to vector<32x8xbf16>
    %cst_170 = arith.constant dense<0.000000e+00> : vector<8x8xf32>
    %229 = tpu.matmul %164, %228, %cst_170 {dimension_numbers = #tpu.dot_dimension_numbers<[1], [0], [0], [1], [0, 0, 1, 1], [], []>} : vector<8x32xbf16>, vector<32x8xbf16>, vector<8x8xf32> -> vector<8x8xf32>
    %c2_171 = arith.constant 2 : index
    %c0_172 = arith.constant 0 : index
    %c0_173 = arith.constant 0 : index
    %230 = vector.load %arg14[%c2_171, %c0_172, %c0_173] : memref<4x1x8xf32, #tpu.memory_space<vmem>>, vector<1x1x8xf32>
    %231 = vector.shape_cast %230 : vector<1x1x8xf32> to vector<1x8xf32>
    %232 = vector.broadcast %231 : vector<1x8xf32> to vector<8x8xf32>
    %233 = arith.addf %229, %232 : vector<8x8xf32>
    %c0_174 = arith.constant 0 : index
    %c2_175 = arith.constant 2 : index
    %c0_176 = arith.constant 0 : index
    %c0_177 = arith.constant 0 : index
    %234 = vector.load %arg5[%c0_174, %c2_175, %c0_176, %c0_177] : memref<1x4x8x8xbf16, #tpu.memory_space<vmem>>, vector<1x1x8x8xbf16>
    %235 = vector.shape_cast %234 : vector<1x1x8x8xbf16> to vector<8x8xbf16>
    %c0_178 = arith.constant 0 : index
    %c2_179 = arith.constant 2 : index
    %c0_180 = arith.constant 0 : index
    %c0_181 = arith.constant 0 : index
    %236 = vector.load %arg6[%c0_178, %c2_179, %c0_180, %c0_181] : memref<1x4x8x8xbf16, #tpu.memory_space<vmem>>, vector<1x1x8x8xbf16>
    %237 = vector.shape_cast %236 : vector<1x1x8x8xbf16> to vector<8x8xbf16>
    %238 = arith.truncf %233 : vector<8x8xf32> to vector<8x8xbf16>
    %cst_182 = arith.constant dense<0.000000e+00> : vector<8x8xf32>
    %239 = tpu.matmul %238, %235, %cst_182 {dimension_numbers = #tpu.dot_dimension_numbers<[1], [1], [0], [0], [0, 0, 1, 0], [], []>} : vector<8x8xbf16>, vector<8x8xbf16>, vector<8x8xf32> -> vector<8x8xf32>
    %240 = arith.addf %239, %7 : vector<8x8xf32>
    %cst_183 = arith.constant dense<0xFF800000> : vector<8xf32>
    %241 = vector.multi_reduction <maximumf>, %240, %cst_183 [1] : vector<8x8xf32> to vector<8xf32>
    %242 = vector.shape_cast %241 : vector<8xf32> to vector<8x1xf32>
    %243 = vector.broadcast %242 : vector<8x1xf32> to vector<8x8xf32>
    %244 = arith.subf %240, %243 : vector<8x8xf32>
    %245 = math.exp %244 : vector<8x8xf32>
    %cst_184 = arith.constant dense<0.000000e+00> : vector<8xf32>
    %246 = vector.multi_reduction <add>, %245, %cst_184 [1] : vector<8x8xf32> to vector<8xf32>
    %247 = vector.shape_cast %246 : vector<8xf32> to vector<8x1xf32>
    %248 = tpu.reciprocal %247 {approx = true} : vector<8x1xf32> -> vector<8x1xf32>
    %249 = vector.broadcast %248 : vector<8x1xf32> to vector<8x8xf32>
    %250 = arith.mulf %245, %249 : vector<8x8xf32>
    %c0_185 = arith.constant 0 : index
    %c2_186 = arith.constant 2 : index
    %c0_187 = arith.constant 0 : index
    %c0_188 = arith.constant 0 : index
    %251 = vector.load %arg29[%c0_185, %c2_186, %c0_187, %c0_188] : memref<1x4x8x8xf32, #tpu.memory_space<vmem>>, vector<1x1x8x8xf32>
    %252 = vector.shape_cast %251 : vector<1x1x8x8xf32> to vector<8x8xf32>
    %253 = vector.shape_cast %250 : vector<8x8xf32> to vector<1x1x8x8xf32>
    tpu.vector_store %arg29[%c0_185, %c2_186, %c0_187, %c0_188], %253 {strides = array<i32>} : memref<1x4x8x8xf32, #tpu.memory_space<vmem>>, vector<1x1x8x8xf32>,
    %254 = arith.truncf %250 : vector<8x8xf32> to vector<8x8xbf16>
    %cst_189 = arith.constant dense<0.000000e+00> : vector<8x8xf32>
    %255 = tpu.matmul %254, %237, %cst_189 {dimension_numbers = #tpu.dot_dimension_numbers<[1], [0], [0], [1], [0, 0, 1, 1], [], []>} : vector<8x8xbf16>, vector<8x8xbf16>, vector<8x8xf32> -> vector<8x8xf32>
    %256 = arith.truncf %255 : vector<8x8xf32> to vector<8x8xbf16>
    %c0_190 = arith.constant 0 : index
    %c16_191 = arith.constant 16 : index
    %257 = vector.load %arg30[%c0_190, %c16_191] : memref<8x32xbf16, #tpu.memory_space<vmem>>, vector<8x8xbf16>
    tpu.vector_store %arg30[%c0_190, %c16_191], %256 {strides = array<i32>} : memref<8x32xbf16, #tpu.memory_space<vmem>>, vector<8x8xbf16>,
    %c3_192 = arith.constant 3 : index
    %c0_193 = arith.constant 0 : index
    %c0_194 = arith.constant 0 : index
    %258 = vector.load %arg13[%c3_192, %c0_193, %c0_194] : memref<4x32x8xbf16, #tpu.memory_space<vmem>>, vector<1x32x8xbf16>
    %259 = vector.shape_cast %258 : vector<1x32x8xbf16> to vector<32x8xbf16>
    %cst_195 = arith.constant dense<0.000000e+00> : vector<8x8xf32>
    %260 = tpu.matmul %164, %259, %cst_195 {dimension_numbers = #tpu.dot_dimension_numbers<[1], [0], [0], [1], [0, 0, 1, 1], [], []>} : vector<8x32xbf16>, vector<32x8xbf16>, vector<8x8xf32> -> vector<8x8xf32>
    %c3_196 = arith.constant 3 : index
    %c0_197 = arith.constant 0 : index
    %c0_198 = arith.constant 0 : index
    %261 = vector.load %arg14[%c3_196, %c0_197, %c0_198] : memref<4x1x8xf32, #tpu.memory_space<vmem>>, vector<1x1x8xf32>
    %262 = vector.shape_cast %261 : vector<1x1x8xf32> to vector<1x8xf32>
    %263 = vector.broadcast %262 : vector<1x8xf32> to vector<8x8xf32>
    %264 = arith.addf %260, %263 : vector<8x8xf32>
    %c0_199 = arith.constant 0 : index
    %c3_200 = arith.constant 3 : index
    %c0_201 = arith.constant 0 : index
    %c0_202 = arith.constant 0 : index
    %265 = vector.load %arg5[%c0_199, %c3_200, %c0_201, %c0_202] : memref<1x4x8x8xbf16, #tpu.memory_space<vmem>>, vector<1x1x8x8xbf16>
    %266 = vector.shape_cast %265 : vector<1x1x8x8xbf16> to vector<8x8xbf16>
    %c0_203 = arith.constant 0 : index
    %c3_204 = arith.constant 3 : index
    %c0_205 = arith.constant 0 : index
    %c0_206 = arith.constant 0 : index
    %267 = vector.load %arg6[%c0_203, %c3_204, %c0_205, %c0_206] : memref<1x4x8x8xbf16, #tpu.memory_space<vmem>>, vector<1x1x8x8xbf16>
    %268 = vector.shape_cast %267 : vector<1x1x8x8xbf16> to vector<8x8xbf16>
    %269 = arith.truncf %264 : vector<8x8xf32> to vector<8x8xbf16>
    %cst_207 = arith.constant dense<0.000000e+00> : vector<8x8xf32>
    %270 = tpu.matmul %269, %266, %cst_207 {dimension_numbers = #tpu.dot_dimension_numbers<[1], [1], [0], [0], [0, 0, 1, 0], [], []>} : vector<8x8xbf16>, vector<8x8xbf16>, vector<8x8xf32> -> vector<8x8xf32>
    %271 = arith.addf %270, %7 : vector<8x8xf32>
    %cst_208 = arith.constant dense<0xFF800000> : vector<8xf32>
    %272 = vector.multi_reduction <maximumf>, %271, %cst_208 [1] : vector<8x8xf32> to vector<8xf32>
    %273 = vector.shape_cast %272 : vector<8xf32> to vector<8x1xf32>
    %274 = vector.broadcast %273 : vector<8x1xf32> to vector<8x8xf32>
    %275 = arith.subf %271, %274 : vector<8x8xf32>
    %276 = math.exp %275 : vector<8x8xf32>
    %cst_209 = arith.constant dense<0.000000e+00> : vector<8xf32>
    %277 = vector.multi_reduction <add>, %276, %cst_209 [1] : vector<8x8xf32> to vector<8xf32>
    %278 = vector.shape_cast %277 : vector<8xf32> to vector<8x1xf32>
    %279 = tpu.reciprocal %278 {approx = true} : vector<8x1xf32> -> vector<8x1xf32>
    %280 = vector.broadcast %279 : vector<8x1xf32> to vector<8x8xf32>
    %281 = arith.mulf %276, %280 : vector<8x8xf32>
    %c0_210 = arith.constant 0 : index
    %c3_211 = arith.constant 3 : index
    %c0_212 = arith.constant 0 : index
    %c0_213 = arith.constant 0 : index
    %282 = vector.load %arg29[%c0_210, %c3_211, %c0_212, %c0_213] : memref<1x4x8x8xf32, #tpu.memory_space<vmem>>, vector<1x1x8x8xf32>
    %283 = vector.shape_cast %282 : vector<1x1x8x8xf32> to vector<8x8xf32>
    %284 = vector.shape_cast %281 : vector<8x8xf32> to vector<1x1x8x8xf32>
    tpu.vector_store %arg29[%c0_210, %c3_211, %c0_212, %c0_213], %284 {strides = array<i32>} : memref<1x4x8x8xf32, #tpu.memory_space<vmem>>, vector<1x1x8x8xf32>,
    %285 = arith.truncf %281 : vector<8x8xf32> to vector<8x8xbf16>
    %cst_214 = arith.constant dense<0.000000e+00> : vector<8x8xf32>
    %286 = tpu.matmul %285, %268, %cst_214 {dimension_numbers = #tpu.dot_dimension_numbers<[1], [0], [0], [1], [0, 0, 1, 1], [], []>} : vector<8x8xbf16>, vector<8x8xbf16>, vector<8x8xf32> -> vector<8x8xf32>
    %287 = arith.truncf %286 : vector<8x8xf32> to vector<8x8xbf16>
    %c0_215 = arith.constant 0 : index
    %c24_216 = arith.constant 24 : index
    %288 = vector.load %arg30[%c0_215, %c24_216] : memref<8x32xbf16, #tpu.memory_space<vmem>>, vector<8x8xbf16>
    tpu.vector_store %arg30[%c0_215, %c24_216], %287 {strides = array<i32>} : memref<8x32xbf16, #tpu.memory_space<vmem>>, vector<8x8xbf16>,
    %c0_217 = arith.constant 0 : index
    %c0_218 = arith.constant 0 : index
    %289 = vector.load %arg30[%c0_217, %c0_218] : memref<8x32xbf16, #tpu.memory_space<vmem>>, vector<8x32xbf16>
    %c0_219 = arith.constant 0 : index
    %c0_220 = arith.constant 0 : index
    %290 = vector.load %arg15[%c0_219, %c0_220] : memref<32x32xbf16, #tpu.memory_space<vmem>>, vector<32x32xbf16>
    %cst_221 = arith.constant dense<0.000000e+00> : vector<8x32xf32>
    %291 = tpu.matmul %289, %290, %cst_221 {dimension_numbers = #tpu.dot_dimension_numbers<[1], [0], [0], [1], [0, 0, 1, 1], [], []>} : vector<8x32xbf16>, vector<32x32xbf16>, vector<8x32xf32> -> vector<8x32xf32>
    %c0_222 = arith.constant 0 : index
    %c0_223 = arith.constant 0 : index
    %292 = vector.load %arg16[%c0_222, %c0_223] : memref<1x32xf32, #tpu.memory_space<vmem>>, vector<1x32xf32>
    %293 = vector.broadcast %292 : vector<1x32xf32> to vector<8x32xf32>
    %294 = arith.addf %291, %293 : vector<8x32xf32>
    %295 = arith.addf %163, %294 : vector<8x32xf32>
    %c0_224 = arith.constant 0 : index
    %c0_225 = arith.constant 0 : index
    %296 = vector.load %arg23[%c0_224, %c0_225] : memref<1x32xf32, #tpu.memory_space<vmem>>, vector<1x32xf32>
    %c0_226 = arith.constant 0 : index
    %c0_227 = arith.constant 0 : index
    %297 = vector.load %arg24[%c0_226, %c0_227] : memref<1x32xf32, #tpu.memory_space<vmem>>, vector<1x32xf32>
    %cst_228 = arith.constant dense<0.000000e+00> : vector<8xf32>
    %298 = vector.multi_reduction <add>, %295, %cst_228 [1] : vector<8x32xf32> to vector<8xf32>
    %299 = vector.shape_cast %298 : vector<8xf32> to vector<8x1xf32>
    %cst_229 = arith.constant 3.200000e+01 : f32
    %300 = vector.broadcast %cst_229 : f32 to vector<8x1xf32>
    %301 = arith.divf %299, %300 : vector<8x1xf32>
    %302 = vector.broadcast %301 : vector<8x1xf32> to vector<8x32xf32>
    %303 = arith.subf %295, %302 : vector<8x32xf32>
    %304 = arith.mulf %303, %303 : vector<8x32xf32>
    %cst_230 = arith.constant dense<0.000000e+00> : vector<8xf32>
    %305 = vector.multi_reduction <add>, %304, %cst_230 [1] : vector<8x32xf32> to vector<8xf32>
    %306 = vector.shape_cast %305 : vector<8xf32> to vector<8x1xf32>
    %cst_231 = arith.constant 3.200000e+01 : f32
    %307 = vector.broadcast %cst_231 : f32 to vector<8x1xf32>
    %308 = arith.divf %306, %307 : vector<8x1xf32>
    %309 = vector.broadcast %301 : vector<8x1xf32> to vector<8x32xf32>
    %310 = arith.subf %295, %309 : vector<8x32xf32>
    %cst_232 = arith.constant 9.99999974E-6 : f32
    %311 = vector.broadcast %cst_232 : f32 to vector<8x1xf32>
    %312 = arith.addf %308, %311 : vector<8x1xf32>
    %313 = math.rsqrt %312 : vector<8x1xf32>
    %314 = vector.broadcast %313 : vector<8x1xf32> to vector<8x32xf32>
    %315 = arith.mulf %310, %314 : vector<8x32xf32>
    %316 = vector.broadcast %296 : vector<1x32xf32> to vector<8x32xf32>
    %317 = arith.mulf %315, %316 : vector<8x32xf32>
    %318 = vector.broadcast %297 : vector<1x32xf32> to vector<8x32xf32>
    %319 = arith.addf %317, %318 : vector<8x32xf32>
    %320 = arith.truncf %319 : vector<8x32xf32> to vector<8x32xbf16>
    %c0_233 = arith.constant 0 : index
    %c0_234 = arith.constant 0 : index
    %321 = vector.load %arg17[%c0_233, %c0_234] : memref<32x64xbf16, #tpu.memory_space<vmem>>, vector<32x64xbf16>
    %cst_235 = arith.constant dense<0.000000e+00> : vector<8x64xf32>
    %322 = tpu.matmul %320, %321, %cst_235 {dimension_numbers = #tpu.dot_dimension_numbers<[1], [0], [0], [1], [0, 0, 1, 1], [], []>} : vector<8x32xbf16>, vector<32x64xbf16>, vector<8x64xf32> -> vector<8x64xf32>
    %c0_236 = arith.constant 0 : index
    %c0_237 = arith.constant 0 : index
    %323 = vector.load %arg18[%c0_236, %c0_237] : memref<1x64xf32, #tpu.memory_space<vmem>>, vector<1x64xf32>
    %324 = vector.broadcast %323 : vector<1x64xf32> to vector<8x64xf32>
    %325 = arith.addf %322, %324 : vector<8x64xf32>
    %cst_238 = arith.constant 0.000000e+00 : f32
    %326 = vector.broadcast %cst_238 : f32 to vector<8x64xf32>
    %327 = arith.maximumf %325, %326 : vector<8x64xf32>
    %328 = arith.truncf %327 : vector<8x64xf32> to vector<8x64xbf16>
    %c0_239 = arith.constant 0 : index
    %c0_240 = arith.constant 0 : index
    %329 = vector.load %arg19[%c0_239, %c0_240] : memref<64x32xbf16, #tpu.memory_space<vmem>>, vector<64x32xbf16>
    %cst_241 = arith.constant dense<0.000000e+00> : vector<8x32xf32>
    %330 = tpu.matmul %328, %329, %cst_241 {dimension_numbers = #tpu.dot_dimension_numbers<[1], [0], [0], [1], [0, 0, 1, 1], [], []>} : vector<8x64xbf16>, vector<64x32xbf16>, vector<8x32xf32> -> vector<8x32xf32>
    %c0_242 = arith.constant 0 : index
    %c0_243 = arith.constant 0 : index
    %331 = vector.load %arg20[%c0_242, %c0_243] : memref<1x32xf32, #tpu.memory_space<vmem>>, vector<1x32xf32>
    %332 = vector.broadcast %331 : vector<1x32xf32> to vector<8x32xf32>
    %333 = arith.addf %330, %332 : vector<8x32xf32>
    %334 = arith.addf %319, %333 : vector<8x32xf32>
    %c0_244 = arith.constant 0 : index
    %c0_245 = arith.constant 0 : index
    %335 = vector.load %arg25[%c0_244, %c0_245] : memref<1x32xf32, #tpu.memory_space<vmem>>, vector<1x32xf32>
    %c0_246 = arith.constant 0 : index
    %c0_247 = arith.constant 0 : index
    %336 = vector.load %arg26[%c0_246, %c0_247] : memref<1x32xf32, #tpu.memory_space<vmem>>, vector<1x32xf32>
    %cst_248 = arith.constant dense<0.000000e+00> : vector<8xf32>
    %337 = vector.multi_reduction <add>, %334, %cst_248 [1] : vector<8x32xf32> to vector<8xf32>
    %338 = vector.shape_cast %337 : vector<8xf32> to vector<8x1xf32>
    %cst_249 = arith.constant 3.200000e+01 : f32
    %339 = vector.broadcast %cst_249 : f32 to vector<8x1xf32>
    %340 = arith.divf %338, %339 : vector<8x1xf32>
    %341 = vector.broadcast %340 : vector<8x1xf32> to vector<8x32xf32>
    %342 = arith.subf %334, %341 : vector<8x32xf32>
    %343 = arith.mulf %342, %342 : vector<8x32xf32>
    %cst_250 = arith.constant dense<0.000000e+00> : vector<8xf32>
    %344 = vector.multi_reduction <add>, %343, %cst_250 [1] : vector<8x32xf32> to vector<8xf32>
    %345 = vector.shape_cast %344 : vector<8xf32> to vector<8x1xf32>
    %cst_251 = arith.constant 3.200000e+01 : f32
    %346 = vector.broadcast %cst_251 : f32 to vector<8x1xf32>
    %347 = arith.divf %345, %346 : vector<8x1xf32>
    %348 = vector.broadcast %340 : vector<8x1xf32> to vector<8x32xf32>
    %349 = arith.subf %334, %348 : vector<8x32xf32>
    %cst_252 = arith.constant 9.99999974E-6 : f32
    %350 = vector.broadcast %cst_252 : f32 to vector<8x1xf32>
    %351 = arith.addf %347, %350 : vector<8x1xf32>
    %352 = math.rsqrt %351 : vector<8x1xf32>
    %353 = vector.broadcast %352 : vector<8x1xf32> to vector<8x32xf32>
    %354 = arith.mulf %349, %353 : vector<8x32xf32>
    %355 = vector.broadcast %335 : vector<1x32xf32> to vector<8x32xf32>
    %356 = arith.mulf %354, %355 : vector<8x32xf32>
    %357 = vector.broadcast %336 : vector<1x32xf32> to vector<8x32xf32>
    %358 = arith.addf %356, %357 : vector<8x32xf32>
    %c0_253 = arith.constant 0 : index
    %c0_254 = arith.constant 0 : index
    %c0_255 = arith.constant 0 : index
    %359 = vector.load %arg27[%c0_253, %c0_254, %c0_255] : memref<1x8x32xf32, #tpu.memory_space<vmem>>, vector<1x8x32xf32>
    %360 = vector.shape_cast %359 : vector<1x8x32xf32> to vector<8x32xf32>
    %361 = vector.shape_cast %358 : vector<8x32xf32> to vector<1x8x32xf32>
    tpu.vector_store %arg27[%c0_253, %c0_254, %c0_255], %361 {strides = array<i32>} : memref<1x8x32xf32, #tpu.memory_space<vmem>>, vector<1x8x32xf32>,
    return
  }
  func.func @transform_0(%arg0: i32, %arg1: i32) -> (i32, i32, i32) {
    %c0_i32 = arith.constant 0 : i32
    %c0_i32_0 = arith.constant 0 : i32
    return %arg0, %arg1, %c0_i32 : i32, i32, i32
  }
  func.func @transform_1(%arg0: i32, %arg1: i32) -> (i32, i32, i32, i32) {
    %c0_i32 = arith.constant 0 : i32
    %c0_i32_0 = arith.constant 0 : i32
    %c0_i32_1 = arith.constant 0 : i32
    %c0_i32_2 = arith.constant 0 : i32
    return %arg0, %c0_i32, %c0_i32_0, %c0_i32_1 : i32, i32, i32, i32
  }
  func.func @transform_2(%arg0: i32, %arg1: i32) -> (i32, i32, i32, i32) {
    %c0_i32 = arith.constant 0 : i32
    %c0_i32_0 = arith.constant 0 : i32
    %c0_i32_1 = arith.constant 0 : i32
    %c0_i32_2 = arith.constant 0 : i32
    return %arg0, %c0_i32, %c0_i32_0, %c0_i32_1 : i32, i32, i32, i32
  }
  func.func @transform_3(%arg0: i32, %arg1: i32) -> (i32, i32, i32, i32) {
    %c0_i32 = arith.constant 0 : i32
    %c0_i32_0 = arith.constant 0 : i32
    %c0_i32_1 = arith.constant 0 : i32
    %c0_i32_2 = arith.constant 0 : i32
    return %arg0, %c0_i32, %c0_i32_0, %c0_i32_1 : i32, i32, i32, i32
  }
  func.func @transform_4(%arg0: i32, %arg1: i32) -> (i32, i32, i32, i32) {
    %c0_i32 = arith.constant 0 : i32
    %c0_i32_0 = arith.constant 0 : i32
    %c0_i32_1 = arith.constant 0 : i32
    %c0_i32_2 = arith.constant 0 : i32
    return %arg0, %c0_i32, %c0_i32_0, %c0_i32_1 : i32, i32, i32, i32
  }
  func.func @transform_5(%arg0: i32, %arg1: i32) -> (i32, i32, i32) {
    %c0_i32 = arith.constant 0 : i32
    %c0_i32_0 = arith.constant 0 : i32
    return %arg0, %arg1, %c0_i32 : i32, i32, i32
  }
  func.func @transform_6(%arg0: i32, %arg1: i32) -> (i32, i32, i32) {
    %c0_i32 = arith.constant 0 : i32
    %c0_i32_0 = arith.constant 0 : i32
    return %arg0, %arg1, %c0_i32 : i32, i32, i32
  }
  func.func @transform_7(%arg0: i32, %arg1: i32) -> (i32, i32, i32) {
    %c0_i32 = arith.constant 0 : i32
    %c0_i32_0 = arith.constant 0 : i32
    %c0_i32_1 = arith.constant 0 : i32
    %c0_i32_2 = arith.constant 0 : i32
    return %c0_i32, %c0_i32_0, %c0_i32_1 : i32, i32, i32
  }
  func.func @transform_8(%arg0: i32, %arg1: i32) -> (i32, i32, i32) {
    %c0_i32 = arith.constant 0 : i32
    %c0_i32_0 = arith.constant 0 : i32
    %c0_i32_1 = arith.constant 0 : i32
    %c0_i32_2 = arith.constant 0 : i32
    return %c0_i32, %c0_i32_0, %c0_i32_1 : i32, i32, i32
  }
  func.func @transform_9(%arg0: i32, %arg1: i32) -> (i32, i32) {
    %c0_i32 = arith.constant 0 : i32
    %c0_i32_0 = arith.constant 0 : i32
    %c0_i32_1 = arith.constant 0 : i32
    return %c0_i32, %c0_i32_0 : i32, i32
  }
  func.func @transform_10(%arg0: i32, %arg1: i32) -> (i32, i32) {
    %c0_i32 = arith.constant 0 : i32
    %c0_i32_0 = arith.constant 0 : i32
    %c0_i32_1 = arith.constant 0 : i32
    return %c0_i32, %c0_i32_0 : i32, i32
  }
  func.func @transform_11(%arg0: i32, %arg1: i32) -> (i32, i32, i32) {
    %c0_i32 = arith.constant 0 : i32
    %c0_i32_0 = arith.constant 0 : i32
    %c0_i32_1 = arith.constant 0 : i32
    %c0_i32_2 = arith.constant 0 : i32
    return %c0_i32, %c0_i32_0, %c0_i32_1 : i32, i32, i32
  }
  func.func @transform_12(%arg0: i32, %arg1: i32) -> (i32, i32, i32) {
    %c0_i32 = arith.constant 0 : i32
    %c0_i32_0 = arith.constant 0 : i32
    %c0_i32_1 = arith.constant 0 : i32
    %c0_i32_2 = arith.constant 0 : i32
    return %c0_i32, %c0_i32_0, %c0_i32_1 : i32, i32, i32
  }
  func.func @transform_13(%arg0: i32, %arg1: i32) -> (i32, i32) {
    %c0_i32 = arith.constant 0 : i32
    %c0_i32_0 = arith.constant 0 : i32
    %c0_i32_1 = arith.constant 0 : i32
    return %c0_i32, %c0_i32_0 : i32, i32
  }
  func.func @transform_14(%arg0: i32, %arg1: i32) -> (i32, i32) {
    %c0_i32 = arith.constant 0 : i32
    %c0_i32_0 = arith.constant 0 : i32
    %c0_i32_1 = arith.constant 0 : i32
    return %c0_i32, %c0_i32_0 : i32, i32
  }
  func.func @transform_15(%arg0: i32, %arg1: i32) -> (i32, i32) {
    %c0_i32 = arith.constant 0 : i32
    %c0_i32_0 = arith.constant 0 : i32
    %c0_i32_1 = arith.constant 0 : i32
    return %c0_i32, %c0_i32_0 : i32, i32
  }
  func.func @transform_16(%arg0: i32, %arg1: i32) -> (i32, i32) {
    %c0_i32 = arith.constant 0 : i32
    %c0_i32_0 = arith.constant 0 : i32
    %c0_i32_1 = arith.constant 0 : i32
    return %c0_i32, %c0_i32_0 : i32, i32
  }
  func.func @transform_17(%arg0: i32, %arg1: i32) -> (i32, i32) {
    %c0_i32 = arith.constant 0 : i32
    %c0_i32_0 = arith.constant 0 : i32
    %c0_i32_1 = arith.constant 0 : i32
    return %c0_i32, %c0_i32_0 : i32, i32
  }
  func.func @transform_18(%arg0: i32, %arg1: i32) -> (i32, i32) {
    %c0_i32 = arith.constant 0 : i32
    %c0_i32_0 = arith.constant 0 : i32
    %c0_i32_1 = arith.constant 0 : i32
    return %c0_i32, %c0_i32_0 : i32, i32
  }
  func.func @transform_19(%arg0: i32, %arg1: i32) -> (i32, i32) {
    %c0_i32 = arith.constant 0 : i32
    %c0_i32_0 = arith.constant 0 : i32
    %c0_i32_1 = arith.constant 0 : i32
    return %c0_i32, %c0_i32_0 : i32, i32
  }
  func.func @transform_20(%arg0: i32, %arg1: i32) -> (i32, i32) {
    %c0_i32 = arith.constant 0 : i32
    %c0_i32_0 = arith.constant 0 : i32
    %c0_i32_1 = arith.constant 0 : i32
    return %c0_i32, %c0_i32_0 : i32, i32
  }
  func.func @transform_21(%arg0: i32, %arg1: i32) -> (i32, i32) {
    %c0_i32 = arith.constant 0 : i32
    %c0_i32_0 = arith.constant 0 : i32
    %c0_i32_1 = arith.constant 0 : i32
    return %c0_i32, %c0_i32_0 : i32, i32
  }
  func.func @transform_22(%arg0: i32, %arg1: i32) -> (i32, i32) {
    %c0_i32 = arith.constant 0 : i32
    %c0_i32_0 = arith.constant 0 : i32
    %c0_i32_1 = arith.constant 0 : i32
    return %c0_i32, %c0_i32_0 : i32, i32
  }
  func.func @transform_23(%arg0: i32, %arg1: i32) -> (i32, i32) {
    %c0_i32 = arith.constant 0 : i32
    %c0_i32_0 = arith.constant 0 : i32
    %c0_i32_1 = arith.constant 0 : i32
    return %c0_i32, %c0_i32_0 : i32, i32
  }
  func.func @transform_24(%arg0: i32, %arg1: i32) -> (i32, i32) {
    %c0_i32 = arith.constant 0 : i32
    %c0_i32_0 = arith.constant 0 : i32
    %c0_i32_1 = arith.constant 0 : i32
    return %c0_i32, %c0_i32_0 : i32, i32
  }
  func.func @transform_25(%arg0: i32, %arg1: i32) -> (i32, i32, i32) {
    %c0_i32 = arith.constant 0 : i32
    %c0_i32_0 = arith.constant 0 : i32
    return %arg0, %arg1, %c0_i32 : i32, i32, i32
  }
  func.func @transform_26(%arg0: i32, %arg1: i32) -> (i32, i32, i32, i32) {
    %c0_i32 = arith.constant 0 : i32
    %c0_i32_0 = arith.constant 0 : i32
    %c0_i32_1 = arith.constant 0 : i32
    return %arg0, %c0_i32, %arg1, %c0_i32_0 : i32, i32, i32, i32
  }
  func.func @transform_27(%arg0: i32, %arg1: i32) -> (i32, i32, i32, i32) {
    %c0_i32 = arith.constant 0 : i32
    %c0_i32_0 = arith.constant 0 : i32
    %c0_i32_1 = arith.constant 0 : i32
    return %arg0, %c0_i32, %arg1, %c0_i32_0 : i32, i32, i32, i32
  }
}

</mosaic_0001>

<llo_original>
// kernel: tpu_custom_call.1
$region0: #{tpu_custom_call.1}
  #allocation0 [shape = 'u32[]', space=smem, size = 0x4, offset = 0x4, fixed_abs, tag = 'smem constant byte address 0x4 - core index']
  #allocation1 [shape = 'u32[144,128]{1,0:T(1,128)}', space=vmem, size = 0x12000, scoped, tag = 'internal scratch']
  #allocation2 [shape = 'bf16[8,32]{1,0:T(8,128)(2,1)}', space=vmem, size = 0x800, scoped, tag = 'scratch operand']
  %s0 = inlined_call_operand.hbm [shape: bf16[2,8,32], index: 0, kind: input, shape index: {}]
  %s1 = inlined_call_operand.vmem [shape: bf16[2,4,8,8], index: 1, kind: input, shape index: {}]
  %s2 = inlined_call_operand.vmem [shape: bf16[2,4,8,8], index: 2, kind: input, shape index: {}]
  %s3 = inlined_call_operand.vmem [shape: bf16[2,4,8,8], index: 3, kind: input, shape index: {}]
  %s4 = inlined_call_operand.vmem [shape: bf16[2,4,8,8], index: 4, kind: input, shape index: {}]
  %s5 = inlined_call_operand.vmem [shape: bf16[2,8,8], index: 5, kind: input, shape index: {}]
  %s6 = inlined_call_operand.hbm [shape: bf16[2,8,8], index: 6, kind: input, shape index: {}]
  %s7 = inlined_call_operand.vmem [shape: bf16[4,32,8], index: 7, kind: input, shape index: {}]
  %s8 = inlined_call_operand.vmem [shape: f32[4,1,8], index: 8, kind: input, shape index: {}]
  %s9 = inlined_call_operand.vmem [shape: bf16[32,32], index: 9, kind: input, shape index: {}]
  %s10 = inlined_call_operand.vmem [shape: f32[1,32], index: 10, kind: input, shape index: {}]
  %s11 = inlined_call_operand.vmem [shape: bf16[4,32,8], index: 11, kind: input, shape index: {}]
  %s12 = inlined_call_operand.vmem [shape: f32[4,1,8], index: 12, kind: input, shape index: {}]
  %s13 = inlined_call_operand.vmem [shape: bf16[32,32], index: 13, kind: input, shape index: {}]
  %s14 = inlined_call_operand.vmem [shape: f32[1,32], index: 14, kind: input, shape index: {}]
  %s15 = inlined_call_operand.vmem [shape: bf16[32,64], index: 15, kind: input, shape index: {}]
  %s16 = inlined_call_operand.vmem [shape: f32[1,64], index: 16, kind: input, shape index: {}]
  %s17 = inlined_call_operand.vmem [shape: bf16[64,32], index: 17, kind: input, shape index: {}]
  %s18 = inlined_call_operand.vmem [shape: f32[1,32], index: 18, kind: input, shape index: {}]
  %s19 = inlined_call_operand.vmem [shape: f32[1,32], index: 19, kind: input, shape index: {}]
  %s20 = inlined_call_operand.vmem [shape: f32[1,32], index: 20, kind: input, shape index: {}]
  %s21 = inlined_call_operand.vmem [shape: f32[1,32], index: 21, kind: input, shape index: {}]
  %s22 = inlined_call_operand.vmem [shape: f32[1,32], index: 22, kind: input, shape index: {}]
  %s23 = inlined_call_operand.vmem [shape: f32[1,32], index: 23, kind: input, shape index: {}]
  %s24 = inlined_call_operand.vmem [shape: f32[1,32], index: 24, kind: input, shape index: {}]
  %s25 = inlined_call_operand.hbm [shape: f32[2,8,32], index: 25, kind: output, shape index: {0}]
  %s26 = inlined_call_operand.hbm [shape: f32[2,4,8,8], index: 26, kind: output, shape index: {1}]
  %s27 = inlined_call_operand.hbm [shape: f32[2,4,8,8], index: 27, kind: output, shape index: {2}]
  %28 = xla_tuple %s25, %s26, %s27
  %s29 = sld [smem:[#allocation0]]
  $region157: #{tpu_custom_call.1} parent=0
    _
  %s31 = ssub.s32 1, %s29
  %s32 = scalar_select 0, %s31, %s29
  $region1: #{tpu_custom_call.1} parent=0
    #allocation3 [shape = 'u8[4096]{0}', space=vmem, size = 0x1000, scoped, tag = 'input window, operand 0']
    #allocation4 [shape = 's32[2]{0}', space=sflag, size = 0x8, scoped, tag = 'scoped memory for tpu_custom_call.1']
    #allocation5 [shape = 's32[2]{0}', space=sflag, size = 0x8, scoped, tag = 'scoped memory for tpu_custom_call.1']
    #allocation6 [shape = 'u8[4096]{0}', space=vmem, size = 0x1000, scoped, tag = 'input window, operand 6']
    #allocation7 [shape = 's32[2]{0}', space=sflag, size = 0x8, scoped, tag = 'scoped memory for tpu_custom_call.1']
    #allocation8 [shape = 'u8[8192]{0}', space=vmem, size = 0x2000, scoped, tag = 'output window, operand 0']
    #allocation9 [shape = 'u8[32768]{0}', space=vmem, size = 0x8000, scoped, tag = 'output window, operand 1']
    #allocation10 [shape = 's32[2]{0}', space=sflag, size = 0x8, scoped, tag = 'scoped memory for tpu_custom_call.1']
    #allocation11 [shape = 'u8[32768]{0}', space=vmem, size = 0x8000, scoped, tag = 'output window, operand 2']
    %33 = vsyncpa [#allocation4], 0
    %s34 = scalar_lea.sflag [#allocation4], 1
    %35 = vsyncpa %s34, 0
    %36 = vsyncpa [#allocation7], 0
    %s37 = scalar_lea.sflag [#allocation7], 1
    %38 = vsyncpa %s37, 0
    %39 = vsyncpa [#allocation5], 0
    %s40 = scalar_lea.sflag [#allocation5], 1
    %41 = vsyncpa %s40, 0
    %42 = vsyncpa [#allocation10], 0
    %s43 = scalar_lea.sflag [#allocation10], 1
    %44 = vsyncpa %s43, 0
    loop: start=0, step=1, limit=4
    $region2: #{tpu_custom_call.1} parent=1 // loop_pre_header
      _
    $region3: #{tpu_custom_call.1} parent=1 // loop_header
      %s46 = sphi 0, %s50
      %p47 = scmp.ge.s32.totalorder %s46, 4
      %s53 = sphi 0, %s65
      %s54 = sphi 0, %s61
      %s55 = sphi 0, %s53
      %s56 = sphi 0, %s54
      %s57 = sphi 0, %s55
      %s58 = sphi 0, %s56
      %s70 = sphi 0, %s72
      %s73 = sphi 0, %s70
      %s74 = sphi 0, %s73
      %s90 = sphi 0, %s74
      %s96 = sphi 0, %s98
      %s99 = sphi 0, %s96
      %s100 = sphi 0, %s99
      %s116 = sphi 0, %s100
      %s122 = sphi 0, %s124
      %s125 = sphi 0, %s122
      %s126 = sphi 0, %s125
      %s142 = sphi 0, %s126
      %s148 = sphi 0, %s150
      %s151 = sphi 0, %s148
      %s152 = sphi 0, %s151
      %s168 = sphi 0, %s152
      %s174 = sphi 0, %s176
      %s177 = sphi 0, %s174
      %s178 = sphi 0, %s177
      %s194 = sphi 0, %s178
      %s202 = sphi 0, %s204
      %s205 = sphi 0, %s202
      %s206 = sphi 0, %s205
      %s222 = sphi 0, %s206
      %s230 = sphi 0, %s232
      %s233 = sphi 0, %s230
      %s234 = sphi 0, %s233
      %s250 = sphi 0, %s234
      %s254 = sphi 0, %s254
      %s256 = sphi 0, %s254
      %s257 = sphi 0, %s256
      %s271 = sphi 0, %s257
      %s275 = sphi 0, %s275
      %s277 = sphi 0, %s275
      %s278 = sphi 0, %s277
      %s292 = sphi 0, %s278
      %s296 = sphi 0, %s296
      %s298 = sphi 0, %s296
      %s299 = sphi 0, %s298
      %s313 = sphi 0, %s299
      %s317 = sphi 0, %s317
      %s319 = sphi 0, %s317
      %s320 = sphi 0, %s319
      %s334 = sphi 0, %s320
      %s338 = sphi 0, %s338
      %s340 = sphi 0, %s338
      %s341 = sphi 0, %s340
      %s355 = sphi 0, %s341
      %s359 = sphi 0, %s359
      %s361 = sphi 0, %s359
      %s362 = sphi 0, %s361
      %s376 = sphi 0, %s362
      %s380 = sphi 0, %s380
      %s382 = sphi 0, %s380
      %s383 = sphi 0, %s382
      %s397 = sphi 0, %s383
      %s401 = sphi 0, %s401
      %s403 = sphi 0, %s401
      %s404 = sphi 0, %s403
      %s418 = sphi 0, %s404
      %s422 = sphi 0, %s422
      %s424 = sphi 0, %s422
      %s425 = sphi 0, %s424
      %s439 = sphi 0, %s425
      %s443 = sphi 0, %s443
      %s445 = sphi 0, %s443
      %s446 = sphi 0, %s445
      %s460 = sphi 0, %s446
      %s464 = sphi 0, %s464
      %s466 = sphi 0, %s464
      %s467 = sphi 0, %s466
      %s481 = sphi 0, %s467
      %s485 = sphi 0, %s485
      %s487 = sphi 0, %s485
      %s488 = sphi 0, %s487
      %s502 = sphi 0, %s488
      %s506 = sphi 0, %s506
      %s508 = sphi 0, %s506
      %s509 = sphi 0, %s508
      %s523 = sphi 0, %s509
      %s527 = sphi 0, %s527
      %s529 = sphi 0, %s527
      %s530 = sphi 0, %s529
      %s544 = sphi 0, %s530
      %s548 = sphi 0, %s548
      %s550 = sphi 0, %s548
      %s551 = sphi 0, %s550
      %s565 = sphi 0, %s551
      %s569 = sphi 0, %s569
      %s571 = sphi 0, %s569
      %s572 = sphi 0, %s571
      %s586 = sphi 0, %s572
      %s590 = sphi 0, %s590
      %s592 = sphi 0, %s590
      %s593 = sphi 0, %s592
      %s607 = sphi 0, %s593
      %s611 = sphi 0, %s611
      %s613 = sphi 0, %s611
      %s614 = sphi 0, %s613
      %s628 = sphi 0, %s614
      %s636 = sphi 0, %s638
      %s639 = sphi 0, %s636
      %s640 = sphi 0, %s639
      %s656 = sphi 0, %s640
      %s664 = sphi 0, %s666
      %s667 = sphi 0, %s664
      %s668 = sphi 0, %s667
      %s684 = sphi 0, %s668
      %s692 = sphi 0, %s694
      %s695 = sphi 0, %s692
      %s696 = sphi 0, %s695
      %s712 = sphi 0, %s696
    $region4: #{tpu_custom_call.1} parent=1 // loop_header_branch
      %49 = sbr.rel (%p47) target = $region8
    $region5: #{tpu_custom_call.1} parent=1 // loop_body
      %s51 = ssub.s32 %s46, 1
      %s52 = ssub.s32 %s46, 2
      %s59 = sadd.s32 1, %s54
      %p60 = scmp.ge.s32.totalorder %s59, 1
      %s61 = scalar_select %p60, 0, %s59
      %s62 = sadd.s32 1, %s53
      %s63 = scalar_select %p60, %s62, %s53
      %p64 = scmp.ge.s32.totalorder %s63, 2
      %s65 = scalar_select %p64, 0, %s63
      %s66 = ssub.s32 %s53, %s65
      %s67 = ssub.s32 %s54, %s61
      %s68 = sor.u32 %s66, %s67
      %p69 = scmp.eq.s32.totalorder %s68, 0
      %s71 = sadd.s32 %s70, 1
      %s72 = scalar_select %p69, %s70, %s71
      %p75 = pneg %p69
      %p76 = scmp.eq.s32.totalorder %s46, 1
      %p77 = por %p75, %p76
      %p78 = scmp.ne.s32.totalorder %s70, %s73
      %p79 = scmp.eq.s32.totalorder %s46, 0
      %p80 = por %p78, %p79
      %p81 = scmp.ne.s32.totalorder %s70, %s73
      %p82 = scmp.eq.s32.totalorder %s51, 1
      %p83 = por %p81, %p82
      %p84 = scmp.ne.s32.totalorder %s73, %s74
      %p85 = scmp.eq.s32.totalorder %s51, 0
      %p86 = por %p84, %p85
      %p87 = scmp.ne.s32.totalorder %s73, %s74
      %p88 = scmp.eq.s32.totalorder %s52, 1
      %p89 = por %p87, %p88
      %p91 = scmp.ne.s32.totalorder %s74, %s90
      %p92 = scmp.eq.s32.totalorder %s52, 0
      %p93 = por %p91, %p92
      %s94 = ssub.s32 %s53, %s65
      %p95 = scmp.eq.s32.totalorder %s94, 0
      %s97 = sadd.s32 %s96, 1
      %s98 = scalar_select %p95, %s96, %s97
      %p101 = pneg %p95
      %p102 = scmp.eq.s32.totalorder %s46, 1
      %p103 = por %p101, %p102
      %p104 = scmp.ne.s32.totalorder %s96, %s99
      %p105 = scmp.eq.s32.totalorder %s46, 0
      %p106 = por %p104, %p105
      %p107 = scmp.ne.s32.totalorder %s96, %s99
      %p108 = scmp.eq.s32.totalorder %s51, 1
      %p109 = por %p107, %p108
      %p110 = scmp.ne.s32.totalorder %s99, %s100
      %p111 = scmp.eq.s32.totalorder %s51, 0
      %p112 = por %p110, %p111
      %p113 = scmp.ne.s32.totalorder %s99, %s100
      %p114 = scmp.eq.s32.totalorder %s52, 1
      %p115 = por %p113, %p114
      %p117 = scmp.ne.s32.totalorder %s100, %s116
      %p118 = scmp.eq.s32.totalorder %s52, 0
      %p119 = por %p117, %p118
      %s120 = ssub.s32 %s53, %s65
      %p121 = scmp.eq.s32.totalorder %s120, 0
      %s123 = sadd.s32 %s122, 1
      %s124 = scalar_select %p121, %s122, %s123
      %p127 = pneg %p121
      %p128 = scmp.eq.s32.totalorder %s46, 1
      %p129 = por %p127, %p128
      %p130 = scmp.ne.s32.totalorder %s122, %s125
      %p131 = scmp.eq.s32.totalorder %s46, 0
      %p132 = por %p130, %p131
      %p133 = scmp.ne.s32.totalorder %s122, %s125
      %p134 = scmp.eq.s32.totalorder %s51, 1
      %p135 = por %p133, %p134
      %p136 = scmp.ne.s32.totalorder %s125, %s126
      %p137 = scmp.eq.s32.totalorder %s51, 0
      %p138 = por %p136, %p137
      %p139 = scmp.ne.s32.totalorder %s125, %s126
      %p140 = scmp.eq.s32.totalorder %s52, 1
      %p141 = por %p139, %p140
      %p143 = scmp.ne.s32.totalorder %s126, %s142
      %p144 = scmp.eq.s32.totalorder %s52, 0
      %p145 = por %p143, %p144
      %s146 = ssub.s32 %s53, %s65
      %p147 = scmp.eq.s32.totalorder %s146, 0
      %s149 = sadd.s32 %s148, 1
      %s150 = scalar_select %p147, %s148, %s149
      %p153 = pneg %p147
      %p154 = scmp.eq.s32.totalorder %s46, 1
      %p155 = por %p153, %p154
      %p156 = scmp.ne.s32.totalorder %s148, %s151
      %p157 = scmp.eq.s32.totalorder %s46, 0
      %p158 = por %p156, %p157
      %p159 = scmp.ne.s32.totalorder %s148, %s151
      %p160 = scmp.eq.s32.totalorder %s51, 1
      %p161 = por %p159, %p160
      %p162 = scmp.ne.s32.totalorder %s151, %s152
      %p163 = scmp.eq.s32.totalorder %s51, 0
      %p164 = por %p162, %p163
      %p165 = scmp.ne.s32.totalorder %s151, %s152
      %p166 = scmp.eq.s32.totalorder %s52, 1
      %p167 = por %p165, %p166
      %p169 = scmp.ne.s32.totalorder %s152, %s168
      %p170 = scmp.eq.s32.totalorder %s52, 0
      %p171 = por %p169, %p170
      %s172 = ssub.s32 %s53, %s65
      %p173 = scmp.eq.s32.totalorder %s172, 0
      %s175 = sadd.s32 %s174, 1
      %s176 = scalar_select %p173, %s174, %s175
      %p179 = pneg %p173
      %p180 = scmp.eq.s32.totalorder %s46, 1
      %p181 = por %p179, %p180
      %p182 = scmp.ne.s32.totalorder %s174, %s177
      %p183 = scmp.eq.s32.totalorder %s46, 0
      %p184 = por %p182, %p183
      %p185 = scmp.ne.s32.totalorder %s174, %s177
      %p186 = scmp.eq.s32.totalorder %s51, 1
      %p187 = por %p185, %p186
      %p188 = scmp.ne.s32.totalorder %s177, %s178
      %p189 = scmp.eq.s32.totalorder %s51, 0
      %p190 = por %p188, %p189
      %p191 = scmp.ne.s32.totalorder %s177, %s178
      %p192 = scmp.eq.s32.totalorder %s52, 1
      %p193 = por %p191, %p192
      %p195 = scmp.ne.s32.totalorder %s178, %s194
      %p196 = scmp.eq.s32.totalorder %s52, 0
      %p197 = por %p195, %p196
      %s198 = ssub.s32 %s53, %s65
      %s199 = ssub.s32 %s54, %s61
      %s200 = sor.u32 %s198, %s199
      %p201 = scmp.eq.s32.totalorder %s200, 0
      %s203 = sadd.s32 %s202, 1
      %s204 = scalar_select %p201, %s202, %s203
      %p207 = pneg %p201
      %p208 = scmp.eq.s32.totalorder %s46, 1
      %p209 = por %p207, %p208
      %p210 = scmp.ne.s32.totalorder %s202, %s205
      %p211 = scmp.eq.s32.totalorder %s46, 0
      %p212 = por %p210, %p211
      %p213 = scmp.ne.s32.totalorder %s202, %s205
      %p214 = scmp.eq.s32.totalorder %s51, 1
      %p215 = por %p213, %p214
      %p216 = scmp.ne.s32.totalorder %s205, %s206
      %p217 = scmp.eq.s32.totalorder %s51, 0
      %p218 = por %p216, %p217
      %p219 = scmp.ne.s32.totalorder %s205, %s206
      %p220 = scmp.eq.s32.totalorder %s52, 1
      %p221 = por %p219, %p220
      %p223 = scmp.ne.s32.totalorder %s206, %s222
      %p224 = scmp.eq.s32.totalorder %s52, 0
      %p225 = por %p223, %p224
      %s226 = ssub.s32 %s53, %s65
      %s227 = ssub.s32 %s54, %s61
      %s228 = sor.u32 %s226, %s227
      %p229 = scmp.eq.s32.totalorder %s228, 0
      %s231 = sadd.s32 %s230, 1
      %s232 = scalar_select %p229, %s230, %s231
      %p235 = pneg %p229
      %p236 = scmp.eq.s32.totalorder %s46, 1
      %p237 = por %p235, %p236
      %p238 = scmp.ne.s32.totalorder %s230, %s233
      %p239 = scmp.eq.s32.totalorder %s46, 0
      %p240 = por %p238, %p239
      %p241 = scmp.ne.s32.totalorder %s230, %s233
      %p242 = scmp.eq.s32.totalorder %s51, 1
      %p243 = por %p241, %p242
      %p244 = scmp.ne.s32.totalorder %s233, %s234
      %p245 = scmp.eq.s32.totalorder %s51, 0
      %p246 = por %p244, %p245
      %p247 = scmp.ne.s32.totalorder %s233, %s234
      %p248 = scmp.eq.s32.totalorder %s52, 1
      %p249 = por %p247, %p248
      %p251 = scmp.ne.s32.totalorder %s234, %s250
      %p252 = scmp.eq.s32.totalorder %s52, 0
      %p253 = por %p251, %p252
      %s255 = sadd.s32 %s254, 1
      %p258 = scmp.eq.s32.totalorder %s46, 1
      %p259 = scmp.ne.s32.totalorder %s254, %s256
      %p260 = scmp.eq.s32.totalorder %s46, 0
      %p261 = por %p259, %p260
      %p262 = scmp.ne.s32.totalorder %s254, %s256
      %p263 = scmp.eq.s32.totalorder %s51, 1
      %p264 = por %p262, %p263
      %p265 = scmp.ne.s32.totalorder %s256, %s257
      %p266 = scmp.eq.s32.totalorder %s51, 0
      %p267 = por %p265, %p266
      %p268 = scmp.ne.s32.totalorder %s256, %s257
      %p269 = scmp.eq.s32.totalorder %s52, 1
      %p270 = por %p268, %p269
      %p272 = scmp.ne.s32.totalorder %s257, %s271
      %p273 = scmp.eq.s32.totalorder %s52, 0
      %p274 = por %p272, %p273
      %s276 = sadd.s32 %s275, 1
      %p279 = scmp.eq.s32.totalorder %s46, 1
      %p280 = scmp.ne.s32.totalorder %s275, %s277
      %p281 = scmp.eq.s32.totalorder %s46, 0
      %p282 = por %p280, %p281
      %p283 = scmp.ne.s32.totalorder %s275, %s277
      %p284 = scmp.eq.s32.totalorder %s51, 1
      %p285 = por %p283, %p284
      %p286 = scmp.ne.s32.totalorder %s277, %s278
      %p287 = scmp.eq.s32.totalorder %s51, 0
      %p288 = por %p286, %p287
      %p289 = scmp.ne.s32.totalorder %s277, %s278
      %p290 = scmp.eq.s32.totalorder %s52, 1
      %p291 = por %p289, %p290
      %p293 = scmp.ne.s32.totalorder %s278, %s292
      %p294 = scmp.eq.s32.totalorder %s52, 0
      %p295 = por %p293, %p294
      %s297 = sadd.s32 %s296, 1
      %p300 = scmp.eq.s32.totalorder %s46, 1
      %p301 = scmp.ne.s32.totalorder %s296, %s298
      %p302 = scmp.eq.s32.totalorder %s46, 0
      %p303 = por %p301, %p302
      %p304 = scmp.ne.s32.totalorder %s296, %s298
      %p305 = scmp.eq.s32.totalorder %s51, 1
      %p306 = por %p304, %p305
      %p307 = scmp.ne.s32.totalorder %s298, %s299
      %p308 = scmp.eq.s32.totalorder %s51, 0
      %p309 = por %p307, %p308
      %p310 = scmp.ne.s32.totalorder %s298, %s299
      %p311 = scmp.eq.s32.totalorder %s52, 1
      %p312 = por %p310, %p311
      %p314 = scmp.ne.s32.totalorder %s299, %s313
      %p315 = scmp.eq.s32.totalorder %s52, 0
      %p316 = por %p314, %p315
      %s318 = sadd.s32 %s317, 1
      %p321 = scmp.eq.s32.totalorder %s46, 1
      %p322 = scmp.ne.s32.totalorder %s317, %s319
      %p323 = scmp.eq.s32.totalorder %s46, 0
      %p324 = por %p322, %p323
      %p325 = scmp.ne.s32.totalorder %s317, %s319
      %p326 = scmp.eq.s32.totalorder %s51, 1
      %p327 = por %p325, %p326
      %p328 = scmp.ne.s32.totalorder %s319, %s320
      %p329 = scmp.eq.s32.totalorder %s51, 0
      %p330 = por %p328, %p329
      %p331 = scmp.ne.s32.totalorder %s319, %s320
      %p332 = scmp.eq.s32.totalorder %s52, 1
      %p333 = por %p331, %p332
      %p335 = scmp.ne.s32.totalorder %s320, %s334
      %p336 = scmp.eq.s32.totalorder %s52, 0
      %p337 = por %p335, %p336
      %s339 = sadd.s32 %s338, 1
      %p342 = scmp.eq.s32.totalorder %s46, 1
      %p343 = scmp.ne.s32.totalorder %s338, %s340
      %p344 = scmp.eq.s32.totalorder %s46, 0
      %p345 = por %p343, %p344
      %p346 = scmp.ne.s32.totalorder %s338, %s340
      %p347 = scmp.eq.s32.totalorder %s51, 1
      %p348 = por %p346, %p347
      %p349 = scmp.ne.s32.totalorder %s340, %s341
      %p350 = scmp.eq.s32.totalorder %s51, 0
      %p351 = por %p349, %p350
      %p352 = scmp.ne.s32.totalorder %s340, %s341
      %p353 = scmp.eq.s32.totalorder %s52, 1
      %p354 = por %p352, %p353
      %p356 = scmp.ne.s32.totalorder %s341, %s355
      %p357 = scmp.eq.s32.totalorder %s52, 0
      %p358 = por %p356, %p357
      %s360 = sadd.s32 %s359, 1
      %p363 = scmp.eq.s32.totalorder %s46, 1
      %p364 = scmp.ne.s32.totalorder %s359, %s361
      %p365 = scmp.eq.s32.totalorder %s46, 0
      %p366 = por %p364, %p365
      %p367 = scmp.ne.s32.totalorder %s359, %s361
      %p368 = scmp.eq.s32.totalorder %s51, 1
      %p369 = por %p367, %p368
      %p370 = scmp.ne.s32.totalorder %s361, %s362
      %p371 = scmp.eq.s32.totalorder %s51, 0
      %p372 = por %p370, %p371
      %p373 = scmp.ne.s32.totalorder %s361, %s362
      %p374 = scmp.eq.s32.totalorder %s52, 1
      %p375 = por %p373, %p374
      %p377 = scmp.ne.s32.totalorder %s362, %s376
      %p378 = scmp.eq.s32.totalorder %s52, 0
      %p379 = por %p377, %p378
      %s381 = sadd.s32 %s380, 1
      %p384 = scmp.eq.s32.totalorder %s46, 1
      %p385 = scmp.ne.s32.totalorder %s380, %s382
      %p386 = scmp.eq.s32.totalorder %s46, 0
      %p387 = por %p385, %p386
      %p388 = scmp.ne.s32.totalorder %s380, %s382
      %p389 = scmp.eq.s32.totalorder %s51, 1
      %p390 = por %p388, %p389
      %p391 = scmp.ne.s32.totalorder %s382, %s383
      %p392 = scmp.eq.s32.totalorder %s51, 0
      %p393 = por %p391, %p392
      %p394 = scmp.ne.s32.totalorder %s382, %s383
      %p395 = scmp.eq.s32.totalorder %s52, 1
      %p396 = por %p394, %p395
      %p398 = scmp.ne.s32.totalorder %s383, %s397
      %p399 = scmp.eq.s32.totalorder %s52, 0
      %p400 = por %p398, %p399
      %s402 = sadd.s32 %s401, 1
      %p405 = scmp.eq.s32.totalorder %s46, 1
      %p406 = scmp.ne.s32.totalorder %s401, %s403
      %p407 = scmp.eq.s32.totalorder %s46, 0
      %p408 = por %p406, %p407
      %p409 = scmp.ne.s32.totalorder %s401, %s403
      %p410 = scmp.eq.s32.totalorder %s51, 1
      %p411 = por %p409, %p410
      %p412 = scmp.ne.s32.totalorder %s403, %s404
      %p413 = scmp.eq.s32.totalorder %s51, 0
      %p414 = por %p412, %p413
      %p415 = scmp.ne.s32.totalorder %s403, %s404
      %p416 = scmp.eq.s32.totalorder %s52, 1
      %p417 = por %p415, %p416
      %p419 = scmp.ne.s32.totalorder %s404, %s418
      %p420 = scmp.eq.s32.totalorder %s52, 0
      %p421 = por %p419, %p420
      %s423 = sadd.s32 %s422, 1
      %p426 = scmp.eq.s32.totalorder %s46, 1
      %p427 = scmp.ne.s32.totalorder %s422, %s424
      %p428 = scmp.eq.s32.totalorder %s46, 0
      %p429 = por %p427, %p428
      %p430 = scmp.ne.s32.totalorder %s422, %s424
      %p431 = scmp.eq.s32.totalorder %s51, 1
      %p432 = por %p430, %p431
      %p433 = scmp.ne.s32.totalorder %s424, %s425
      %p434 = scmp.eq.s32.totalorder %s51, 0
      %p435 = por %p433, %p434
      %p436 = scmp.ne.s32.totalorder %s424, %s425
      %p437 = scmp.eq.s32.totalorder %s52, 1
      %p438 = por %p436, %p437
      %p440 = scmp.ne.s32.totalorder %s425, %s439
      %p441 = scmp.eq.s32.totalorder %s52, 0
      %p442 = por %p440, %p441
      %s444 = sadd.s32 %s443, 1
      %p447 = scmp.eq.s32.totalorder %s46, 1
      %p448 = scmp.ne.s32.totalorder %s443, %s445
      %p449 = scmp.eq.s32.totalorder %s46, 0
      %p450 = por %p448, %p449
      %p451 = scmp.ne.s32.totalorder %s443, %s445
      %p452 = scmp.eq.s32.totalorder %s51, 1
      %p453 = por %p451, %p452
      %p454 = scmp.ne.s32.totalorder %s445, %s446
      %p455 = scmp.eq.s32.totalorder %s51, 0
      %p456 = por %p454, %p455
      %p457 = scmp.ne.s32.totalorder %s445, %s446
      %p458 = scmp.eq.s32.totalorder %s52, 1
      %p459 = por %p457, %p458
      %p461 = scmp.ne.s32.totalorder %s446, %s460
      %p462 = scmp.eq.s32.totalorder %s52, 0
      %p463 = por %p461, %p462
      %s465 = sadd.s32 %s464, 1
      %p468 = scmp.eq.s32.totalorder %s46, 1
      %p469 = scmp.ne.s32.totalorder %s464, %s466
      %p470 = scmp.eq.s32.totalorder %s46, 0
      %p471 = por %p469, %p470
      %p472 = scmp.ne.s32.totalorder %s464, %s466
      %p473 = scmp.eq.s32.totalorder %s51, 1
      %p474 = por %p472, %p473
      %p475 = scmp.ne.s32.totalorder %s466, %s467
      %p476 = scmp.eq.s32.totalorder %s51, 0
      %p477 = por %p475, %p476
      %p478 = scmp.ne.s32.totalorder %s466, %s467
      %p479 = scmp.eq.s32.totalorder %s52, 1
      %p480 = por %p478, %p479
      %p482 = scmp.ne.s32.totalorder %s467, %s481
      %p483 = scmp.eq.s32.totalorder %s52, 0
      %p484 = por %p482, %p483
      %s486 = sadd.s32 %s485, 1
      %p489 = scmp.eq.s32.totalorder %s46, 1
      %p490 = scmp.ne.s32.totalorder %s485, %s487
      %p491 = scmp.eq.s32.totalorder %s46, 0
      %p492 = por %p490, %p491
      %p493 = scmp.ne.s32.totalorder %s485, %s487
      %p494 = scmp.eq.s32.totalorder %s51, 1
      %p495 = por %p493, %p494
      %p496 = scmp.ne.s32.totalorder %s487, %s488
      %p497 = scmp.eq.s32.totalorder %s51, 0
      %p498 = por %p496, %p497
      %p499 = scmp.ne.s32.totalorder %s487, %s488
      %p500 = scmp.eq.s32.totalorder %s52, 1
      %p501 = por %p499, %p500
      %p503 = scmp.ne.s32.totalorder %s488, %s502
      %p504 = scmp.eq.s32.totalorder %s52, 0
      %p505 = por %p503, %p504
      %s507 = sadd.s32 %s506, 1
      %p510 = scmp.eq.s32.totalorder %s46, 1
      %p511 = scmp.ne.s32.totalorder %s506, %s508
      %p512 = scmp.eq.s32.totalorder %s46, 0
      %p513 = por %p511, %p512
      %p514 = scmp.ne.s32.totalorder %s506, %s508
      %p515 = scmp.eq.s32.totalorder %s51, 1
      %p516 = por %p514, %p515
      %p517 = scmp.ne.s32.totalorder %s508, %s509
      %p518 = scmp.eq.s32.totalorder %s51, 0
      %p519 = por %p517, %p518
      %p520 = scmp.ne.s32.totalorder %s508, %s509
      %p521 = scmp.eq.s32.totalorder %s52, 1
      %p522 = por %p520, %p521
      %p524 = scmp.ne.s32.totalorder %s509, %s523
      %p525 = scmp.eq.s32.totalorder %s52, 0
      %p526 = por %p524, %p525
      %s528 = sadd.s32 %s527, 1
      %p531 = scmp.eq.s32.totalorder %s46, 1
      %p532 = scmp.ne.s32.totalorder %s527, %s529
      %p533 = scmp.eq.s32.totalorder %s46, 0
      %p534 = por %p532, %p533
      %p535 = scmp.ne.s32.totalorder %s527, %s529
      %p536 = scmp.eq.s32.totalorder %s51, 1
      %p537 = por %p535, %p536
      %p538 = scmp.ne.s32.totalorder %s529, %s530
      %p539 = scmp.eq.s32.totalorder %s51, 0
      %p540 = por %p538, %p539
      %p541 = scmp.ne.s32.totalorder %s529, %s530
      %p542 = scmp.eq.s32.totalorder %s52, 1
      %p543 = por %p541, %p542
      %p545 = scmp.ne.s32.totalorder %s530, %s544
      %p546 = scmp.eq.s32.totalorder %s52, 0
      %p547 = por %p545, %p546
      %s549 = sadd.s32 %s548, 1
      %p552 = scmp.eq.s32.totalorder %s46, 1
      %p553 = scmp.ne.s32.totalorder %s548, %s550
      %p554 = scmp.eq.s32.totalorder %s46, 0
      %p555 = por %p553, %p554
      %p556 = scmp.ne.s32.totalorder %s548, %s550
      %p557 = scmp.eq.s32.totalorder %s51, 1
      %p558 = por %p556, %p557
      %p559 = scmp.ne.s32.totalorder %s550, %s551
      %p560 = scmp.eq.s32.totalorder %s51, 0
      %p561 = por %p559, %p560
      %p562 = scmp.ne.s32.totalorder %s550, %s551
      %p563 = scmp.eq.s32.totalorder %s52, 1
      %p564 = por %p562, %p563
      %p566 = scmp.ne.s32.totalorder %s551, %s565
      %p567 = scmp.eq.s32.totalorder %s52, 0
      %p568 = por %p566, %p567
      %s570 = sadd.s32 %s569, 1
      %p573 = scmp.eq.s32.totalorder %s46, 1
      %p574 = scmp.ne.s32.totalorder %s569, %s571
      %p575 = scmp.eq.s32.totalorder %s46, 0
      %p576 = por %p574, %p575
      %p577 = scmp.ne.s32.totalorder %s569, %s571
      %p578 = scmp.eq.s32.totalorder %s51, 1
      %p579 = por %p577, %p578
      %p580 = scmp.ne.s32.totalorder %s571, %s572
      %p581 = scmp.eq.s32.totalorder %s51, 0
      %p582 = por %p580, %p581
      %p583 = scmp.ne.s32.totalorder %s571, %s572
      %p584 = scmp.eq.s32.totalorder %s52, 1
      %p585 = por %p583, %p584
      %p587 = scmp.ne.s32.totalorder %s572, %s586
      %p588 = scmp.eq.s32.totalorder %s52, 0
      %p589 = por %p587, %p588
      %s591 = sadd.s32 %s590, 1
      %p594 = scmp.eq.s32.totalorder %s46, 1
      %p595 = scmp.ne.s32.totalorder %s590, %s592
      %p596 = scmp.eq.s32.totalorder %s46, 0
      %p597 = por %p595, %p596
      %p598 = scmp.ne.s32.totalorder %s590, %s592
      %p599 = scmp.eq.s32.totalorder %s51, 1
      %p600 = por %p598, %p599
      %p601 = scmp.ne.s32.totalorder %s592, %s593
      %p602 = scmp.eq.s32.totalorder %s51, 0
      %p603 = por %p601, %p602
      %p604 = scmp.ne.s32.totalorder %s592, %s593
      %p605 = scmp.eq.s32.totalorder %s52, 1
      %p606 = por %p604, %p605
      %p608 = scmp.ne.s32.totalorder %s593, %s607
      %p609 = scmp.eq.s32.totalorder %s52, 0
      %p610 = por %p608, %p609
      %s612 = sadd.s32 %s611, 1
      %p615 = scmp.eq.s32.totalorder %s46, 1
      %p616 = scmp.ne.s32.totalorder %s611, %s613
      %p617 = scmp.eq.s32.totalorder %s46, 0
      %p618 = por %p616, %p617
      %p619 = scmp.ne.s32.totalorder %s611, %s613
      %p620 = scmp.eq.s32.totalorder %s51, 1
      %p621 = por %p619, %p620
      %p622 = scmp.ne.s32.totalorder %s613, %s614
      %p623 = scmp.eq.s32.totalorder %s51, 0
      %p624 = por %p622, %p623
      %p625 = scmp.ne.s32.totalorder %s613, %s614
      %p626 = scmp.eq.s32.totalorder %s52, 1
      %p627 = por %p625, %p626
      %p629 = scmp.ne.s32.totalorder %s614, %s628
      %p630 = scmp.eq.s32.totalorder %s52, 0
      %p631 = por %p629, %p630
      %s632 = ssub.s32 %s53, %s65
      %s633 = ssub.s32 %s54, %s61
      %s634 = sor.u32 %s632, %s633
      %p635 = scmp.eq.s32.totalorder %s634, 0
      %s637 = sadd.s32 %s636, 1
      %s638 = scalar_select %p635, %s636, %s637
      %p641 = pneg %p635
      %p642 = scmp.eq.s32.totalorder %s46, 1
      %p643 = por %p641, %p642
      %p644 = scmp.ne.s32.totalorder %s636, %s639
      %p645 = scmp.eq.s32.totalorder %s46, 0
      %p646 = por %p644, %p645
      %p647 = scmp.ne.s32.totalorder %s636, %s639
      %p648 = scmp.eq.s32.totalorder %s51, 1
      %p649 = por %p647, %p648
      %p650 = scmp.ne.s32.totalorder %s639, %s640
      %p651 = scmp.eq.s32.totalorder %s51, 0
      %p652 = por %p650, %p651
      %p653 = scmp.ne.s32.totalorder %s639, %s640
      %p654 = scmp.eq.s32.totalorder %s52, 1
      %p655 = por %p653, %p654
      %p657 = scmp.ne.s32.totalorder %s640, %s656
      %p658 = scmp.eq.s32.totalorder %s52, 0
      %p659 = por %p657, %p658
      %s660 = ssub.s32 %s53, %s65
      %s661 = ssub.s32 %s54, %s61
      %s662 = sor.u32 %s660, %s661
      %p663 = scmp.eq.s32.totalorder %s662, 0
      %s665 = sadd.s32 %s664, 1
      %s666 = scalar_select %p663, %s664, %s665
      %p669 = pneg %p663
      %p670 = scmp.eq.s32.totalorder %s46, 1
      %p671 = por %p669, %p670
      %p672 = scmp.ne.s32.totalorder %s664, %s667
      %p673 = scmp.eq.s32.totalorder %s46, 0
      %p674 = por %p672, %p673
      %p675 = scmp.ne.s32.totalorder %s664, %s667
      %p676 = scmp.eq.s32.totalorder %s51, 1
      %p677 = por %p675, %p676
      %p678 = scmp.ne.s32.totalorder %s667, %s668
      %p679 = scmp.eq.s32.totalorder %s51, 0
      %p680 = por %p678, %p679
      %p681 = scmp.ne.s32.totalorder %s667, %s668
      %p682 = scmp.eq.s32.totalorder %s52, 1
      %p683 = por %p681, %p682
      %p685 = scmp.ne.s32.totalorder %s668, %s684
      %p686 = scmp.eq.s32.totalorder %s52, 0
      %p687 = por %p685, %p686
      %s688 = ssub.s32 %s53, %s65
      %s689 = ssub.s32 %s54, %s61
      %s690 = sor.u32 %s688, %s689
      %p691 = scmp.eq.s32.totalorder %s690, 0
      %s693 = sadd.s32 %s692, 1
      %s694 = scalar_select %p691, %s692, %s693
      %p697 = pneg %p691
      %p698 = scmp.eq.s32.totalorder %s46, 1
      %p699 = por %p697, %p698
      %p700 = scmp.ne.s32.totalorder %s692, %s695
      %p701 = scmp.eq.s32.totalorder %s46, 0
      %p702 = por %p700, %p701
      %p703 = scmp.ne.s32.totalorder %s692, %s695
      %p704 = scmp.eq.s32.totalorder %s51, 1
      %p705 = por %p703, %p704
      %p706 = scmp.ne.s32.totalorder %s695, %s696
      %p707 = scmp.eq.s32.totalorder %s51, 0
      %p708 = por %p706, %p707
      %p709 = scmp.ne.s32.totalorder %s695, %s696
      %p710 = scmp.eq.s32.totalorder %s52, 1
      %p711 = por %p709, %p710
      %p713 = scmp.ne.s32.totalorder %s696, %s712
      %p714 = scmp.eq.s32.totalorder %s52, 0
      %p715 = por %p713, %p714
      %p716 = scmp.le.s32.totalorder 1, %s46
      %p717 = scmp.lt.s32.totalorder %s46, 3
      %p718 = pnand %p716, %p717
      %p719 = pneg %p718
      // Predicated region
      $region9: #{tpu_custom_call.1} parent=5 // pred_check
        _
      $region10: #{tpu_custom_call.1} parent=5 // pred_check_branch
        %721 = sbr.rel (%p718) target = $region12
      $region11: #{tpu_custom_call.1} parent=5 // pred_region
        %s722 = ssub.s32 %s46, 1
        // Predicated region
        $region13: #{tpu_custom_call.1} parent=11 // pred_check
          %p723 = pneg %p267
        $region14: #{tpu_custom_call.1} parent=11 // pred_check_branch
          %725 = sbr.rel (%p723) target = $region16
        $region15: #{tpu_custom_call.1} parent=11 // pred_region
          _
        $region16: #{tpu_custom_call.1} parent=11 // pred_fallthru
          _
        // Predicated region
        $region17: #{tpu_custom_call.1} parent=11 // pred_check
          %p726 = pneg %p288
        $region18: #{tpu_custom_call.1} parent=11 // pred_check_branch
          %728 = sbr.rel (%p726) target = $region20
        $region19: #{tpu_custom_call.1} parent=11 // pred_region
          _
        $region20: #{tpu_custom_call.1} parent=11 // pred_fallthru
          _
        // Predicated region
        $region21: #{tpu_custom_call.1} parent=11 // pred_check
          %p729 = pneg %p309
        $region22: #{tpu_custom_call.1} parent=11 // pred_check_branch
          %731 = sbr.rel (%p729) target = $region24
        $region23: #{tpu_custom_call.1} parent=11 // pred_region
          _
        $region24: #{tpu_custom_call.1} parent=11 // pred_fallthru
          _
        // Predicated region
        $region25: #{tpu_custom_call.1} parent=11 // pred_check
          %p732 = pneg %p330
        $region26: #{tpu_custom_call.1} parent=11 // pred_check_branch
          %734 = sbr.rel (%p732) target = $region28
        $region27: #{tpu_custom_call.1} parent=11 // pred_region
          _
        $region28: #{tpu_custom_call.1} parent=11 // pred_fallthru
          _
        // Predicated region
        $region29: #{tpu_custom_call.1} parent=11 // pred_check
          %p735 = pneg %p351
        $region30: #{tpu_custom_call.1} parent=11 // pred_check_branch
          %737 = sbr.rel (%p735) target = $region32
        $region31: #{tpu_custom_call.1} parent=11 // pred_region
          _
        $region32: #{tpu_custom_call.1} parent=11 // pred_fallthru
          _
        // Predicated region
        $region33: #{tpu_custom_call.1} parent=11 // pred_check
          %p738 = pneg %p372
        $region34: #{tpu_custom_call.1} parent=11 // pred_check_branch
          %740 = sbr.rel (%p738) target = $region36
        $region35: #{tpu_custom_call.1} parent=11 // pred_region
          _
        $region36: #{tpu_custom_call.1} parent=11 // pred_fallthru
          _
        // Predicated region
        $region37: #{tpu_custom_call.1} parent=11 // pred_check
          %p741 = pneg %p393
        $region38: #{tpu_custom_call.1} parent=11 // pred_check_branch
          %743 = sbr.rel (%p741) target = $region40
        $region39: #{tpu_custom_call.1} parent=11 // pred_region
          _
        $region40: #{tpu_custom_call.1} parent=11 // pred_fallthru
          _
        // Predicated region
        $region41: #{tpu_custom_call.1} parent=11 // pred_check
          %p744 = pneg %p414
        $region42: #{tpu_custom_call.1} parent=11 // pred_check_branch
          %746 = sbr.rel (%p744) target = $region44
        $region43: #{tpu_custom_call.1} parent=11 // pred_region
          _
        $region44: #{tpu_custom_call.1} parent=11 // pred_fallthru
          _
        // Predicated region
        $region45: #{tpu_custom_call.1} parent=11 // pred_check
          %p747 = pneg %p435
        $region46: #{tpu_custom_call.1} parent=11 // pred_check_branch
          %749 = sbr.rel (%p747) target = $region48
        $region47: #{tpu_custom_call.1} parent=11 // pred_region
          _
        $region48: #{tpu_custom_call.1} parent=11 // pred_fallthru
          _
        // Predicated region
        $region49: #{tpu_custom_call.1} parent=11 // pred_check
          %p750 = pneg %p456
        $region50: #{tpu_custom_call.1} parent=11 // pred_check_branch
          %752 = sbr.rel (%p750) target = $region52
        $region51: #{tpu_custom_call.1} parent=11 // pred_region
          _
        $region52: #{tpu_custom_call.1} parent=11 // pred_fallthru
          _
        // Predicated region
        $region53: #{tpu_custom_call.1} parent=11 // pred_check
          %p753 = pneg %p477
        $region54: #{tpu_custom_call.1} parent=11 // pred_check_branch
          %755 = sbr.rel (%p753) target = $region56
        $region55: #{tpu_custom_call.1} parent=11 // pred_region
          _
        $region56: #{tpu_custom_call.1} parent=11 // pred_fallthru
          _
        // Predicated region
        $region57: #{tpu_custom_call.1} parent=11 // pred_check
          %p756 = pneg %p498
        $region58: #{tpu_custom_call.1} parent=11 // pred_check_branch
          %758 = sbr.rel (%p756) target = $region60
        $region59: #{tpu_custom_call.1} parent=11 // pred_region
          _
        $region60: #{tpu_custom_call.1} parent=11 // pred_fallthru
          _
        // Predicated region
        $region61: #{tpu_custom_call.1} parent=11 // pred_check
          %p759 = pneg %p519
        $region62: #{tpu_custom_call.1} parent=11 // pred_check_branch
          %761 = sbr.rel (%p759) target = $region64
        $region63: #{tpu_custom_call.1} parent=11 // pred_region
          _
        $region64: #{tpu_custom_call.1} parent=11 // pred_fallthru
          _
        // Predicated region
        $region65: #{tpu_custom_call.1} parent=11 // pred_check
          %p762 = pneg %p540
        $region66: #{tpu_custom_call.1} parent=11 // pred_check_branch
          %764 = sbr.rel (%p762) target = $region68
        $region67: #{tpu_custom_call.1} parent=11 // pred_region
          _
        $region68: #{tpu_custom_call.1} parent=11 // pred_fallthru
          _
        // Predicated region
        $region69: #{tpu_custom_call.1} parent=11 // pred_check
          %p765 = pneg %p561
        $region70: #{tpu_custom_call.1} parent=11 // pred_check_branch
          %767 = sbr.rel (%p765) target = $region72
        $region71: #{tpu_custom_call.1} parent=11 // pred_region
          _
        $region72: #{tpu_custom_call.1} parent=11 // pred_fallthru
          _
        // Predicated region
        $region73: #{tpu_custom_call.1} parent=11 // pred_check
          %p768 = pneg %p582
        $region74: #{tpu_custom_call.1} parent=11 // pred_check_branch
          %770 = sbr.rel (%p768) target = $region76
        $region75: #{tpu_custom_call.1} parent=11 // pred_region
          _
        $region76: #{tpu_custom_call.1} parent=11 // pred_fallthru
          _
        // Predicated region
        $region77: #{tpu_custom_call.1} parent=11 // pred_check
          %p771 = pneg %p603
        $region78: #{tpu_custom_call.1} parent=11 // pred_check_branch
          %773 = sbr.rel (%p771) target = $region80
        $region79: #{tpu_custom_call.1} parent=11 // pred_region
          _
        $region80: #{tpu_custom_call.1} parent=11 // pred_fallthru
          _
        // Predicated region
        $region81: #{tpu_custom_call.1} parent=11 // pred_check
          %p774 = pneg %p624
        $region82: #{tpu_custom_call.1} parent=11 // pred_check_branch
          %776 = sbr.rel (%p774) target = $region84
        $region83: #{tpu_custom_call.1} parent=11 // pred_region
          _
        $region84: #{tpu_custom_call.1} parent=11 // pred_fallthru
          _
      $region12: #{tpu_custom_call.1} parent=5 // pred_fallthru
        _
      %p777 = scmp.lt.s32.totalorder %s46, 2
      // Predicated region
      $region85: #{tpu_custom_call.1} parent=5 // pred_check
        %p778 = pneg %p777
      $region86: #{tpu_custom_call.1} parent=5 // pred_check_branch
        %780 = sbr.rel (%p778) target = $region88
      $region87: #{tpu_custom_call.1} parent=5 // pred_region
        // Predicated region
        $region89: #{tpu_custom_call.1} parent=87 // pred_check
          %p781 = pneg %p80
        $region90: #{tpu_custom_call.1} parent=87 // pred_check_branch
          %783 = sbr.rel (%p781) target = $region92
        $region91: #{tpu_custom_call.1} parent=87 // pred_region
          %s784 = sand.u32 %s70, 1
          %s785 = scalar_lea.sflag [#allocation4], %s784
          %s786 = sand.u32 %s70, 1
          %s787 = smul.addr %s786, 4
          %s788 = scalar_lea.vmem [#allocation3], %s787
          %s790 = ssub.s32 64, 64
          %791 = vsyncadd %s785, %s790
          %s792 = sadd.s32 %s54, %s53
          %s793 = smul.addr %s792, 64
          %s794 = scalar_lea.hbm %s0, %s793
          %s796 = sshll.u32 %s788, 4
          %s797 = int_to_ptr.vmem [resolvable:$true] %s796
          %799 = dma.hbm_to_vmem [thread:$0]  %s794, 64, %s797, %s785
        $region92: #{tpu_custom_call.1} parent=87 // pred_fallthru
          _
        // Predicated region
        $region93: #{tpu_custom_call.1} parent=87 // pred_check
          %p800 = pneg %p106
        $region94: #{tpu_custom_call.1} parent=87 // pred_check_branch
          %802 = sbr.rel (%p800) target = $region96
        $region95: #{tpu_custom_call.1} parent=87 // pred_region
          %p803 = scmp.lt.s32.totalorder %s53, 1
          %s804 = scalar_select %p803, %s53, 1
          %s805 = smul.addr %s804, 4
          %s806 = smul.addr %s805, 4
          %s807 = scalar_lea.vmem %s1, %s806
        $region96: #{tpu_custom_call.1} parent=87 // pred_fallthru
          _
        // Predicated region
        $region97: #{tpu_custom_call.1} parent=87 // pred_check
          %p808 = pneg %p132
        $region98: #{tpu_custom_call.1} parent=87 // pred_check_branch
          %810 = sbr.rel (%p808) target = $region100
        $region99: #{tpu_custom_call.1} parent=87 // pred_region
          %p811 = scmp.lt.s32.totalorder %s53, 1
          %s812 = scalar_select %p811, %s53, 1
          %s813 = smul.addr %s812, 4
          %s814 = smul.addr %s813, 4
          %s815 = scalar_lea.vmem %s2, %s814
        $region100: #{tpu_custom_call.1} parent=87 // pred_fallthru
          _
        // Predicated region
        $region101: #{tpu_custom_call.1} parent=87 // pred_check
          %p816 = pneg %p158
        $region102: #{tpu_custom_call.1} parent=87 // pred_check_branch
          %818 = sbr.rel (%p816) target = $region104
        $region103: #{tpu_custom_call.1} parent=87 // pred_region
          %p819 = scmp.lt.s32.totalorder %s53, 1
          %s820 = scalar_select %p819, %s53, 1
          %s821 = smul.addr %s820, 4
          %s822 = smul.addr %s821, 4
          %s823 = scalar_lea.vmem %s3, %s822
        $region104: #{tpu_custom_call.1} parent=87 // pred_fallthru
          _
        // Predicated region
        $region105: #{tpu_custom_call.1} parent=87 // pred_check
          %p824 = pneg %p184
        $region106: #{tpu_custom_call.1} parent=87 // pred_check_branch
          %826 = sbr.rel (%p824) target = $region108
        $region107: #{tpu_custom_call.1} parent=87 // pred_region
          %p827 = scmp.lt.s32.totalorder %s53, 1
          %s828 = scalar_select %p827, %s53, 1
          %s829 = smul.addr %s828, 4
          %s830 = smul.addr %s829, 4
          %s831 = scalar_lea.vmem %s4, %s830
        $region108: #{tpu_custom_call.1} parent=87 // pred_fallthru
          _
        // Predicated region
        $region109: #{tpu_custom_call.1} parent=87 // pred_check
          %p832 = pneg %p212
        $region110: #{tpu_custom_call.1} parent=87 // pred_check_branch
          %834 = sbr.rel (%p832) target = $region112
        $region111: #{tpu_custom_call.1} parent=87 // pred_region
          %p835 = scmp.lt.s32.totalorder %s53, 1
          %s836 = scalar_select %p835, %s53, 1
          %p837 = scmp.lt.s32.totalorder %s54, 0
          %s838 = scalar_select %p837, %s54, 0
          %s839 = sadd.s32 %s838, %s836
          %s840 = smul.addr %s839, 4
          %s841 = scalar_lea.vmem %s5, %s840
        $region112: #{tpu_custom_call.1} parent=87 // pred_fallthru
          _
        // Predicated region
        $region113: #{tpu_custom_call.1} parent=87 // pred_check
          %p842 = pneg %p240
        $region114: #{tpu_custom_call.1} parent=87 // pred_check_branch
          %844 = sbr.rel (%p842) target = $region116
        $region115: #{tpu_custom_call.1} parent=87 // pred_region
          %s845 = sand.u32 %s230, 1
          %s846 = scalar_lea.sflag [#allocation7], %s845
          %s847 = sand.u32 %s230, 1
          %s848 = smul.addr %s847, 4
          %s849 = scalar_lea.vmem [#allocation6], %s848
          %s851 = ssub.s32 64, 64
          %852 = vsyncadd %s846, %s851
          %s853 = sadd.s32 %s54, %s53
          %s854 = smul.addr %s853, 64
          %s855 = scalar_lea.hbm %s6, %s854
          %s857 = sshll.u32 %s849, 4
          %s858 = int_to_ptr.vmem [resolvable:$true] %s857
          %860 = dma.hbm_to_vmem [thread:$0]  %s855, 64, %s858, %s846
        $region116: #{tpu_custom_call.1} parent=87 // pred_fallthru
          _
      $region88: #{tpu_custom_call.1} parent=5 // pred_fallthru
        _
      %p861 = scmp.le.s32.totalorder 1, %s46
      %p862 = scmp.lt.s32.totalorder %s46, 3
      %p863 = pnand %p861, %p862
      %p864 = pneg %p863
      // Predicated region
      $region117: #{tpu_custom_call.1} parent=5 // pred_check
        _
      $region118: #{tpu_custom_call.1} parent=5 // pred_check_branch
        %866 = sbr.rel (%p863) target = $region120
      $region119: #{tpu_custom_call.1} parent=5 // pred_region
        %s867 = ssub.s32 %s46, 1
        %s868 = sand.u32 %s73, 1
        %s869 = scalar_lea.sflag [#allocation4], %s868
        %s870 = sand.u32 %s73, 1
        %s871 = smul.addr %s870, 4
        %s872 = scalar_lea.vmem [#allocation3], %s871
        // Predicated region
        $region121: #{tpu_custom_call.1} parent=119 // pred_check
          %p873 = pneg %p86
        $region122: #{tpu_custom_call.1} parent=119 // pred_check_branch
          %875 = sbr.rel (%p873) target = $region124
        $region123: #{tpu_custom_call.1} parent=119 // pred_region
          %876 = dma.done %s869, 64
        $region124: #{tpu_custom_call.1} parent=119 // pred_fallthru
          _
        %s877 = sand.u32 %s233, 1
        %s878 = scalar_lea.sflag [#allocation7], %s877
        %s879 = sand.u32 %s233, 1
        %s880 = smul.addr %s879, 4
        %s881 = scalar_lea.vmem [#allocation6], %s880
        // Predicated region
        $region125: #{tpu_custom_call.1} parent=119 // pred_check
          %p882 = pneg %p246
        $region126: #{tpu_custom_call.1} parent=119 // pred_check_branch
          %884 = sbr.rel (%p882) target = $region128
        $region127: #{tpu_custom_call.1} parent=119 // pred_region
          %885 = dma.done %s878, 64
        $region128: #{tpu_custom_call.1} parent=119 // pred_fallthru
          _
        %s886 = sand.u32 %s73, 1
        %s887 = scalar_lea.sflag [#allocation4], %s886
        %s888 = sand.u32 %s73, 1
        %s889 = smul.addr %s888, 4
        %s890 = scalar_lea.vmem [#allocation3], %s889
        %p891 = pneg %p86
        %p892 = pneg %p83
        %p893 = scmp.lt.s32.totalorder %s55, 1
        %s894 = scalar_select %p893, %s55, 1
        %s895 = smul.addr %s894, 4
        %s896 = smul.addr %s895, 4
        %s897 = scalar_lea.vmem %s1, %s896
        %p898 = pneg %p112
        %p899 = pneg %p109
        %p900 = scmp.lt.s32.totalorder %s55, 1
        %s901 = scalar_select %p900, %s55, 1
        %s902 = smul.addr %s901, 4
        %s903 = smul.addr %s902, 4
        %s904 = scalar_lea.vmem %s2, %s903
        %p905 = pneg %p138
        %p906 = pneg %p135
        %p907 = scmp.lt.s32.totalorder %s55, 1
        %s908 = scalar_select %p907, %s55, 1
        %s909 = smul.addr %s908, 4
        %s910 = smul.addr %s909, 4
        %s911 = scalar_lea.vmem %s3, %s910
        %p912 = pneg %p164
        %p913 = pneg %p161
        %p914 = scmp.lt.s32.totalorder %s55, 1
        %s915 = scalar_select %p914, %s55, 1
        %s916 = smul.addr %s915, 4
        %s917 = smul.addr %s916, 4
        %s918 = scalar_lea.vmem %s4, %s917
        %p919 = pneg %p190
        %p920 = pneg %p187
        %p921 = scmp.lt.s32.totalorder %s55, 1
        %s922 = scalar_select %p921, %s55, 1
        %p923 = scmp.lt.s32.totalorder %s56, 0
        %s924 = scalar_select %p923, %s56, 0
        %s925 = sadd.s32 %s924, %s922
        %s926 = smul.addr %s925, 4
        %s927 = scalar_lea.vmem %s5, %s926
        %p928 = pneg %p218
        %p929 = pneg %p215
        %s930 = sand.u32 %s233, 1
        %s931 = scalar_lea.sflag [#allocation7], %s930
        %s932 = sand.u32 %s233, 1
        %s933 = smul.addr %s932, 4
        %s934 = scalar_lea.vmem [#allocation6], %s933
        %p935 = pneg %p246
        %p936 = pneg %p243
        %p937 = pneg %p267
        %p938 = pneg %p264
        %p939 = pneg %p288
        %p940 = pneg %p285
        %p941 = pneg %p309
        %p942 = pneg %p306
        %p943 = pneg %p330
        %p944 = pneg %p327
        %p945 = pneg %p351
        %p946 = pneg %p348
        %p947 = pneg %p372
        %p948 = pneg %p369
        %p949 = pneg %p393
        %p950 = pneg %p390
        %p951 = pneg %p414
        %p952 = pneg %p411
        %p953 = pneg %p435
        %p954 = pneg %p432
        %p955 = pneg %p456
        %p956 = pneg %p453
        %p957 = pneg %p477
        %p958 = pneg %p474
        %p959 = pneg %p498
        %p960 = pneg %p495
        %p961 = pneg %p519
        %p962 = pneg %p516
        %p963 = pneg %p540
        %p964 = pneg %p537
        %p965 = pneg %p561
        %p966 = pneg %p558
        %p967 = pneg %p582
        %p968 = pneg %p579
        %p969 = pneg %p603
        %p970 = pneg %p600
        %p971 = pneg %p624
        %p972 = pneg %p621
        %p973 = pneg %p652
        %p974 = pneg %p649
        %s975 = sand.u32 %s639, 1
        %s976 = scalar_lea.sflag [#allocation5], %s975
        %s977 = sand.u32 %s639, 1
        %s978 = smul.addr %s977, 8
        %s979 = scalar_lea.vmem [#allocation8], %s978
        %p980 = pneg %p680
        %p981 = pneg %p677
        %s982 = sand.u32 %s51, 1
        %s983 = scalar_lea.sflag [#allocation10], %s982
        %s984 = sand.u32 %s667, 1
        %s985 = smul.addr %s984, 32
        %s986 = scalar_lea.vmem [#allocation9], %s985
        %p987 = pneg %p708
        %p988 = pneg %p705
        %s989 = sand.u32 %s51, 1
        %s990 = scalar_lea.sflag [#allocation10], %s989
        %s991 = sand.u32 %s695, 1
        %s992 = smul.addr %s991, 32
        %s993 = scalar_lea.vmem [#allocation11], %s992
        %p994 = scmp.lt.s32.totalorder %s55, 1
        %s995 = scalar_select %p994, %s55, 1
        %s996 = smul.addr %s995, 4
        %s997 = smul.addr %s996, 4
        %s998 = scalar_lea.vmem %s1, %s997
        %p999 = scmp.lt.s32.totalorder %s55, 1
        %s1000 = scalar_select %p999, %s55, 1
        %s1001 = smul.addr %s1000, 4
        %s1002 = smul.addr %s1001, 4
        %s1003 = scalar_lea.vmem %s2, %s1002
        %p1004 = scmp.lt.s32.totalorder %s55, 1
        %s1005 = scalar_select %p1004, %s55, 1
        %s1006 = smul.addr %s1005, 4
        %s1007 = smul.addr %s1006, 4
        %s1008 = scalar_lea.vmem %s3, %s1007
        %p1009 = scmp.lt.s32.totalorder %s55, 1
        %s1010 = scalar_select %p1009, %s55, 1
        %s1011 = smul.addr %s1010, 4
        %s1012 = smul.addr %s1011, 4
        %s1013 = scalar_lea.vmem %s4, %s1012
        %p1014 = scmp.lt.s32.totalorder %s55, 1
        %s1015 = scalar_select %p1014, %s55, 1
        %p1016 = scmp.lt.s32.totalorder %s56, 0
        %s1017 = scalar_select %p1016, %s56, 0
        %s1018 = sadd.s32 %s1017, %s1015
        %s1019 = smul.addr %s1018, 4
        %s1020 = scalar_lea.vmem %s5, %s1019
        %v1022 = vld [vmem:[%s872] sm:$0xf]
        %v1023 = vld [vmem:[%s1020] sm:$0xf]
        %v1024 = vunpack.c.l.bf16 %v1023
        %v1025 = vld [vmem:[%s881] sm:$0xf]
        %v1026 = vunpack.c.l.bf16 %v1025
        %v1027 = vunpack.c.l.bf16 %v1022
        %v1028 = vld [vmem:[%s7] sm:$0xf]
        %v1029 = vld [vmem:[%s7 + $0x4] sm:$0xf]
        %v1030 = vld [vmem:[%s7 + $0x8] sm:$0xf]
        %v1031 = vld [vmem:[%s7 + $0xc] sm:$0xf]
        %v1032 = vld [vmem:[%s8] sm:$0x1]
        %v1034 = vlaneseq
        %v1035 = vshrl.u32 %v1034, 7
        %v1036 = vsub.s32 0, %v1035
        %v1037 = vrot.slane %v1032, %v1036
        %v1043 = vunpack.c.l.b16 %v1028
        %v1044 = vunpack.c.l.b16 %v1029
        %v1045 = vunpack.c.l.b16 %v1030
        %v1046 = vunpack.c.l.b16 %v1031
        %v1047 = vpack.c.b16 %v1044, %v1043
        %v1048 = vpack.c.b16 %v1046, %v1045
        %vm1051 = vcmask 261120
        %v1053 = vsel %vm1051, %v1022, 0
        %1055 = vmatprep.subr.bf16.mxu0 0
        %1056 = vmatpush1.bf16.msra.mxu0 %v1047
        %1057 = vmatprep.subr.bf16.mxu0 0
        %1058 = vmatpush1.bf16.msra.mxu0 %v1048
        %1059 = vmatprep.subr.bf16.mxu0 0
        %1060 = vmatpush1.bf16.msra.mxu0 0
        %1061 = vmatprep.subr.bf16.mxu0 0
        %1062 = vmatpush1.bf16.msra.mxu0 0
        %1063 = vmatprep.subr.bf16.mxu0 0
        %1064 = vmatpush1.bf16.msra.mxu0 0
        %1065 = vmatprep.subr.bf16.mxu0 0
        %1066 = vmatpush1.bf16.msra.mxu0 0
        %1067 = vmatprep.subr.bf16.mxu0 0
        %1068 = vmatpush1.bf16.msra.mxu0 0
        %1069 = vmatprep.subr.bf16.mxu0 0
        %1070 = vmatpush1.bf16.msra.mxu0 0
        %1071 = vmatprep.subr.bf16.mxu0 0
        %1072 = vmatpush1.bf16.msra.mxu0 0
        %1073 = vmatprep.subr.bf16.mxu0 0
        %1074 = vmatpush1.bf16.msra.mxu0 0
        %1075 = vmatprep.subr.bf16.mxu0 0
        %1076 = vmatpush1.bf16.msra.mxu0 0
        %1077 = vmatprep.subr.bf16.mxu0 0
        %1078 = vmatpush1.bf16.msra.mxu0 0
        %1079 = vmatprep.subr.bf16.mxu0 0
        %1080 = vmatpush1.bf16.msra.mxu0 0
        %1081 = vmatprep.subr.bf16.mxu0 0
        %1082 = vmatpush1.bf16.msra.mxu0 0
        %1083 = vmatprep.subr.bf16.mxu0 0
        %1084 = vmatpush1.bf16.msra.mxu0 0
        %1085 = vmatprep.subr.bf16.mxu0 0
        %1086 = vmatpush1.bf16.msra.mxu0 0
        %1087 = vmatprep.mubr.bf16.mxu0 0
        %1088 = vmatmul.mubr.bf16.gmra.mrb[0].mxu0 %v1053
        %v1089 = vpop.f32.mrb[0].mxu0
        %v1090 = vadd.f32 %v1037, %v1089
        %v1091 = vpop.f32.mrb[0].mxu0
        %v1092 = vpop.f32.mrb[0].mxu0
        %v1093 = vpop.f32.mrb[0].mxu0
        %1094 = vdwg.mxu0
        %v1095 = vld [vmem:[%s998] sm:$0xf]
        %v1096 = vld [vmem:[%s1003] sm:$0xf]
        %v1097 = vpack.c.bf16 %v1090, %v1090
        %vm1098 = vcmask 64512
        %v1100 = vsel %vm1098, %v1097, 0
        %v1103 = vsel %vm1098, %v1095, 0
        %1105 = vmatprep.subr.bf16.mxu0 0
        %1106 = vmatpush1.bf16.xpose.msra.mxu0 %v1103
        %1107 = vmatprep.subr.bf16.mxu0 0
        %1108 = vmatpush1.bf16.xpose.msra.mxu0 0
        %1109 = vmatprep.subr.bf16.mxu0 0
        %1110 = vmatpush1.bf16.xpose.msra.mxu0 0
        %1111 = vmatprep.subr.bf16.mxu0 0
        %1112 = vmatpush1.bf16.xpose.msra.mxu0 0
        %1113 = vmatprep.subr.bf16.mxu0 0
        %1114 = vmatpush1.bf16.xpose.msra.mxu0 0
        %1115 = vmatprep.subr.bf16.mxu0 0
        %1116 = vmatpush1.bf16.xpose.msra.mxu0 0
        %1117 = vmatprep.subr.bf16.mxu0 0
        %1118 = vmatpush1.bf16.xpose.msra.mxu0 0
        %1119 = vmatprep.subr.bf16.mxu0 0
        %1120 = vmatpush1.bf16.xpose.msra.mxu0 0
        %1121 = vmatprep.subr.bf16.mxu0 0
        %1122 = vmatpush1.bf16.xpose.msra.mxu0 0
        %1123 = vmatprep.subr.bf16.mxu0 0
        %1124 = vmatpush1.bf16.xpose.msra.mxu0 0
        %1125 = vmatprep.subr.bf16.mxu0 0
        %1126 = vmatpush1.bf16.xpose.msra.mxu0 0
        %1127 = vmatprep.subr.bf16.mxu0 0
        %1128 = vmatpush1.bf16.xpose.msra.mxu0 0
        %1129 = vmatprep.subr.bf16.mxu0 0
        %1130 = vmatpush1.bf16.xpose.msra.mxu0 0
        %1131 = vmatprep.subr.bf16.mxu0 0
        %1132 = vmatpush1.bf16.xpose.msra.mxu0 0
        %1133 = vmatprep.subr.bf16.mxu0 0
        %1134 = vmatpush1.bf16.xpose.msra.mxu0 0
        %1135 = vmatprep.subr.bf16.mxu0 0
        %1136 = vmatpush1.bf16.xpose.msra.mxu0 0
        %1137 = vmatprep.mubr.bf16.mxu0 0
        %1138 = vmatmul.mubr.bf16.gmra.mrb[0].mxu0 %v1100
        %v1139 = vpop.f32.mrb[0].mxu0
        %v1140 = vadd.f32 %v1024, %v1139
        %v1141 = vpop.f32.mrb[0].mxu0
        %v1142 = vpop.f32.mrb[0].mxu0
        %v1143 = vpop.f32.mrb[0].mxu0
        %1144 = vdwg.mxu0
        %v1145 = vsel %vm1098, %v1140, -inf
        %1146 = vmax.xlane.f32.xlu0 %v1145
        %v1147 = vpop.xlane.xlu0 %1146
        %v1148 = vsub.f32 %v1140, %v1147
        %v1149 = vmul.f32 %v1148, 1.442695
        %v1150 = vpow.pop %v1149
        %v1151 = vsel %vm1098, %v1150, 0.0
        %1152 = vadd.xlane.f32.xlu0 %v1151
        %v1153 = vpop.xlane.xlu0 %1152
        %v1154 = vrcp.pop %v1153
        %v1155 = vmul.f32 %v1150, %v1154
        %1156 = vst.msk [vmem:[%s986] sm:$0xff] %vm1098, %v1155
        %v1157 = vpack.c.bf16 %v1155, %v1155
        %v1159 = vsel %vm1098, %v1157, 0
        %vm1161 = vcmask 1043456
        %v1163 = vsel %vm1161, %v1096, 0
        %1165 = vmatprep.subr.bf16.mxu0 0
        %1166 = vmatpush1.bf16.msra.mxu0 %v1163
        %1167 = vmatprep.subr.bf16.mxu0 0
        %1168 = vmatpush1.bf16.msra.mxu0 0
        %1169 = vmatprep.subr.bf16.mxu0 0
        %1170 = vmatpush1.bf16.msra.mxu0 0
        %1171 = vmatprep.subr.bf16.mxu0 0
        %1172 = vmatpush1.bf16.msra.mxu0 0
        %1173 = vmatprep.subr.bf16.mxu0 0
        %1174 = vmatpush1.bf16.msra.mxu0 0
        %1175 = vmatprep.subr.bf16.mxu0 0
        %1176 = vmatpush1.bf16.msra.mxu0 0
        %1177 = vmatprep.subr.bf16.mxu0 0
        %1178 = vmatpush1.bf16.msra.mxu0 0
        %1179 = vmatprep.subr.bf16.mxu0 0
        %1180 = vmatpush1.bf16.msra.mxu0 0
        %1181 = vmatprep.subr.bf16.mxu0 0
        %1182 = vmatpush1.bf16.msra.mxu0 0
        %1183 = vmatprep.subr.bf16.mxu0 0
        %1184 = vmatpush1.bf16.msra.mxu0 0
        %1185 = vmatprep.subr.bf16.mxu0 0
        %1186 = vmatpush1.bf16.msra.mxu0 0
        %1187 = vmatprep.subr.bf16.mxu0 0
        %1188 = vmatpush1.bf16.msra.mxu0 0
        %1189 = vmatprep.subr.bf16.mxu0 0
        %1190 = vmatpush1.bf16.msra.mxu0 0
        %1191 = vmatprep.subr.bf16.mxu0 0
        %1192 = vmatpush1.bf16.msra.mxu0 0
        %1193 = vmatprep.subr.bf16.mxu0 0
        %1194 = vmatpush1.bf16.msra.mxu0 0
        %1195 = vmatprep.subr.bf16.mxu0 0
        %1196 = vmatpush1.bf16.msra.mxu0 0
        %1197 = vmatprep.mubr.bf16.mxu0 0
        %1198 = vmatmul.mubr.bf16.gmra.mrb[0].mxu0 %v1159
        %v1199 = vpop.f32.mrb[0].mxu0
        %v1200 = vadd.f32 0.0, %v1199
        %v1201 = vpop.f32.mrb[0].mxu0
        %v1202 = vpop.f32.mrb[0].mxu0
        %v1203 = vpop.f32.mrb[0].mxu0
        %1204 = vdwg.mxu0
        %v1205 = vpack.c.bf16 %v1200, %v1200
        %vm1206 = vcmask 60416
        %1207 = vst.msk [vmem:[#allocation2] sm:$0xf] %vm1206, %v1205
        %s1208 = scalar_lea.vmem %s7, 16
        %v1209 = vld [vmem:[%s1208] sm:$0xf]
        %v1210 = vld [vmem:[%s1208 + $0x4] sm:$0xf]
        %v1211 = vld [vmem:[%s1208 + $0x8] sm:$0xf]
        %v1212 = vld [vmem:[%s1208 + $0xc] sm:$0xf]
        %s1213 = scalar_lea.vmem %s8, 1
        %v1214 = vld [vmem:[%s1213] sm:$0x1]
        %v1216 = vlaneseq
        %v1217 = vshrl.u32 %v1216, 7
        %v1218 = vsub.s32 0, %v1217
        %v1219 = vrot.slane %v1214, %v1218
        %v1225 = vunpack.c.l.b16 %v1209
        %v1226 = vunpack.c.l.b16 %v1210
        %v1227 = vunpack.c.l.b16 %v1211
        %v1228 = vunpack.c.l.b16 %v1212
        %v1229 = vpack.c.b16 %v1226, %v1225
        %v1230 = vpack.c.b16 %v1228, %v1227
        %1233 = vmatprep.subr.bf16.mxu0 0
        %1234 = vmatpush1.bf16.msra.mxu0 %v1229
        %1235 = vmatprep.subr.bf16.mxu0 0
        %1236 = vmatpush1.bf16.msra.mxu0 %v1230
        %1237 = vmatprep.subr.bf16.mxu0 0
        %1238 = vmatpush1.bf16.msra.mxu0 0
        %1239 = vmatprep.subr.bf16.mxu0 0
        %1240 = vmatpush1.bf16.msra.mxu0 0
        %1241 = vmatprep.subr.bf16.mxu0 0
        %1242 = vmatpush1.bf16.msra.mxu0 0
        %1243 = vmatprep.subr.bf16.mxu0 0
        %1244 = vmatpush1.bf16.msra.mxu0 0
        %1245 = vmatprep.subr.bf16.mxu0 0
        %1246 = vmatpush1.bf16.msra.mxu0 0
        %1247 = vmatprep.subr.bf16.mxu0 0
        %1248 = vmatpush1.bf16.msra.mxu0 0
        %1249 = vmatprep.subr.bf16.mxu0 0
        %1250 = vmatpush1.bf16.msra.mxu0 0
        %1251 = vmatprep.subr.bf16.mxu0 0
        %1252 = vmatpush1.bf16.msra.mxu0 0
        %1253 = vmatprep.subr.bf16.mxu0 0
        %1254 = vmatpush1.bf16.msra.mxu0 0
        %1255 = vmatprep.subr.bf16.mxu0 0
        %1256 = vmatpush1.bf16.msra.mxu0 0
        %1257 = vmatprep.subr.bf16.mxu0 0
        %1258 = vmatpush1.bf16.msra.mxu0 0
        %1259 = vmatprep.subr.bf16.mxu0 0
        %1260 = vmatpush1.bf16.msra.mxu0 0
        %1261 = vmatprep.subr.bf16.mxu0 0
        %1262 = vmatpush1.bf16.msra.mxu0 0
        %1263 = vmatprep.subr.bf16.mxu0 0
        %1264 = vmatpush1.bf16.msra.mxu0 0
        %1265 = vmatprep.mubr.bf16.mxu0 0
        %1266 = vmatmul.mubr.bf16.gmra.mrb[0].mxu0 %v1053
        %v1267 = vpop.f32.mrb[0].mxu0
        %v1268 = vadd.f32 %v1219, %v1267
        %v1269 = vpop.f32.mrb[0].mxu0
        %v1270 = vpop.f32.mrb[0].mxu0
        %v1271 = vpop.f32.mrb[0].mxu0
        %1272 = vdwg.mxu0
        %s1273 = scalar_lea.vmem %s998, 4
        %v1274 = vld [vmem:[%s1273] sm:$0xf]
        %s1275 = scalar_lea.vmem %s1003, 4
        %v1276 = vld [vmem:[%s1275] sm:$0xf]
        %v1277 = vpack.c.bf16 %v1268, %v1268
        %v1279 = vsel %vm1098, %v1277, 0
        %v1282 = vsel %vm1098, %v1274, 0
        %1284 = vmatprep.subr.bf16.mxu0 0
        %1285 = vmatpush1.bf16.xpose.msra.mxu0 %v1282
        %1286 = vmatprep.subr.bf16.mxu0 0
        %1287 = vmatpush1.bf16.xpose.msra.mxu0 0
        %1288 = vmatprep.subr.bf16.mxu0 0
        %1289 = vmatpush1.bf16.xpose.msra.mxu0 0
        %1290 = vmatprep.subr.bf16.mxu0 0
        %1291 = vmatpush1.bf16.xpose.msra.mxu0 0
        %1292 = vmatprep.subr.bf16.mxu0 0
        %1293 = vmatpush1.bf16.xpose.msra.mxu0 0
        %1294 = vmatprep.subr.bf16.mxu0 0
        %1295 = vmatpush1.bf16.xpose.msra.mxu0 0
        %1296 = vmatprep.subr.bf16.mxu0 0
        %1297 = vmatpush1.bf16.xpose.msra.mxu0 0
        %1298 = vmatprep.subr.bf16.mxu0 0
        %1299 = vmatpush1.bf16.xpose.msra.mxu0 0
        %1300 = vmatprep.subr.bf16.mxu0 0
        %1301 = vmatpush1.bf16.xpose.msra.mxu0 0
        %1302 = vmatprep.subr.bf16.mxu0 0
        %1303 = vmatpush1.bf16.xpose.msra.mxu0 0
        %1304 = vmatprep.subr.bf16.mxu0 0
        %1305 = vmatpush1.bf16.xpose.msra.mxu0 0
        %1306 = vmatprep.subr.bf16.mxu0 0
        %1307 = vmatpush1.bf16.xpose.msra.mxu0 0
        %1308 = vmatprep.subr.bf16.mxu0 0
        %1309 = vmatpush1.bf16.xpose.msra.mxu0 0
        %1310 = vmatprep.subr.bf16.mxu0 0
        %1311 = vmatpush1.bf16.xpose.msra.mxu0 0
        %1312 = vmatprep.subr.bf16.mxu0 0
        %1313 = vmatpush1.bf16.xpose.msra.mxu0 0
        %1314 = vmatprep.subr.bf16.mxu0 0
        %1315 = vmatpush1.bf16.xpose.msra.mxu0 0
        %1316 = vmatprep.mubr.bf16.mxu0 0
        %1317 = vmatmul.mubr.bf16.gmra.mrb[0].mxu0 %v1279
        %v1318 = vpop.f32.mrb[0].mxu0
        %v1319 = vadd.f32 %v1024, %v1318
        %v1320 = vpop.f32.mrb[0].mxu0
        %v1321 = vpop.f32.mrb[0].mxu0
        %v1322 = vpop.f32.mrb[0].mxu0
        %1323 = vdwg.mxu0
        %v1324 = vsel %vm1098, %v1319, -inf
        %1325 = vmax.xlane.f32.xlu0 %v1324
        %v1326 = vpop.xlane.xlu0 %1325
        %v1327 = vsub.f32 %v1319, %v1326
        %v1328 = vmul.f32 %v1327, 1.442695
        %v1329 = vpow.pop %v1328
        %v1330 = vsel %vm1098, %v1329, 0.0
        %1331 = vadd.xlane.f32.xlu0 %v1330
        %v1332 = vpop.xlane.xlu0 %1331
        %v1333 = vrcp.pop %v1332
        %v1334 = vmul.f32 %v1329, %v1333
        %s1335 = scalar_lea.vmem %s986, 8 [#allocation9]
        %1336 = vst.msk [vmem:[%s1335] sm:$0xff] %vm1098, %v1334
        %v1337 = vpack.c.bf16 %v1334, %v1334
        %v1339 = vsel %vm1098, %v1337, 0
        %v1342 = vsel %vm1161, %v1276, 0
        %1344 = vmatprep.subr.bf16.mxu0 0
        %1345 = vmatpush1.bf16.msra.mxu0 %v1342
        %1346 = vmatprep.subr.bf16.mxu0 0
        %1347 = vmatpush1.bf16.msra.mxu0 0
        %1348 = vmatprep.subr.bf16.mxu0 0
        %1349 = vmatpush1.bf16.msra.mxu0 0
        %1350 = vmatprep.subr.bf16.mxu0 0
        %1351 = vmatpush1.bf16.msra.mxu0 0
        %1352 = vmatprep.subr.bf16.mxu0 0
        %1353 = vmatpush1.bf16.msra.mxu0 0
        %1354 = vmatprep.subr.bf16.mxu0 0
        %1355 = vmatpush1.bf16.msra.mxu0 0
        %1356 = vmatprep.subr.bf16.mxu0 0
        %1357 = vmatpush1.bf16.msra.mxu0 0
        %1358 = vmatprep.subr.bf16.mxu0 0
        %1359 = vmatpush1.bf16.msra.mxu0 0
        %1360 = vmatprep.subr.bf16.mxu0 0
        %1361 = vmatpush1.bf16.msra.mxu0 0
        %1362 = vmatprep.subr.bf16.mxu0 0
        %1363 = vmatpush1.bf16.msra.mxu0 0
        %1364 = vmatprep.subr.bf16.mxu0 0
        %1365 = vmatpush1.bf16.msra.mxu0 0
        %1366 = vmatprep.subr.bf16.mxu0 0
        %1367 = vmatpush1.bf16.msra.mxu0 0
        %1368 = vmatprep.subr.bf16.mxu0 0
        %1369 = vmatpush1.bf16.msra.mxu0 0
        %1370 = vmatprep.subr.bf16.mxu0 0
        %1371 = vmatpush1.bf16.msra.mxu0 0
        %1372 = vmatprep.subr.bf16.mxu0 0
        %1373 = vmatpush1.bf16.msra.mxu0 0
        %1374 = vmatprep.subr.bf16.mxu0 0
        %1375 = vmatpush1.bf16.msra.mxu0 0
        %1376 = vmatprep.mubr.bf16.mxu0 0
        %1377 = vmatmul.mubr.bf16.gmra.mrb[0].mxu0 %v1339
        %v1378 = vpop.f32.mrb[0].mxu0
        %v1379 = vadd.f32 0.0, %v1378
        %v1380 = vpop.f32.mrb[0].mxu0
        %v1381 = vpop.f32.mrb[0].mxu0
        %v1382 = vpop.f32.mrb[0].mxu0
        %1383 = vdwg.mxu0
        %v1384 = vpack.c.bf16 %v1379, %v1379
        %v1386 = vunpack.c.l.b16 %v1384
        %v1387 = vpack.c.b16 %v1386, %v1386
        %1388 = vrot.lane.b32.xlu0 %v1387, 8
        %v1389 = vpop.permute.xlu0 %1388
        %vm1391 = vcmask 126016
        %1392 = vst.msk [vmem:[#allocation2] sm:$0xf] %vm1391, %v1389
        %s1393 = scalar_lea.vmem %s7, 32
        %v1394 = vld [vmem:[%s1393] sm:$0xf]
        %v1395 = vld [vmem:[%s1393 + $0x4] sm:$0xf]
        %v1396 = vld [vmem:[%s1393 + $0x8] sm:$0xf]
        %v1397 = vld [vmem:[%s1393 + $0xc] sm:$0xf]
        %s1398 = scalar_lea.vmem %s8, 2
        %v1399 = vld [vmem:[%s1398] sm:$0x1]
        %v1401 = vlaneseq
        %v1402 = vshrl.u32 %v1401, 7
        %v1403 = vsub.s32 0, %v1402
        %v1404 = vrot.slane %v1399, %v1403
        %v1410 = vunpack.c.l.b16 %v1394
        %v1411 = vunpack.c.l.b16 %v1395
        %v1412 = vunpack.c.l.b16 %v1396
        %v1413 = vunpack.c.l.b16 %v1397
        %v1414 = vpack.c.b16 %v1411, %v1410
        %v1415 = vpack.c.b16 %v1413, %v1412
        %1418 = vmatprep.subr.bf16.mxu0 0
        %1419 = vmatpush1.bf16.msra.mxu0 %v1414
        %1420 = vmatprep.subr.bf16.mxu0 0
        %1421 = vmatpush1.bf16.msra.mxu0 %v1415
        %1422 = vmatprep.subr.bf16.mxu0 0
        %1423 = vmatpush1.bf16.msra.mxu0 0
        %1424 = vmatprep.subr.bf16.mxu0 0
        %1425 = vmatpush1.bf16.msra.mxu0 0
        %1426 = vmatprep.subr.bf16.mxu0 0
        %1427 = vmatpush1.bf16.msra.mxu0 0
        %1428 = vmatprep.subr.bf16.mxu0 0
        %1429 = vmatpush1.bf16.msra.mxu0 0
        %1430 = vmatprep.subr.bf16.mxu0 0
        %1431 = vmatpush1.bf16.msra.mxu0 0
        %1432 = vmatprep.subr.bf16.mxu0 0
        %1433 = vmatpush1.bf16.msra.mxu0 0
        %1434 = vmatprep.subr.bf16.mxu0 0
        %1435 = vmatpush1.bf16.msra.mxu0 0
        %1436 = vmatprep.subr.bf16.mxu0 0
        %1437 = vmatpush1.bf16.msra.mxu0 0
        %1438 = vmatprep.subr.bf16.mxu0 0
        %1439 = vmatpush1.bf16.msra.mxu0 0
        %1440 = vmatprep.subr.bf16.mxu0 0
        %1441 = vmatpush1.bf16.msra.mxu0 0
        %1442 = vmatprep.subr.bf16.mxu0 0
        %1443 = vmatpush1.bf16.msra.mxu0 0
        %1444 = vmatprep.subr.bf16.mxu0 0
        %1445 = vmatpush1.bf16.msra.mxu0 0
        %1446 = vmatprep.subr.bf16.mxu0 0
        %1447 = vmatpush1.bf16.msra.mxu0 0
        %1448 = vmatprep.subr.bf16.mxu0 0
        %1449 = vmatpush1.bf16.msra.mxu0 0
        %1450 = vmatprep.mubr.bf16.mxu0 0
        %1451 = vmatmul.mubr.bf16.gmra.mrb[0].mxu0 %v1053
        %v1452 = vpop.f32.mrb[0].mxu0
        %v1453 = vadd.f32 %v1404, %v1452
        %v1454 = vpop.f32.mrb[0].mxu0
        %v1455 = vpop.f32.mrb[0].mxu0
        %v1456 = vpop.f32.mrb[0].mxu0
        %1457 = vdwg.mxu0
        %s1458 = scalar_lea.vmem %s998, 8
        %v1459 = vld [vmem:[%s1458] sm:$0xf]
        %s1460 = scalar_lea.vmem %s1003, 8
        %v1461 = vld [vmem:[%s1460] sm:$0xf]
        %v1462 = vpack.c.bf16 %v1453, %v1453
        %v1464 = vsel %vm1098, %v1462, 0
        %v1467 = vsel %vm1098, %v1459, 0
        %1469 = vmatprep.subr.bf16.mxu0 0
        %1470 = vmatpush1.bf16.xpose.msra.mxu0 %v1467
        %1471 = vmatprep.subr.bf16.mxu0 0
        %1472 = vmatpush1.bf16.xpose.msra.mxu0 0
        %1473 = vmatprep.subr.bf16.mxu0 0
        %1474 = vmatpush1.bf16.xpose.msra.mxu0 0
        %1475 = vmatprep.subr.bf16.mxu0 0
        %1476 = vmatpush1.bf16.xpose.msra.mxu0 0
        %1477 = vmatprep.subr.bf16.mxu0 0
        %1478 = vmatpush1.bf16.xpose.msra.mxu0 0
        %1479 = vmatprep.subr.bf16.mxu0 0
        %1480 = vmatpush1.bf16.xpose.msra.mxu0 0
        %1481 = vmatprep.subr.bf16.mxu0 0
        %1482 = vmatpush1.bf16.xpose.msra.mxu0 0
        %1483 = vmatprep.subr.bf16.mxu0 0
        %1484 = vmatpush1.bf16.xpose.msra.mxu0 0
        %1485 = vmatprep.subr.bf16.mxu0 0
        %1486 = vmatpush1.bf16.xpose.msra.mxu0 0
        %1487 = vmatprep.subr.bf16.mxu0 0
        %1488 = vmatpush1.bf16.xpose.msra.mxu0 0
        %1489 = vmatprep.subr.bf16.mxu0 0
        %1490 = vmatpush1.bf16.xpose.msra.mxu0 0
        %1491 = vmatprep.subr.bf16.mxu0 0
        %1492 = vmatpush1.bf16.xpose.msra.mxu0 0
        %1493 = vmatprep.subr.bf16.mxu0 0
        %1494 = vmatpush1.bf16.xpose.msra.mxu0 0
        %1495 = vmatprep.subr.bf16.mxu0 0
        %1496 = vmatpush1.bf16.xpose.msra.mxu0 0
        %1497 = vmatprep.subr.bf16.mxu0 0
        %1498 = vmatpush1.bf16.xpose.msra.mxu0 0
        %1499 = vmatprep.subr.bf16.mxu0 0
        %1500 = vmatpush1.bf16.xpose.msra.mxu0 0
        %1501 = vmatprep.mubr.bf16.mxu0 0
        %1502 = vmatmul.mubr.bf16.gmra.mrb[0].mxu0 %v1464
        %v1503 = vpop.f32.mrb[0].mxu0
        %v1504 = vadd.f32 %v1024, %v1503
        %v1505 = vpop.f32.mrb[0].mxu0
        %v1506 = vpop.f32.mrb[0].mxu0
        %v1507 = vpop.f32.mrb[0].mxu0
        %1508 = vdwg.mxu0
        %v1509 = vsel %vm1098, %v1504, -inf
        %1510 = vmax.xlane.f32.xlu0 %v1509
        %v1511 = vpop.xlane.xlu0 %1510
        %v1512 = vsub.f32 %v1504, %v1511
        %v1513 = vmul.f32 %v1512, 1.442695
        %v1514 = vpow.pop %v1513
        %v1515 = vsel %vm1098, %v1514, 0.0
        %1516 = vadd.xlane.f32.xlu0 %v1515
        %v1517 = vpop.xlane.xlu0 %1516
        %v1518 = vrcp.pop %v1517
        %v1519 = vmul.f32 %v1514, %v1518
        %s1520 = scalar_lea.vmem %s986, 16 [#allocation9]
        %1521 = vst.msk [vmem:[%s1520] sm:$0xff] %vm1098, %v1519
        %v1522 = vpack.c.bf16 %v1519, %v1519
        %v1524 = vsel %vm1098, %v1522, 0
        %v1527 = vsel %vm1161, %v1461, 0
        %1529 = vmatprep.subr.bf16.mxu0 0
        %1530 = vmatpush1.bf16.msra.mxu0 %v1527
        %1531 = vmatprep.subr.bf16.mxu0 0
        %1532 = vmatpush1.bf16.msra.mxu0 0
        %1533 = vmatprep.subr.bf16.mxu0 0
        %1534 = vmatpush1.bf16.msra.mxu0 0
        %1535 = vmatprep.subr.bf16.mxu0 0
        %1536 = vmatpush1.bf16.msra.mxu0 0
        %1537 = vmatprep.subr.bf16.mxu0 0
        %1538 = vmatpush1.bf16.msra.mxu0 0
        %1539 = vmatprep.subr.bf16.mxu0 0
        %1540 = vmatpush1.bf16.msra.mxu0 0
        %1541 = vmatprep.subr.bf16.mxu0 0
        %1542 = vmatpush1.bf16.msra.mxu0 0
        %1543 = vmatprep.subr.bf16.mxu0 0
        %1544 = vmatpush1.bf16.msra.mxu0 0
        %1545 = vmatprep.subr.bf16.mxu0 0
        %1546 = vmatpush1.bf16.msra.mxu0 0
        %1547 = vmatprep.subr.bf16.mxu0 0
        %1548 = vmatpush1.bf16.msra.mxu0 0
        %1549 = vmatprep.subr.bf16.mxu0 0
        %1550 = vmatpush1.bf16.msra.mxu0 0
        %1551 = vmatprep.subr.bf16.mxu0 0
        %1552 = vmatpush1.bf16.msra.mxu0 0
        %1553 = vmatprep.subr.bf16.mxu0 0
        %1554 = vmatpush1.bf16.msra.mxu0 0
        %1555 = vmatprep.subr.bf16.mxu0 0
        %1556 = vmatpush1.bf16.msra.mxu0 0
        %1557 = vmatprep.subr.bf16.mxu0 0
        %1558 = vmatpush1.bf16.msra.mxu0 0
        %1559 = vmatprep.subr.bf16.mxu0 0
        %1560 = vmatpush1.bf16.msra.mxu0 0
        %1561 = vmatprep.mubr.bf16.mxu0 0
        %1562 = vmatmul.mubr.bf16.gmra.mrb[0].mxu0 %v1524
        %v1563 = vpop.f32.mrb[0].mxu0
        %v1564 = vadd.f32 0.0, %v1563
        %v1565 = vpop.f32.mrb[0].mxu0
        %v1566 = vpop.f32.mrb[0].mxu0
        %v1567 = vpop.f32.mrb[0].mxu0
        %1568 = vdwg.mxu0
        %v1569 = vpack.c.bf16 %v1564, %v1564
        %v1571 = vunpack.c.l.b16 %v1569
        %v1572 = vpack.c.b16 %v1571, %v1571
        %1573 = vrot.lane.b32.xlu0 %v1572, 16
        %v1574 = vpop.permute.xlu0 %1573
        %vm1576 = vcmask 191616
        %1577 = vst.msk [vmem:[#allocation2] sm:$0xf] %vm1576, %v1574
        %s1578 = scalar_lea.vmem %s7, 48
        %v1579 = vld [vmem:[%s1578] sm:$0xf]
        %v1580 = vld [vmem:[%s1578 + $0x4] sm:$0xf]
        %v1581 = vld [vmem:[%s1578 + $0x8] sm:$0xf]
        %v1582 = vld [vmem:[%s1578 + $0xc] sm:$0xf]
        %s1583 = scalar_lea.vmem %s8, 3
        %v1584 = vld [vmem:[%s1583] sm:$0x1]
        %v1586 = vlaneseq
        %v1587 = vshrl.u32 %v1586, 7
        %v1588 = vsub.s32 0, %v1587
        %v1589 = vrot.slane %v1584, %v1588
        %v1595 = vunpack.c.l.b16 %v1579
        %v1596 = vunpack.c.l.b16 %v1580
        %v1597 = vunpack.c.l.b16 %v1581
        %v1598 = vunpack.c.l.b16 %v1582
        %v1599 = vpack.c.b16 %v1596, %v1595
        %v1600 = vpack.c.b16 %v1598, %v1597
        %1603 = vmatprep.subr.bf16.mxu0 0
        %1604 = vmatpush1.bf16.msra.mxu0 %v1599
        %1605 = vmatprep.subr.bf16.mxu0 0
        %1606 = vmatpush1.bf16.msra.mxu0 %v1600
        %1607 = vmatprep.subr.bf16.mxu0 0
        %1608 = vmatpush1.bf16.msra.mxu0 0
        %1609 = vmatprep.subr.bf16.mxu0 0
        %1610 = vmatpush1.bf16.msra.mxu0 0
        %1611 = vmatprep.subr.bf16.mxu0 0
        %1612 = vmatpush1.bf16.msra.mxu0 0
        %1613 = vmatprep.subr.bf16.mxu0 0
        %1614 = vmatpush1.bf16.msra.mxu0 0
        %1615 = vmatprep.subr.bf16.mxu0 0
        %1616 = vmatpush1.bf16.msra.mxu0 0
        %1617 = vmatprep.subr.bf16.mxu0 0
        %1618 = vmatpush1.bf16.msra.mxu0 0
        %1619 = vmatprep.subr.bf16.mxu0 0
        %1620 = vmatpush1.bf16.msra.mxu0 0
        %1621 = vmatprep.subr.bf16.mxu0 0
        %1622 = vmatpush1.bf16.msra.mxu0 0
        %1623 = vmatprep.subr.bf16.mxu0 0
        %1624 = vmatpush1.bf16.msra.mxu0 0
        %1625 = vmatprep.subr.bf16.mxu0 0
        %1626 = vmatpush1.bf16.msra.mxu0 0
        %1627 = vmatprep.subr.bf16.mxu0 0
        %1628 = vmatpush1.bf16.msra.mxu0 0
        %1629 = vmatprep.subr.bf16.mxu0 0
        %1630 = vmatpush1.bf16.msra.mxu0 0
        %1631 = vmatprep.subr.bf16.mxu0 0
        %1632 = vmatpush1.bf16.msra.mxu0 0
        %1633 = vmatprep.subr.bf16.mxu0 0
        %1634 = vmatpush1.bf16.msra.mxu0 0
        %1635 = vmatprep.mubr.bf16.mxu0 0
        %1636 = vmatmul.mubr.bf16.gmra.mrb[0].mxu0 %v1053
        %v1637 = vpop.f32.mrb[0].mxu0
        %v1638 = vadd.f32 %v1589, %v1637
        %v1639 = vpop.f32.mrb[0].mxu0
        %v1640 = vpop.f32.mrb[0].mxu0
        %v1641 = vpop.f32.mrb[0].mxu0
        %1642 = vdwg.mxu0
        %s1643 = scalar_lea.vmem %s998, 12
        %v1644 = vld [vmem:[%s1643] sm:$0xf]
        %s1645 = scalar_lea.vmem %s1003, 12
        %v1646 = vld [vmem:[%s1645] sm:$0xf]
        %v1647 = vpack.c.bf16 %v1638, %v1638
        %v1649 = vsel %vm1098, %v1647, 0
        %v1652 = vsel %vm1098, %v1644, 0
        %1654 = vmatprep.subr.bf16.mxu0 0
        %1655 = vmatpush1.bf16.xpose.msra.mxu0 %v1652
        %1656 = vmatprep.subr.bf16.mxu0 0
        %1657 = vmatpush1.bf16.xpose.msra.mxu0 0
        %1658 = vmatprep.subr.bf16.mxu0 0
        %1659 = vmatpush1.bf16.xpose.msra.mxu0 0
        %1660 = vmatprep.subr.bf16.mxu0 0
        %1661 = vmatpush1.bf16.xpose.msra.mxu0 0
        %1662 = vmatprep.subr.bf16.mxu0 0
        %1663 = vmatpush1.bf16.xpose.msra.mxu0 0
        %1664 = vmatprep.subr.bf16.mxu0 0
        %1665 = vmatpush1.bf16.xpose.msra.mxu0 0
        %1666 = vmatprep.subr.bf16.mxu0 0
        %1667 = vmatpush1.bf16.xpose.msra.mxu0 0
        %1668 = vmatprep.subr.bf16.mxu0 0
        %1669 = vmatpush1.bf16.xpose.msra.mxu0 0
        %1670 = vmatprep.subr.bf16.mxu0 0
        %1671 = vmatpush1.bf16.xpose.msra.mxu0 0
        %1672 = vmatprep.subr.bf16.mxu0 0
        %1673 = vmatpush1.bf16.xpose.msra.mxu0 0
        %1674 = vmatprep.subr.bf16.mxu0 0
        %1675 = vmatpush1.bf16.xpose.msra.mxu0 0
        %1676 = vmatprep.subr.bf16.mxu0 0
        %1677 = vmatpush1.bf16.xpose.msra.mxu0 0
        %1678 = vmatprep.subr.bf16.mxu0 0
        %1679 = vmatpush1.bf16.xpose.msra.mxu0 0
        %1680 = vmatprep.subr.bf16.mxu0 0
        %1681 = vmatpush1.bf16.xpose.msra.mxu0 0
        %1682 = vmatprep.subr.bf16.mxu0 0
        %1683 = vmatpush1.bf16.xpose.msra.mxu0 0
        %1684 = vmatprep.subr.bf16.mxu0 0
        %1685 = vmatpush1.bf16.xpose.msra.mxu0 0
        %1686 = vmatprep.mubr.bf16.mxu0 0
        %1687 = vmatmul.mubr.bf16.gmra.mrb[0].mxu0 %v1649
        %v1688 = vpop.f32.mrb[0].mxu0
        %v1689 = vadd.f32 %v1024, %v1688
        %v1690 = vpop.f32.mrb[0].mxu0
        %v1691 = vpop.f32.mrb[0].mxu0
        %v1692 = vpop.f32.mrb[0].mxu0
        %1693 = vdwg.mxu0
        %v1694 = vsel %vm1098, %v1689, -inf
        %1695 = vmax.xlane.f32.xlu0 %v1694
        %v1696 = vpop.xlane.xlu0 %1695
        %v1697 = vsub.f32 %v1689, %v1696
        %v1698 = vmul.f32 %v1697, 1.442695
        %v1699 = vpow.pop %v1698
        %v1700 = vsel %vm1098, %v1699, 0.0
        %1701 = vadd.xlane.f32.xlu0 %v1700
        %v1702 = vpop.xlane.xlu0 %1701
        %v1703 = vrcp.pop %v1702
        %v1704 = vmul.f32 %v1699, %v1703
        %s1705 = scalar_lea.vmem %s986, 24 [#allocation9]
        %1706 = vst.msk [vmem:[%s1705] sm:$0xff] %vm1098, %v1704
        %v1707 = vpack.c.bf16 %v1704, %v1704
        %v1709 = vsel %vm1098, %v1707, 0
        %v1712 = vsel %vm1161, %v1646, 0
        %1714 = vmatprep.subr.bf16.mxu0 0
        %1715 = vmatpush1.bf16.msra.mxu0 %v1712
        %1716 = vmatprep.subr.bf16.mxu0 0
        %1717 = vmatpush1.bf16.msra.mxu0 0
        %1718 = vmatprep.subr.bf16.mxu0 0
        %1719 = vmatpush1.bf16.msra.mxu0 0
        %1720 = vmatprep.subr.bf16.mxu0 0
        %1721 = vmatpush1.bf16.msra.mxu0 0
        %1722 = vmatprep.subr.bf16.mxu0 0
        %1723 = vmatpush1.bf16.msra.mxu0 0
        %1724 = vmatprep.subr.bf16.mxu0 0
        %1725 = vmatpush1.bf16.msra.mxu0 0
        %1726 = vmatprep.subr.bf16.mxu0 0
        %1727 = vmatpush1.bf16.msra.mxu0 0
        %1728 = vmatprep.subr.bf16.mxu0 0
        %1729 = vmatpush1.bf16.msra.mxu0 0
        %1730 = vmatprep.subr.bf16.mxu0 0
        %1731 = vmatpush1.bf16.msra.mxu0 0
        %1732 = vmatprep.subr.bf16.mxu0 0
        %1733 = vmatpush1.bf16.msra.mxu0 0
        %1734 = vmatprep.subr.bf16.mxu0 0
        %1735 = vmatpush1.bf16.msra.mxu0 0
        %1736 = vmatprep.subr.bf16.mxu0 0
        %1737 = vmatpush1.bf16.msra.mxu0 0
        %1738 = vmatprep.subr.bf16.mxu0 0
        %1739 = vmatpush1.bf16.msra.mxu0 0
        %1740 = vmatprep.subr.bf16.mxu0 0
        %1741 = vmatpush1.bf16.msra.mxu0 0
        %1742 = vmatprep.subr.bf16.mxu0 0
        %1743 = vmatpush1.bf16.msra.mxu0 0
        %1744 = vmatprep.subr.bf16.mxu0 0
        %1745 = vmatpush1.bf16.msra.mxu0 0
        %1746 = vmatprep.mubr.bf16.mxu0 0
        %1747 = vmatmul.mubr.bf16.gmra.mrb[0].mxu0 %v1709
        %v1748 = vpop.f32.mrb[0].mxu0
        %v1749 = vadd.f32 0.0, %v1748
        %v1750 = vpop.f32.mrb[0].mxu0
        %v1751 = vpop.f32.mrb[0].mxu0
        %v1752 = vpop.f32.mrb[0].mxu0
        %1753 = vdwg.mxu0
        %v1754 = vpack.c.bf16 %v1749, %v1749
        %v1756 = vunpack.c.l.b16 %v1754
        %v1757 = vpack.c.b16 %v1756, %v1756
        %1758 = vrot.lane.b32.xlu0 %v1757, 24
        %v1759 = vpop.permute.xlu0 %1758
        %vm1761 = vcmask 257216
        %1762 = vst.msk [vmem:[#allocation2] sm:$0xf] %vm1761, %v1759
        %v1763 = vld [vmem:[#allocation2] sm:$0xf]
        %v1764 = vld [vmem:[%s9] sm:$0xf]
        %v1765 = vld [vmem:[%s9 + $0x4] sm:$0xf]
        %v1766 = vld [vmem:[%s9 + $0x8] sm:$0xf]
        %v1767 = vld [vmem:[%s9 + $0xc] sm:$0xf]
        %v1768 = vld [vmem:[%s10] sm:$0x1]
        %v1770 = vlaneseq
        %v1771 = vshrl.u32 %v1770, 7
        %v1772 = vsub.s32 0, %v1771
        %v1773 = vrot.slane %v1768, %v1772
        %v1779 = vunpack.c.l.b16 %v1764
        %v1780 = vunpack.c.l.b16 %v1765
        %v1781 = vunpack.c.l.b16 %v1766
        %v1782 = vunpack.c.l.b16 %v1767
        %v1783 = vpack.c.b16 %v1780, %v1779
        %v1784 = vpack.c.b16 %v1782, %v1781
        %v1788 = vsel %vm1051, %v1763, 0
        %1790 = vmatprep.subr.bf16.mxu0 0
        %1791 = vmatpush1.bf16.msra.mxu0 %v1783
        %1792 = vmatprep.subr.bf16.mxu0 0
        %1793 = vmatpush1.bf16.msra.mxu0 %v1784
        %1794 = vmatprep.subr.bf16.mxu0 0
        %1795 = vmatpush1.bf16.msra.mxu0 0
        %1796 = vmatprep.subr.bf16.mxu0 0
        %1797 = vmatpush1.bf16.msra.mxu0 0
        %1798 = vmatprep.subr.bf16.mxu0 0
        %1799 = vmatpush1.bf16.msra.mxu0 0
        %1800 = vmatprep.subr.bf16.mxu0 0
        %1801 = vmatpush1.bf16.msra.mxu0 0
        %1802 = vmatprep.subr.bf16.mxu0 0
        %1803 = vmatpush1.bf16.msra.mxu0 0
        %1804 = vmatprep.subr.bf16.mxu0 0
        %1805 = vmatpush1.bf16.msra.mxu0 0
        %1806 = vmatprep.subr.bf16.mxu0 0
        %1807 = vmatpush1.bf16.msra.mxu0 0
        %1808 = vmatprep.subr.bf16.mxu0 0
        %1809 = vmatpush1.bf16.msra.mxu0 0
        %1810 = vmatprep.subr.bf16.mxu0 0
        %1811 = vmatpush1.bf16.msra.mxu0 0
        %1812 = vmatprep.subr.bf16.mxu0 0
        %1813 = vmatpush1.bf16.msra.mxu0 0
        %1814 = vmatprep.subr.bf16.mxu0 0
        %1815 = vmatpush1.bf16.msra.mxu0 0
        %1816 = vmatprep.subr.bf16.mxu0 0
        %1817 = vmatpush1.bf16.msra.mxu0 0
        %1818 = vmatprep.subr.bf16.mxu0 0
        %1819 = vmatpush1.bf16.msra.mxu0 0
        %1820 = vmatprep.subr.bf16.mxu0 0
        %1821 = vmatpush1.bf16.msra.mxu0 0
        %1822 = vmatprep.mubr.bf16.mxu0 0
        %1823 = vmatmul.mubr.bf16.gmra.mrb[0].mxu0 %v1788
        %v1824 = vpop.f32.mrb[0].mxu0
        %v1825 = vadd.f32 %v1773, %v1824
        %v1826 = vpop.f32.mrb[0].mxu0
        %v1827 = vpop.f32.mrb[0].mxu0
        %v1828 = vpop.f32.mrb[0].mxu0
        %1829 = vdwg.mxu0
        %v1830 = vadd.f32 %v1027, %v1825
        %v1831 = vld [vmem:[%s19] sm:$0x1]
        %v1832 = vld [vmem:[%s20] sm:$0x1]
        %v1833 = vsel %vm1051, %v1830, 0.0
        %1834 = vadd.xlane.f32.xlu0 %v1833
        %v1835 = vpop.xlane.xlu0 %1834
        %v1836 = vrcp.pop 32.0
        %v1837 = vmul.f32 %v1835, %v1836
        %v1838 = vsub.f32 %v1830, %v1837
        %v1839 = vmul.f32 %v1838, %v1838
        %v1840 = vsel %vm1051, %v1839, 0.0
        %1841 = vadd.xlane.f32.xlu0 %v1840
        %v1842 = vpop.xlane.xlu0 %1841
        %v1843 = vmul.f32 %v1842, %v1836
        %v1844 = vadd.f32 %v1843, 1e-05
        %v1845 = vrsqrt.pop %v1844
        %v1846 = vmul.f32 %v1838, %v1845
        %v1848 = vlaneseq
        %v1849 = vshrl.u32 %v1848, 7
        %v1850 = vsub.s32 0, %v1849
        %v1851 = vrot.slane %v1831, %v1850
        %v1853 = vmul.f32 %v1846, %v1851
        %v1855 = vlaneseq
        %v1856 = vshrl.u32 %v1855, 7
        %v1857 = vsub.s32 0, %v1856
        %v1858 = vrot.slane %v1832, %v1857
        %v1860 = vadd.f32 %v1853, %v1858
        %v1861 = vpack.c.bf16 %v1860, %v1860
        %v1862 = vld [vmem:[%s11] sm:$0xf]
        %v1863 = vld [vmem:[%s11 + $0x4] sm:$0xf]
        %v1864 = vld [vmem:[%s11 + $0x8] sm:$0xf]
        %v1865 = vld [vmem:[%s11 + $0xc] sm:$0xf]
        %v1866 = vld [vmem:[%s12] sm:$0x1]
        %v1868 = vlaneseq
        %v1869 = vshrl.u32 %v1868, 7
        %v1870 = vsub.s32 0, %v1869
        %v1871 = vrot.slane %v1866, %v1870
        %v1877 = vunpack.c.l.b16 %v1862
        %v1878 = vunpack.c.l.b16 %v1863
        %v1879 = vunpack.c.l.b16 %v1864
        %v1880 = vunpack.c.l.b16 %v1865
        %v1881 = vpack.c.b16 %v1878, %v1877
        %v1882 = vpack.c.b16 %v1880, %v1879
        %v1886 = vsel %vm1051, %v1861, 0
        %1888 = vmatprep.subr.bf16.mxu0 0
        %1889 = vmatpush1.bf16.msra.mxu0 %v1881
        %1890 = vmatprep.subr.bf16.mxu0 0
        %1891 = vmatpush1.bf16.msra.mxu0 %v1882
        %1892 = vmatprep.subr.bf16.mxu0 0
        %1893 = vmatpush1.bf16.msra.mxu0 0
        %1894 = vmatprep.subr.bf16.mxu0 0
        %1895 = vmatpush1.bf16.msra.mxu0 0
        %1896 = vmatprep.subr.bf16.mxu0 0
        %1897 = vmatpush1.bf16.msra.mxu0 0
        %1898 = vmatprep.subr.bf16.mxu0 0
        %1899 = vmatpush1.bf16.msra.mxu0 0
        %1900 = vmatprep.subr.bf16.mxu0 0
        %1901 = vmatpush1.bf16.msra.mxu0 0
        %1902 = vmatprep.subr.bf16.mxu0 0
        %1903 = vmatpush1.bf16.msra.mxu0 0
        %1904 = vmatprep.subr.bf16.mxu0 0
        %1905 = vmatpush1.bf16.msra.mxu0 0
        %1906 = vmatprep.subr.bf16.mxu0 0
        %1907 = vmatpush1.bf16.msra.mxu0 0
        %1908 = vmatprep.subr.bf16.mxu0 0
        %1909 = vmatpush1.bf16.msra.mxu0 0
        %1910 = vmatprep.subr.bf16.mxu0 0
        %1911 = vmatpush1.bf16.msra.mxu0 0
        %1912 = vmatprep.subr.bf16.mxu0 0
        %1913 = vmatpush1.bf16.msra.mxu0 0
        %1914 = vmatprep.subr.bf16.mxu0 0
        %1915 = vmatpush1.bf16.msra.mxu0 0
        %1916 = vmatprep.subr.bf16.mxu0 0
        %1917 = vmatpush1.bf16.msra.mxu0 0
        %1918 = vmatprep.subr.bf16.mxu0 0
        %1919 = vmatpush1.bf16.msra.mxu0 0
        %1920 = vmatprep.mubr.bf16.mxu0 0
        %1921 = vmatmul.mubr.bf16.gmra.mrb[0].mxu0 %v1886
        %v1922 = vpop.f32.mrb[0].mxu0
        %v1923 = vadd.f32 %v1871, %v1922
        %v1924 = vpop.f32.mrb[0].mxu0
        %v1925 = vpop.f32.mrb[0].mxu0
        %v1926 = vpop.f32.mrb[0].mxu0
        %1927 = vdwg.mxu0
        %v1928 = vld [vmem:[%s1008] sm:$0xf]
        %v1929 = vld [vmem:[%s1013] sm:$0xf]
        %v1930 = vpack.c.bf16 %v1923, %v1923
        %v1932 = vsel %vm1098, %v1930, 0
        %v1935 = vsel %vm1098, %v1928, 0
        %1937 = vmatprep.subr.bf16.mxu0 0
        %1938 = vmatpush1.bf16.xpose.msra.mxu0 %v1935
        %1939 = vmatprep.subr.bf16.mxu0 0
        %1940 = vmatpush1.bf16.xpose.msra.mxu0 0
        %1941 = vmatprep.subr.bf16.mxu0 0
        %1942 = vmatpush1.bf16.xpose.msra.mxu0 0
        %1943 = vmatprep.subr.bf16.mxu0 0
        %1944 = vmatpush1.bf16.xpose.msra.mxu0 0
        %1945 = vmatprep.subr.bf16.mxu0 0
        %1946 = vmatpush1.bf16.xpose.msra.mxu0 0
        %1947 = vmatprep.subr.bf16.mxu0 0
        %1948 = vmatpush1.bf16.xpose.msra.mxu0 0
        %1949 = vmatprep.subr.bf16.mxu0 0
        %1950 = vmatpush1.bf16.xpose.msra.mxu0 0
        %1951 = vmatprep.subr.bf16.mxu0 0
        %1952 = vmatpush1.bf16.xpose.msra.mxu0 0
        %1953 = vmatprep.subr.bf16.mxu0 0
        %1954 = vmatpush1.bf16.xpose.msra.mxu0 0
        %1955 = vmatprep.subr.bf16.mxu0 0
        %1956 = vmatpush1.bf16.xpose.msra.mxu0 0
        %1957 = vmatprep.subr.bf16.mxu0 0
        %1958 = vmatpush1.bf16.xpose.msra.mxu0 0
        %1959 = vmatprep.subr.bf16.mxu0 0
        %1960 = vmatpush1.bf16.xpose.msra.mxu0 0
        %1961 = vmatprep.subr.bf16.mxu0 0
        %1962 = vmatpush1.bf16.xpose.msra.mxu0 0
        %1963 = vmatprep.subr.bf16.mxu0 0
        %1964 = vmatpush1.bf16.xpose.msra.mxu0 0
        %1965 = vmatprep.subr.bf16.mxu0 0
        %1966 = vmatpush1.bf16.xpose.msra.mxu0 0
        %1967 = vmatprep.subr.bf16.mxu0 0
        %1968 = vmatpush1.bf16.xpose.msra.mxu0 0
        %1969 = vmatprep.mubr.bf16.mxu0 0
        %1970 = vmatmul.mubr.bf16.gmra.mrb[0].mxu0 %v1932
        %v1971 = vpop.f32.mrb[0].mxu0
        %v1972 = vadd.f32 %v1026, %v1971
        %v1973 = vpop.f32.mrb[0].mxu0
        %v1974 = vpop.f32.mrb[0].mxu0
        %v1975 = vpop.f32.mrb[0].mxu0
        %1976 = vdwg.mxu0
        %v1977 = vsel %vm1098, %v1972, -inf
        %1978 = vmax.xlane.f32.xlu0 %v1977
        %v1979 = vpop.xlane.xlu0 %1978
        %v1980 = vsub.f32 %v1972, %v1979
        %v1981 = vmul.f32 %v1980, 1.442695
        %v1982 = vpow.pop %v1981
        %v1983 = vsel %vm1098, %v1982, 0.0
        %1984 = vadd.xlane.f32.xlu0 %v1983
        %v1985 = vpop.xlane.xlu0 %1984
        %v1986 = vrcp.pop %v1985
        %v1987 = vmul.f32 %v1982, %v1986
        %1988 = vst.msk [vmem:[%s993] sm:$0xff] %vm1098, %v1987
        %v1989 = vpack.c.bf16 %v1987, %v1987
        %v1991 = vsel %vm1098, %v1989, 0
        %v1994 = vsel %vm1161, %v1929, 0
        %1996 = vmatprep.subr.bf16.mxu0 0
        %1997 = vmatpush1.bf16.msra.mxu0 %v1994
        %1998 = vmatprep.subr.bf16.mxu0 0
        %1999 = vmatpush1.bf16.msra.mxu0 0
        %2000 = vmatprep.subr.bf16.mxu0 0
        %2001 = vmatpush1.bf16.msra.mxu0 0
        %2002 = vmatprep.subr.bf16.mxu0 0
        %2003 = vmatpush1.bf16.msra.mxu0 0
        %2004 = vmatprep.subr.bf16.mxu0 0
        %2005 = vmatpush1.bf16.msra.mxu0 0
        %2006 = vmatprep.subr.bf16.mxu0 0
        %2007 = vmatpush1.bf16.msra.mxu0 0
        %2008 = vmatprep.subr.bf16.mxu0 0
        %2009 = vmatpush1.bf16.msra.mxu0 0
        %2010 = vmatprep.subr.bf16.mxu0 0
        %2011 = vmatpush1.bf16.msra.mxu0 0
        %2012 = vmatprep.subr.bf16.mxu0 0
        %2013 = vmatpush1.bf16.msra.mxu0 0
        %2014 = vmatprep.subr.bf16.mxu0 0
        %2015 = vmatpush1.bf16.msra.mxu0 0
        %2016 = vmatprep.subr.bf16.mxu0 0
        %2017 = vmatpush1.bf16.msra.mxu0 0
        %2018 = vmatprep.subr.bf16.mxu0 0
        %2019 = vmatpush1.bf16.msra.mxu0 0
        %2020 = vmatprep.subr.bf16.mxu0 0
        %2021 = vmatpush1.bf16.msra.mxu0 0
        %2022 = vmatprep.subr.bf16.mxu0 0
        %2023 = vmatpush1.bf16.msra.mxu0 0
        %2024 = vmatprep.subr.bf16.mxu0 0
        %2025 = vmatpush1.bf16.msra.mxu0 0
        %2026 = vmatprep.subr.bf16.mxu0 0
        %2027 = vmatpush1.bf16.msra.mxu0 0
        %2028 = vmatprep.mubr.bf16.mxu0 0
        %2029 = vmatmul.mubr.bf16.gmra.mrb[0].mxu0 %v1991
        %v2030 = vpop.f32.mrb[0].mxu0
        %v2031 = vadd.f32 0.0, %v2030
        %v2032 = vpop.f32.mrb[0].mxu0
        %v2033 = vpop.f32.mrb[0].mxu0
        %v2034 = vpop.f32.mrb[0].mxu0
        %2035 = vdwg.mxu0
        %v2036 = vpack.c.bf16 %v2031, %v2031
        %2037 = vst.msk [vmem:[#allocation2] sm:$0xf] %vm1206, %v2036
        %s2038 = scalar_lea.vmem %s11, 16
        %v2039 = vld [vmem:[%s2038] sm:$0xf]
        %v2040 = vld [vmem:[%s2038 + $0x4] sm:$0xf]
        %v2041 = vld [vmem:[%s2038 + $0x8] sm:$0xf]
        %v2042 = vld [vmem:[%s2038 + $0xc] sm:$0xf]
        %s2043 = scalar_lea.vmem %s12, 1
        %v2044 = vld [vmem:[%s2043] sm:$0x1]
        %v2046 = vlaneseq
        %v2047 = vshrl.u32 %v2046, 7
        %v2048 = vsub.s32 0, %v2047
        %v2049 = vrot.slane %v2044, %v2048
        %v2055 = vunpack.c.l.b16 %v2039
        %v2056 = vunpack.c.l.b16 %v2040
        %v2057 = vunpack.c.l.b16 %v2041
        %v2058 = vunpack.c.l.b16 %v2042
        %v2059 = vpack.c.b16 %v2056, %v2055
        %v2060 = vpack.c.b16 %v2058, %v2057
        %2063 = vmatprep.subr.bf16.mxu0 0
        %2064 = vmatpush1.bf16.msra.mxu0 %v2059
        %2065 = vmatprep.subr.bf16.mxu0 0
        %2066 = vmatpush1.bf16.msra.mxu0 %v2060
        %2067 = vmatprep.subr.bf16.mxu0 0
        %2068 = vmatpush1.bf16.msra.mxu0 0
        %2069 = vmatprep.subr.bf16.mxu0 0
        %2070 = vmatpush1.bf16.msra.mxu0 0
        %2071 = vmatprep.subr.bf16.mxu0 0
        %2072 = vmatpush1.bf16.msra.mxu0 0
        %2073 = vmatprep.subr.bf16.mxu0 0
        %2074 = vmatpush1.bf16.msra.mxu0 0
        %2075 = vmatprep.subr.bf16.mxu0 0
        %2076 = vmatpush1.bf16.msra.mxu0 0
        %2077 = vmatprep.subr.bf16.mxu0 0
        %2078 = vmatpush1.bf16.msra.mxu0 0
        %2079 = vmatprep.subr.bf16.mxu0 0
        %2080 = vmatpush1.bf16.msra.mxu0 0
        %2081 = vmatprep.subr.bf16.mxu0 0
        %2082 = vmatpush1.bf16.msra.mxu0 0
        %2083 = vmatprep.subr.bf16.mxu0 0
        %2084 = vmatpush1.bf16.msra.mxu0 0
        %2085 = vmatprep.subr.bf16.mxu0 0
        %2086 = vmatpush1.bf16.msra.mxu0 0
        %2087 = vmatprep.subr.bf16.mxu0 0
        %2088 = vmatpush1.bf16.msra.mxu0 0
        %2089 = vmatprep.subr.bf16.mxu0 0
        %2090 = vmatpush1.bf16.msra.mxu0 0
        %2091 = vmatprep.subr.bf16.mxu0 0
        %2092 = vmatpush1.bf16.msra.mxu0 0
        %2093 = vmatprep.subr.bf16.mxu0 0
        %2094 = vmatpush1.bf16.msra.mxu0 0
        %2095 = vmatprep.mubr.bf16.mxu0 0
        %2096 = vmatmul.mubr.bf16.gmra.mrb[0].mxu0 %v1886
        %v2097 = vpop.f32.mrb[0].mxu0
        %v2098 = vadd.f32 %v2049, %v2097
        %v2099 = vpop.f32.mrb[0].mxu0
        %v2100 = vpop.f32.mrb[0].mxu0
        %v2101 = vpop.f32.mrb[0].mxu0
        %2102 = vdwg.mxu0
        %s2103 = scalar_lea.vmem %s1008, 4
        %v2104 = vld [vmem:[%s2103] sm:$0xf]
        %s2105 = scalar_lea.vmem %s1013, 4
        %v2106 = vld [vmem:[%s2105] sm:$0xf]
        %v2107 = vpack.c.bf16 %v2098, %v2098
        %v2109 = vsel %vm1098, %v2107, 0
        %v2112 = vsel %vm1098, %v2104, 0
        %2114 = vmatprep.subr.bf16.mxu0 0
        %2115 = vmatpush1.bf16.xpose.msra.mxu0 %v2112
        %2116 = vmatprep.subr.bf16.mxu0 0
        %2117 = vmatpush1.bf16.xpose.msra.mxu0 0
        %2118 = vmatprep.subr.bf16.mxu0 0
        %2119 = vmatpush1.bf16.xpose.msra.mxu0 0
        %2120 = vmatprep.subr.bf16.mxu0 0
        %2121 = vmatpush1.bf16.xpose.msra.mxu0 0
        %2122 = vmatprep.subr.bf16.mxu0 0
        %2123 = vmatpush1.bf16.xpose.msra.mxu0 0
        %2124 = vmatprep.subr.bf16.mxu0 0
        %2125 = vmatpush1.bf16.xpose.msra.mxu0 0
        %2126 = vmatprep.subr.bf16.mxu0 0
        %2127 = vmatpush1.bf16.xpose.msra.mxu0 0
        %2128 = vmatprep.subr.bf16.mxu0 0
        %2129 = vmatpush1.bf16.xpose.msra.mxu0 0
        %2130 = vmatprep.subr.bf16.mxu0 0
        %2131 = vmatpush1.bf16.xpose.msra.mxu0 0
        %2132 = vmatprep.subr.bf16.mxu0 0
        %2133 = vmatpush1.bf16.xpose.msra.mxu0 0
        %2134 = vmatprep.subr.bf16.mxu0 0
        %2135 = vmatpush1.bf16.xpose.msra.mxu0 0
        %2136 = vmatprep.subr.bf16.mxu0 0
        %2137 = vmatpush1.bf16.xpose.msra.mxu0 0
        %2138 = vmatprep.subr.bf16.mxu0 0
        %2139 = vmatpush1.bf16.xpose.msra.mxu0 0
        %2140 = vmatprep.subr.bf16.mxu0 0
        %2141 = vmatpush1.bf16.xpose.msra.mxu0 0
        %2142 = vmatprep.subr.bf16.mxu0 0
        %2143 = vmatpush1.bf16.xpose.msra.mxu0 0
        %2144 = vmatprep.subr.bf16.mxu0 0
        %2145 = vmatpush1.bf16.xpose.msra.mxu0 0
        %2146 = vmatprep.mubr.bf16.mxu0 0
        %2147 = vmatmul.mubr.bf16.gmra.mrb[0].mxu0 %v2109
        %v2148 = vpop.f32.mrb[0].mxu0
        %v2149 = vadd.f32 %v1026, %v2148
        %v2150 = vpop.f32.mrb[0].mxu0
        %v2151 = vpop.f32.mrb[0].mxu0
        %v2152 = vpop.f32.mrb[0].mxu0
        %2153 = vdwg.mxu0
        %v2154 = vsel %vm1098, %v2149, -inf
        %2155 = vmax.xlane.f32.xlu0 %v2154
        %v2156 = vpop.xlane.xlu0 %2155
        %v2157 = vsub.f32 %v2149, %v2156
        %v2158 = vmul.f32 %v2157, 1.442695
        %v2159 = vpow.pop %v2158
        %v2160 = vsel %vm1098, %v2159, 0.0
        %2161 = vadd.xlane.f32.xlu0 %v2160
        %v2162 = vpop.xlane.xlu0 %2161
        %v2163 = vrcp.pop %v2162
        %v2164 = vmul.f32 %v2159, %v2163
        %s2165 = scalar_lea.vmem %s993, 8 [#allocation11]
        %2166 = vst.msk [vmem:[%s2165] sm:$0xff] %vm1098, %v2164
        %v2167 = vpack.c.bf16 %v2164, %v2164
        %v2169 = vsel %vm1098, %v2167, 0
        %v2172 = vsel %vm1161, %v2106, 0
        %2174 = vmatprep.subr.bf16.mxu0 0
        %2175 = vmatpush1.bf16.msra.mxu0 %v2172
        %2176 = vmatprep.subr.bf16.mxu0 0
        %2177 = vmatpush1.bf16.msra.mxu0 0
        %2178 = vmatprep.subr.bf16.mxu0 0
        %2179 = vmatpush1.bf16.msra.mxu0 0
        %2180 = vmatprep.subr.bf16.mxu0 0
        %2181 = vmatpush1.bf16.msra.mxu0 0
        %2182 = vmatprep.subr.bf16.mxu0 0
        %2183 = vmatpush1.bf16.msra.mxu0 0
        %2184 = vmatprep.subr.bf16.mxu0 0
        %2185 = vmatpush1.bf16.msra.mxu0 0
        %2186 = vmatprep.subr.bf16.mxu0 0
        %2187 = vmatpush1.bf16.msra.mxu0 0
        %2188 = vmatprep.subr.bf16.mxu0 0
        %2189 = vmatpush1.bf16.msra.mxu0 0
        %2190 = vmatprep.subr.bf16.mxu0 0
        %2191 = vmatpush1.bf16.msra.mxu0 0
        %2192 = vmatprep.subr.bf16.mxu0 0
        %2193 = vmatpush1.bf16.msra.mxu0 0
        %2194 = vmatprep.subr.bf16.mxu0 0
        %2195 = vmatpush1.bf16.msra.mxu0 0
        %2196 = vmatprep.subr.bf16.mxu0 0
        %2197 = vmatpush1.bf16.msra.mxu0 0
        %2198 = vmatprep.subr.bf16.mxu0 0
        %2199 = vmatpush1.bf16.msra.mxu0 0
        %2200 = vmatprep.subr.bf16.mxu0 0
        %2201 = vmatpush1.bf16.msra.mxu0 0
        %2202 = vmatprep.subr.bf16.mxu0 0
        %2203 = vmatpush1.bf16.msra.mxu0 0
        %2204 = vmatprep.subr.bf16.mxu0 0
        %2205 = vmatpush1.bf16.msra.mxu0 0
        %2206 = vmatprep.mubr.bf16.mxu0 0
        %2207 = vmatmul.mubr.bf16.gmra.mrb[0].mxu0 %v2169
        %v2208 = vpop.f32.mrb[0].mxu0
        %v2209 = vadd.f32 0.0, %v2208
        %v2210 = vpop.f32.mrb[0].mxu0
        %v2211 = vpop.f32.mrb[0].mxu0
        %v2212 = vpop.f32.mrb[0].mxu0
        %2213 = vdwg.mxu0
        %v2214 = vpack.c.bf16 %v2209, %v2209
        %v2216 = vunpack.c.l.b16 %v2214
        %v2217 = vpack.c.b16 %v2216, %v2216
        %2218 = vrot.lane.b32.xlu0 %v2217, 8
        %v2219 = vpop.permute.xlu0 %2218
        %2221 = vst.msk [vmem:[#allocation2] sm:$0xf] %vm1391, %v2219
        %s2222 = scalar_lea.vmem %s11, 32
        %v2223 = vld [vmem:[%s2222] sm:$0xf]
        %v2224 = vld [vmem:[%s2222 + $0x4] sm:$0xf]
        %v2225 = vld [vmem:[%s2222 + $0x8] sm:$0xf]
        %v2226 = vld [vmem:[%s2222 + $0xc] sm:$0xf]
        %s2227 = scalar_lea.vmem %s12, 2
        %v2228 = vld [vmem:[%s2227] sm:$0x1]
        %v2230 = vlaneseq
        %v2231 = vshrl.u32 %v2230, 7
        %v2232 = vsub.s32 0, %v2231
        %v2233 = vrot.slane %v2228, %v2232
        %v2239 = vunpack.c.l.b16 %v2223
        %v2240 = vunpack.c.l.b16 %v2224
        %v2241 = vunpack.c.l.b16 %v2225
        %v2242 = vunpack.c.l.b16 %v2226
        %v2243 = vpack.c.b16 %v2240, %v2239
        %v2244 = vpack.c.b16 %v2242, %v2241
        %2247 = vmatprep.subr.bf16.mxu0 0
        %2248 = vmatpush1.bf16.msra.mxu0 %v2243
        %2249 = vmatprep.subr.bf16.mxu0 0
        %2250 = vmatpush1.bf16.msra.mxu0 %v2244
        %2251 = vmatprep.subr.bf16.mxu0 0
        %2252 = vmatpush1.bf16.msra.mxu0 0
        %2253 = vmatprep.subr.bf16.mxu0 0
        %2254 = vmatpush1.bf16.msra.mxu0 0
        %2255 = vmatprep.subr.bf16.mxu0 0
        %2256 = vmatpush1.bf16.msra.mxu0 0
        %2257 = vmatprep.subr.bf16.mxu0 0
        %2258 = vmatpush1.bf16.msra.mxu0 0
        %2259 = vmatprep.subr.bf16.mxu0 0
        %2260 = vmatpush1.bf16.msra.mxu0 0
        %2261 = vmatprep.subr.bf16.mxu0 0
        %2262 = vmatpush1.bf16.msra.mxu0 0
        %2263 = vmatprep.subr.bf16.mxu0 0
        %2264 = vmatpush1.bf16.msra.mxu0 0
        %2265 = vmatprep.subr.bf16.mxu0 0
        %2266 = vmatpush1.bf16.msra.mxu0 0
        %2267 = vmatprep.subr.bf16.mxu0 0
        %2268 = vmatpush1.bf16.msra.mxu0 0
        %2269 = vmatprep.subr.bf16.mxu0 0
        %2270 = vmatpush1.bf16.msra.mxu0 0
        %2271 = vmatprep.subr.bf16.mxu0 0
        %2272 = vmatpush1.bf16.msra.mxu0 0
        %2273 = vmatprep.subr.bf16.mxu0 0
        %2274 = vmatpush1.bf16.msra.mxu0 0
        %2275 = vmatprep.subr.bf16.mxu0 0
        %2276 = vmatpush1.bf16.msra.mxu0 0
        %2277 = vmatprep.subr.bf16.mxu0 0
        %2278 = vmatpush1.bf16.msra.mxu0 0
        %2279 = vmatprep.mubr.bf16.mxu0 0
        %2280 = vmatmul.mubr.bf16.gmra.mrb[0].mxu0 %v1886
        %v2281 = vpop.f32.mrb[0].mxu0
        %v2282 = vadd.f32 %v2233, %v2281
        %v2283 = vpop.f32.mrb[0].mxu0
        %v2284 = vpop.f32.mrb[0].mxu0
        %v2285 = vpop.f32.mrb[0].mxu0
        %2286 = vdwg.mxu0
        %s2287 = scalar_lea.vmem %s1008, 8
        %v2288 = vld [vmem:[%s2287] sm:$0xf]
        %s2289 = scalar_lea.vmem %s1013, 8
        %v2290 = vld [vmem:[%s2289] sm:$0xf]
        %v2291 = vpack.c.bf16 %v2282, %v2282
        %v2293 = vsel %vm1098, %v2291, 0
        %v2296 = vsel %vm1098, %v2288, 0
        %2298 = vmatprep.subr.bf16.mxu0 0
        %2299 = vmatpush1.bf16.xpose.msra.mxu0 %v2296
        %2300 = vmatprep.subr.bf16.mxu0 0
        %2301 = vmatpush1.bf16.xpose.msra.mxu0 0
        %2302 = vmatprep.subr.bf16.mxu0 0
        %2303 = vmatpush1.bf16.xpose.msra.mxu0 0
        %2304 = vmatprep.subr.bf16.mxu0 0
        %2305 = vmatpush1.bf16.xpose.msra.mxu0 0
        %2306 = vmatprep.subr.bf16.mxu0 0
        %2307 = vmatpush1.bf16.xpose.msra.mxu0 0
        %2308 = vmatprep.subr.bf16.mxu0 0
        %2309 = vmatpush1.bf16.xpose.msra.mxu0 0
        %2310 = vmatprep.subr.bf16.mxu0 0
        %2311 = vmatpush1.bf16.xpose.msra.mxu0 0
        %2312 = vmatprep.subr.bf16.mxu0 0
        %2313 = vmatpush1.bf16.xpose.msra.mxu0 0
        %2314 = vmatprep.subr.bf16.mxu0 0
        %2315 = vmatpush1.bf16.xpose.msra.mxu0 0
        %2316 = vmatprep.subr.bf16.mxu0 0
        %2317 = vmatpush1.bf16.xpose.msra.mxu0 0
        %2318 = vmatprep.subr.bf16.mxu0 0
        %2319 = vmatpush1.bf16.xpose.msra.mxu0 0
        %2320 = vmatprep.subr.bf16.mxu0 0
        %2321 = vmatpush1.bf16.xpose.msra.mxu0 0
        %2322 = vmatprep.subr.bf16.mxu0 0
        %2323 = vmatpush1.bf16.xpose.msra.mxu0 0
        %2324 = vmatprep.subr.bf16.mxu0 0
        %2325 = vmatpush1.bf16.xpose.msra.mxu0 0
        %2326 = vmatprep.subr.bf16.mxu0 0
        %2327 = vmatpush1.bf16.xpose.msra.mxu0 0
        %2328 = vmatprep.subr.bf16.mxu0 0
        %2329 = vmatpush1.bf16.xpose.msra.mxu0 0
        %2330 = vmatprep.mubr.bf16.mxu0 0
        %2331 = vmatmul.mubr.bf16.gmra.mrb[0].mxu0 %v2293
        %v2332 = vpop.f32.mrb[0].mxu0
        %v2333 = vadd.f32 %v1026, %v2332
        %v2334 = vpop.f32.mrb[0].mxu0
        %v2335 = vpop.f32.mrb[0].mxu0
        %v2336 = vpop.f32.mrb[0].mxu0
        %2337 = vdwg.mxu0
        %v2338 = vsel %vm1098, %v2333, -inf
        %2339 = vmax.xlane.f32.xlu0 %v2338
        %v2340 = vpop.xlane.xlu0 %2339
        %v2341 = vsub.f32 %v2333, %v2340
        %v2342 = vmul.f32 %v2341, 1.442695
        %v2343 = vpow.pop %v2342
        %v2344 = vsel %vm1098, %v2343, 0.0
        %2345 = vadd.xlane.f32.xlu0 %v2344
        %v2346 = vpop.xlane.xlu0 %2345
        %v2347 = vrcp.pop %v2346
        %v2348 = vmul.f32 %v2343, %v2347
        %s2349 = scalar_lea.vmem %s993, 16 [#allocation11]
        %2350 = vst.msk [vmem:[%s2349] sm:$0xff] %vm1098, %v2348
        %v2351 = vpack.c.bf16 %v2348, %v2348
        %v2353 = vsel %vm1098, %v2351, 0
        %v2356 = vsel %vm1161, %v2290, 0
        %2358 = vmatprep.subr.bf16.mxu0 0
        %2359 = vmatpush1.bf16.msra.mxu0 %v2356
        %2360 = vmatprep.subr.bf16.mxu0 0
        %2361 = vmatpush1.bf16.msra.mxu0 0
        %2362 = vmatprep.subr.bf16.mxu0 0
        %2363 = vmatpush1.bf16.msra.mxu0 0
        %2364 = vmatprep.subr.bf16.mxu0 0
        %2365 = vmatpush1.bf16.msra.mxu0 0
        %2366 = vmatprep.subr.bf16.mxu0 0
        %2367 = vmatpush1.bf16.msra.mxu0 0
        %2368 = vmatprep.subr.bf16.mxu0 0
        %2369 = vmatpush1.bf16.msra.mxu0 0
        %2370 = vmatprep.subr.bf16.mxu0 0
        %2371 = vmatpush1.bf16.msra.mxu0 0
        %2372 = vmatprep.subr.bf16.mxu0 0
        %2373 = vmatpush1.bf16.msra.mxu0 0
        %2374 = vmatprep.subr.bf16.mxu0 0
        %2375 = vmatpush1.bf16.msra.mxu0 0
        %2376 = vmatprep.subr.bf16.mxu0 0
        %2377 = vmatpush1.bf16.msra.mxu0 0
        %2378 = vmatprep.subr.bf16.mxu0 0
        %2379 = vmatpush1.bf16.msra.mxu0 0
        %2380 = vmatprep.subr.bf16.mxu0 0
        %2381 = vmatpush1.bf16.msra.mxu0 0
        %2382 = vmatprep.subr.bf16.mxu0 0
        %2383 = vmatpush1.bf16.msra.mxu0 0
        %2384 = vmatprep.subr.bf16.mxu0 0
        %2385 = vmatpush1.bf16.msra.mxu0 0
        %2386 = vmatprep.subr.bf16.mxu0 0
        %2387 = vmatpush1.bf16.msra.mxu0 0
        %2388 = vmatprep.subr.bf16.mxu0 0
        %2389 = vmatpush1.bf16.msra.mxu0 0
        %2390 = vmatprep.mubr.bf16.mxu0 0
        %2391 = vmatmul.mubr.bf16.gmra.mrb[0].mxu0 %v2353
        %v2392 = vpop.f32.mrb[0].mxu0
        %v2393 = vadd.f32 0.0, %v2392
        %v2394 = vpop.f32.mrb[0].mxu0
        %v2395 = vpop.f32.mrb[0].mxu0
        %v2396 = vpop.f32.mrb[0].mxu0
        %2397 = vdwg.mxu0
        %v2398 = vpack.c.bf16 %v2393, %v2393
        %v2400 = vunpack.c.l.b16 %v2398
        %v2401 = vpack.c.b16 %v2400, %v2400
        %2402 = vrot.lane.b32.xlu0 %v2401, 16
        %v2403 = vpop.permute.xlu0 %2402
        %2405 = vst.msk [vmem:[#allocation2] sm:$0xf] %vm1576, %v2403
        %s2406 = scalar_lea.vmem %s11, 48
        %v2407 = vld [vmem:[%s2406] sm:$0xf]
        %v2408 = vld [vmem:[%s2406 + $0x4] sm:$0xf]
        %v2409 = vld [vmem:[%s2406 + $0x8] sm:$0xf]
        %v2410 = vld [vmem:[%s2406 + $0xc] sm:$0xf]
        %s2411 = scalar_lea.vmem %s12, 3
        %v2412 = vld [vmem:[%s2411] sm:$0x1]
        %v2414 = vlaneseq
        %v2415 = vshrl.u32 %v2414, 7
        %v2416 = vsub.s32 0, %v2415
        %v2417 = vrot.slane %v2412, %v2416
        %v2423 = vunpack.c.l.b16 %v2407
        %v2424 = vunpack.c.l.b16 %v2408
        %v2425 = vunpack.c.l.b16 %v2409
        %v2426 = vunpack.c.l.b16 %v2410
        %v2427 = vpack.c.b16 %v2424, %v2423
        %v2428 = vpack.c.b16 %v2426, %v2425
        %2431 = vmatprep.subr.bf16.mxu0 0
        %2432 = vmatpush1.bf16.msra.mxu0 %v2427
        %2433 = vmatprep.subr.bf16.mxu0 0
        %2434 = vmatpush1.bf16.msra.mxu0 %v2428
        %2435 = vmatprep.subr.bf16.mxu0 0
        %2436 = vmatpush1.bf16.msra.mxu0 0
        %2437 = vmatprep.subr.bf16.mxu0 0
        %2438 = vmatpush1.bf16.msra.mxu0 0
        %2439 = vmatprep.subr.bf16.mxu0 0
        %2440 = vmatpush1.bf16.msra.mxu0 0
        %2441 = vmatprep.subr.bf16.mxu0 0
        %2442 = vmatpush1.bf16.msra.mxu0 0
        %2443 = vmatprep.subr.bf16.mxu0 0
        %2444 = vmatpush1.bf16.msra.mxu0 0
        %2445 = vmatprep.subr.bf16.mxu0 0
        %2446 = vmatpush1.bf16.msra.mxu0 0
        %2447 = vmatprep.subr.bf16.mxu0 0
        %2448 = vmatpush1.bf16.msra.mxu0 0
        %2449 = vmatprep.subr.bf16.mxu0 0
        %2450 = vmatpush1.bf16.msra.mxu0 0
        %2451 = vmatprep.subr.bf16.mxu0 0
        %2452 = vmatpush1.bf16.msra.mxu0 0
        %2453 = vmatprep.subr.bf16.mxu0 0
        %2454 = vmatpush1.bf16.msra.mxu0 0
        %2455 = vmatprep.subr.bf16.mxu0 0
        %2456 = vmatpush1.bf16.msra.mxu0 0
        %2457 = vmatprep.subr.bf16.mxu0 0
        %2458 = vmatpush1.bf16.msra.mxu0 0
        %2459 = vmatprep.subr.bf16.mxu0 0
        %2460 = vmatpush1.bf16.msra.mxu0 0
        %2461 = vmatprep.subr.bf16.mxu0 0
        %2462 = vmatpush1.bf16.msra.mxu0 0
        %2463 = vmatprep.mubr.bf16.mxu0 0
        %2464 = vmatmul.mubr.bf16.gmra.mrb[0].mxu0 %v1886
        %v2465 = vpop.f32.mrb[0].mxu0
        %v2466 = vadd.f32 %v2417, %v2465
        %v2467 = vpop.f32.mrb[0].mxu0
        %v2468 = vpop.f32.mrb[0].mxu0
        %v2469 = vpop.f32.mrb[0].mxu0
        %2470 = vdwg.mxu0
        %s2471 = scalar_lea.vmem %s1008, 12
        %v2472 = vld [vmem:[%s2471] sm:$0xf]
        %s2473 = scalar_lea.vmem %s1013, 12
        %v2474 = vld [vmem:[%s2473] sm:$0xf]
        %v2475 = vpack.c.bf16 %v2466, %v2466
        %v2477 = vsel %vm1098, %v2475, 0
        %v2480 = vsel %vm1098, %v2472, 0
        %2482 = vmatprep.subr.bf16.mxu0 0
        %2483 = vmatpush1.bf16.xpose.msra.mxu0 %v2480
        %2484 = vmatprep.subr.bf16.mxu0 0
        %2485 = vmatpush1.bf16.xpose.msra.mxu0 0
        %2486 = vmatprep.subr.bf16.mxu0 0
        %2487 = vmatpush1.bf16.xpose.msra.mxu0 0
        %2488 = vmatprep.subr.bf16.mxu0 0
        %2489 = vmatpush1.bf16.xpose.msra.mxu0 0
        %2490 = vmatprep.subr.bf16.mxu0 0
        %2491 = vmatpush1.bf16.xpose.msra.mxu0 0
        %2492 = vmatprep.subr.bf16.mxu0 0
        %2493 = vmatpush1.bf16.xpose.msra.mxu0 0
        %2494 = vmatprep.subr.bf16.mxu0 0
        %2495 = vmatpush1.bf16.xpose.msra.mxu0 0
        %2496 = vmatprep.subr.bf16.mxu0 0
        %2497 = vmatpush1.bf16.xpose.msra.mxu0 0
        %2498 = vmatprep.subr.bf16.mxu0 0
        %2499 = vmatpush1.bf16.xpose.msra.mxu0 0
        %2500 = vmatprep.subr.bf16.mxu0 0
        %2501 = vmatpush1.bf16.xpose.msra.mxu0 0
        %2502 = vmatprep.subr.bf16.mxu0 0
        %2503 = vmatpush1.bf16.xpose.msra.mxu0 0
        %2504 = vmatprep.subr.bf16.mxu0 0
        %2505 = vmatpush1.bf16.xpose.msra.mxu0 0
        %2506 = vmatprep.subr.bf16.mxu0 0
        %2507 = vmatpush1.bf16.xpose.msra.mxu0 0
        %2508 = vmatprep.subr.bf16.mxu0 0
        %2509 = vmatpush1.bf16.xpose.msra.mxu0 0
        %2510 = vmatprep.subr.bf16.mxu0 0
        %2511 = vmatpush1.bf16.xpose.msra.mxu0 0
        %2512 = vmatprep.subr.bf16.mxu0 0
        %2513 = vmatpush1.bf16.xpose.msra.mxu0 0
        %2514 = vmatprep.mubr.bf16.mxu0 0
        %2515 = vmatmul.mubr.bf16.gmra.mrb[0].mxu0 %v2477
        %v2516 = vpop.f32.mrb[0].mxu0
        %v2517 = vadd.f32 %v1026, %v2516
        %v2518 = vpop.f32.mrb[0].mxu0
        %v2519 = vpop.f32.mrb[0].mxu0
        %v2520 = vpop.f32.mrb[0].mxu0
        %2521 = vdwg.mxu0
        %v2522 = vsel %vm1098, %v2517, -inf
        %2523 = vmax.xlane.f32.xlu0 %v2522
        %v2524 = vpop.xlane.xlu0 %2523
        %v2525 = vsub.f32 %v2517, %v2524
        %v2526 = vmul.f32 %v2525, 1.442695
        %v2527 = vpow.pop %v2526
        %v2528 = vsel %vm1098, %v2527, 0.0
        %2529 = vadd.xlane.f32.xlu0 %v2528
        %v2530 = vpop.xlane.xlu0 %2529
        %v2531 = vrcp.pop %v2530
        %v2532 = vmul.f32 %v2527, %v2531
        %s2533 = scalar_lea.vmem %s993, 24 [#allocation11]
        %2534 = vst.msk [vmem:[%s2533] sm:$0xff] %vm1098, %v2532
        %v2535 = vpack.c.bf16 %v2532, %v2532
        %v2537 = vsel %vm1098, %v2535, 0
        %v2540 = vsel %vm1161, %v2474, 0
        %2542 = vmatprep.subr.bf16.mxu0 0
        %2543 = vmatpush1.bf16.msra.mxu0 %v2540
        %2544 = vmatprep.subr.bf16.mxu0 0
        %2545 = vmatpush1.bf16.msra.mxu0 0
        %2546 = vmatprep.subr.bf16.mxu0 0
        %2547 = vmatpush1.bf16.msra.mxu0 0
        %2548 = vmatprep.subr.bf16.mxu0 0
        %2549 = vmatpush1.bf16.msra.mxu0 0
        %2550 = vmatprep.subr.bf16.mxu0 0
        %2551 = vmatpush1.bf16.msra.mxu0 0
        %2552 = vmatprep.subr.bf16.mxu0 0
        %2553 = vmatpush1.bf16.msra.mxu0 0
        %2554 = vmatprep.subr.bf16.mxu0 0
        %2555 = vmatpush1.bf16.msra.mxu0 0
        %2556 = vmatprep.subr.bf16.mxu0 0
        %2557 = vmatpush1.bf16.msra.mxu0 0
        %2558 = vmatprep.subr.bf16.mxu0 0
        %2559 = vmatpush1.bf16.msra.mxu0 0
        %2560 = vmatprep.subr.bf16.mxu0 0
        %2561 = vmatpush1.bf16.msra.mxu0 0
        %2562 = vmatprep.subr.bf16.mxu0 0
        %2563 = vmatpush1.bf16.msra.mxu0 0
        %2564 = vmatprep.subr.bf16.mxu0 0
        %2565 = vmatpush1.bf16.msra.mxu0 0
        %2566 = vmatprep.subr.bf16.mxu0 0
        %2567 = vmatpush1.bf16.msra.mxu0 0
        %2568 = vmatprep.subr.bf16.mxu0 0
        %2569 = vmatpush1.bf16.msra.mxu0 0
        %2570 = vmatprep.subr.bf16.mxu0 0
        %2571 = vmatpush1.bf16.msra.mxu0 0
        %2572 = vmatprep.subr.bf16.mxu0 0
        %2573 = vmatpush1.bf16.msra.mxu0 0
        %2574 = vmatprep.mubr.bf16.mxu0 0
        %2575 = vmatmul.mubr.bf16.gmra.mrb[0].mxu0 %v2537
        %v2576 = vpop.f32.mrb[0].mxu0
        %v2577 = vadd.f32 0.0, %v2576
        %v2578 = vpop.f32.mrb[0].mxu0
        %v2579 = vpop.f32.mrb[0].mxu0
        %v2580 = vpop.f32.mrb[0].mxu0
        %2581 = vdwg.mxu0
        %v2582 = vpack.c.bf16 %v2577, %v2577
        %v2584 = vunpack.c.l.b16 %v2582
        %v2585 = vpack.c.b16 %v2584, %v2584
        %2586 = vrot.lane.b32.xlu0 %v2585, 24
        %v2587 = vpop.permute.xlu0 %2586
        %2589 = vst.msk [vmem:[#allocation2] sm:$0xf] %vm1761, %v2587
        %v2590 = vld [vmem:[#allocation2] sm:$0xf]
        %v2591 = vld [vmem:[%s13] sm:$0xf]
        %v2592 = vld [vmem:[%s13 + $0x4] sm:$0xf]
        %v2593 = vld [vmem:[%s13 + $0x8] sm:$0xf]
        %v2594 = vld [vmem:[%s13 + $0xc] sm:$0xf]
        %v2595 = vld [vmem:[%s14] sm:$0x1]
        %v2597 = vlaneseq
        %v2598 = vshrl.u32 %v2597, 7
        %v2599 = vsub.s32 0, %v2598
        %v2600 = vrot.slane %v2595, %v2599
        %v2606 = vunpack.c.l.b16 %v2591
        %v2607 = vunpack.c.l.b16 %v2592
        %v2608 = vunpack.c.l.b16 %v2593
        %v2609 = vunpack.c.l.b16 %v2594
        %v2610 = vpack.c.b16 %v2607, %v2606
        %v2611 = vpack.c.b16 %v2609, %v2608
        %v2615 = vsel %vm1051, %v2590, 0
        %2617 = vmatprep.subr.bf16.mxu0 0
        %2618 = vmatpush1.bf16.msra.mxu0 %v2610
        %2619 = vmatprep.subr.bf16.mxu0 0
        %2620 = vmatpush1.bf16.msra.mxu0 %v2611
        %2621 = vmatprep.subr.bf16.mxu0 0
        %2622 = vmatpush1.bf16.msra.mxu0 0
        %2623 = vmatprep.subr.bf16.mxu0 0
        %2624 = vmatpush1.bf16.msra.mxu0 0
        %2625 = vmatprep.subr.bf16.mxu0 0
        %2626 = vmatpush1.bf16.msra.mxu0 0
        %2627 = vmatprep.subr.bf16.mxu0 0
        %2628 = vmatpush1.bf16.msra.mxu0 0
        %2629 = vmatprep.subr.bf16.mxu0 0
        %2630 = vmatpush1.bf16.msra.mxu0 0
        %2631 = vmatprep.subr.bf16.mxu0 0
        %2632 = vmatpush1.bf16.msra.mxu0 0
        %2633 = vmatprep.subr.bf16.mxu0 0
        %2634 = vmatpush1.bf16.msra.mxu0 0
        %2635 = vmatprep.subr.bf16.mxu0 0
        %2636 = vmatpush1.bf16.msra.mxu0 0
        %2637 = vmatprep.subr.bf16.mxu0 0
        %2638 = vmatpush1.bf16.msra.mxu0 0
        %2639 = vmatprep.subr.bf16.mxu0 0
        %2640 = vmatpush1.bf16.msra.mxu0 0
        %2641 = vmatprep.subr.bf16.mxu0 0
        %2642 = vmatpush1.bf16.msra.mxu0 0
        %2643 = vmatprep.subr.bf16.mxu0 0
        %2644 = vmatpush1.bf16.msra.mxu0 0
        %2645 = vmatprep.subr.bf16.mxu0 0
        %2646 = vmatpush1.bf16.msra.mxu0 0
        %2647 = vmatprep.subr.bf16.mxu0 0
        %2648 = vmatpush1.bf16.msra.mxu0 0
        %2649 = vmatprep.mubr.bf16.mxu0 0
        %2650 = vmatmul.mubr.bf16.gmra.mrb[0].mxu0 %v2615
        %v2651 = vpop.f32.mrb[0].mxu0
        %v2652 = vadd.f32 %v2600, %v2651
        %v2653 = vpop.f32.mrb[0].mxu0
        %v2654 = vpop.f32.mrb[0].mxu0
        %v2655 = vpop.f32.mrb[0].mxu0
        %2656 = vdwg.mxu0
        %v2657 = vadd.f32 %v1860, %v2652
        %v2658 = vld [vmem:[%s21] sm:$0x1]
        %v2659 = vld [vmem:[%s22] sm:$0x1]
        %v2660 = vsel %vm1051, %v2657, 0.0
        %2661 = vadd.xlane.f32.xlu0 %v2660
        %v2662 = vpop.xlane.xlu0 %2661
        %v2663 = vmul.f32 %v2662, %v1836
        %v2664 = vsub.f32 %v2657, %v2663
        %v2665 = vmul.f32 %v2664, %v2664
        %v2666 = vsel %vm1051, %v2665, 0.0
        %2667 = vadd.xlane.f32.xlu0 %v2666
        %v2668 = vpop.xlane.xlu0 %2667
        %v2669 = vmul.f32 %v2668, %v1836
        %v2670 = vadd.f32 %v2669, 1e-05
        %v2671 = vrsqrt.pop %v2670
        %v2672 = vmul.f32 %v2664, %v2671
        %v2674 = vlaneseq
        %v2675 = vshrl.u32 %v2674, 7
        %v2676 = vsub.s32 0, %v2675
        %v2677 = vrot.slane %v2658, %v2676
        %v2679 = vmul.f32 %v2672, %v2677
        %v2681 = vlaneseq
        %v2682 = vshrl.u32 %v2681, 7
        %v2683 = vsub.s32 0, %v2682
        %v2684 = vrot.slane %v2659, %v2683
        %v2686 = vadd.f32 %v2679, %v2684
        %v2687 = vpack.c.bf16 %v2686, %v2686
        %v2688 = vld [vmem:[%s15] sm:$0xf]
        %v2689 = vld [vmem:[%s15 + $0x4] sm:$0xf]
        %v2690 = vld [vmem:[%s15 + $0x8] sm:$0xf]
        %v2691 = vld [vmem:[%s15 + $0xc] sm:$0xf]
        %v2692 = vld [vmem:[%s16] sm:$0x1]
        %v2694 = vlaneseq
        %v2695 = vshrl.u32 %v2694, 7
        %v2696 = vsub.s32 0, %v2695
        %v2697 = vrot.slane %v2692, %v2696
        %v2703 = vunpack.c.l.b16 %v2688
        %v2704 = vunpack.c.l.b16 %v2689
        %v2705 = vunpack.c.l.b16 %v2690
        %v2706 = vunpack.c.l.b16 %v2691
        %v2707 = vpack.c.b16 %v2704, %v2703
        %v2708 = vpack.c.b16 %v2706, %v2705
        %v2712 = vsel %vm1051, %v2687, 0
        %2714 = vmatprep.subr.bf16.mxu0 0
        %2715 = vmatpush1.bf16.msra.mxu0 %v2707
        %2716 = vmatprep.subr.bf16.mxu0 0
        %2717 = vmatpush1.bf16.msra.mxu0 %v2708
        %2718 = vmatprep.subr.bf16.mxu0 0
        %2719 = vmatpush1.bf16.msra.mxu0 0
        %2720 = vmatprep.subr.bf16.mxu0 0
        %2721 = vmatpush1.bf16.msra.mxu0 0
        %2722 = vmatprep.subr.bf16.mxu0 0
        %2723 = vmatpush1.bf16.msra.mxu0 0
        %2724 = vmatprep.subr.bf16.mxu0 0
        %2725 = vmatpush1.bf16.msra.mxu0 0
        %2726 = vmatprep.subr.bf16.mxu0 0
        %2727 = vmatpush1.bf16.msra.mxu0 0
        %2728 = vmatprep.subr.bf16.mxu0 0
        %2729 = vmatpush1.bf16.msra.mxu0 0
        %2730 = vmatprep.subr.bf16.mxu0 0
        %2731 = vmatpush1.bf16.msra.mxu0 0
        %2732 = vmatprep.subr.bf16.mxu0 0
        %2733 = vmatpush1.bf16.msra.mxu0 0
        %2734 = vmatprep.subr.bf16.mxu0 0
        %2735 = vmatpush1.bf16.msra.mxu0 0
        %2736 = vmatprep.subr.bf16.mxu0 0
        %2737 = vmatpush1.bf16.msra.mxu0 0
        %2738 = vmatprep.subr.bf16.mxu0 0
        %2739 = vmatpush1.bf16.msra.mxu0 0
        %2740 = vmatprep.subr.bf16.mxu0 0
        %2741 = vmatpush1.bf16.msra.mxu0 0
        %2742 = vmatprep.subr.bf16.mxu0 0
        %2743 = vmatpush1.bf16.msra.mxu0 0
        %2744 = vmatprep.subr.bf16.mxu0 0
        %2745 = vmatpush1.bf16.msra.mxu0 0
        %2746 = vmatprep.mubr.bf16.mxu0 0
        %2747 = vmatmul.mubr.bf16.gmra.mrb[0].mxu0 %v2712
        %v2748 = vpop.f32.mrb[0].mxu0
        %v2749 = vadd.f32 %v2697, %v2748
        %v2750 = vpop.f32.mrb[0].mxu0
        %v2751 = vpop.f32.mrb[0].mxu0
        %v2752 = vpop.f32.mrb[0].mxu0
        %2753 = vdwg.mxu0
        %v2754 = vmax.f32 %v2749, 0.0
        %v2755 = vpack.c.bf16 %v2754, %v2754
        %v2756 = vld [vmem:[%s17] sm:$0xf]
        %v2757 = vld [vmem:[%s17 + $0x4] sm:$0xf]
        %v2758 = vld [vmem:[%s17 + $0x8] sm:$0xf]
        %v2759 = vld [vmem:[%s17 + $0xc] sm:$0xf]
        %v2760 = vld [vmem:[%s17 + $0x10] sm:$0xf]
        %v2761 = vld [vmem:[%s17 + $0x14] sm:$0xf]
        %v2762 = vld [vmem:[%s17 + $0x18] sm:$0xf]
        %v2763 = vld [vmem:[%s17 + $0x1c] sm:$0xf]
        %v2764 = vld [vmem:[%s18] sm:$0x1]
        %v2766 = vlaneseq
        %v2767 = vshrl.u32 %v2766, 7
        %v2768 = vsub.s32 0, %v2767
        %v2769 = vrot.slane %v2764, %v2768
        %v2779 = vunpack.c.l.b16 %v2756
        %v2780 = vunpack.c.l.b16 %v2757
        %v2781 = vunpack.c.l.b16 %v2758
        %v2782 = vunpack.c.l.b16 %v2759
        %v2783 = vunpack.c.l.b16 %v2760
        %v2784 = vunpack.c.l.b16 %v2761
        %v2785 = vunpack.c.l.b16 %v2762
        %v2786 = vunpack.c.l.b16 %v2763
        %v2787 = vpack.c.b16 %v2780, %v2779
        %v2788 = vpack.c.b16 %v2782, %v2781
        %v2789 = vpack.c.b16 %v2784, %v2783
        %v2790 = vpack.c.b16 %v2786, %v2785
        %vm2795 = vcmask 523264
        %v2797 = vsel %vm2795, %v2755, 0
        %2799 = vmatprep.subr.bf16.mxu0 0
        %2800 = vmatpush1.bf16.msra.mxu0 %v2787
        %2801 = vmatprep.subr.bf16.mxu0 0
        %2802 = vmatpush1.bf16.msra.mxu0 %v2788
        %2803 = vmatprep.subr.bf16.mxu0 0
        %2804 = vmatpush1.bf16.msra.mxu0 %v2789
        %2805 = vmatprep.subr.bf16.mxu0 0
        %2806 = vmatpush1.bf16.msra.mxu0 %v2790
        %2807 = vmatprep.subr.bf16.mxu0 0
        %2808 = vmatpush1.bf16.msra.mxu0 0
        %2809 = vmatprep.subr.bf16.mxu0 0
        %2810 = vmatpush1.bf16.msra.mxu0 0
        %2811 = vmatprep.subr.bf16.mxu0 0
        %2812 = vmatpush1.bf16.msra.mxu0 0
        %2813 = vmatprep.subr.bf16.mxu0 0
        %2814 = vmatpush1.bf16.msra.mxu0 0
        %2815 = vmatprep.subr.bf16.mxu0 0
        %2816 = vmatpush1.bf16.msra.mxu0 0
        %2817 = vmatprep.subr.bf16.mxu0 0
        %2818 = vmatpush1.bf16.msra.mxu0 0
        %2819 = vmatprep.subr.bf16.mxu0 0
        %2820 = vmatpush1.bf16.msra.mxu0 0
        %2821 = vmatprep.subr.bf16.mxu0 0
        %2822 = vmatpush1.bf16.msra.mxu0 0
        %2823 = vmatprep.subr.bf16.mxu0 0
        %2824 = vmatpush1.bf16.msra.mxu0 0
        %2825 = vmatprep.subr.bf16.mxu0 0
        %2826 = vmatpush1.bf16.msra.mxu0 0
        %2827 = vmatprep.subr.bf16.mxu0 0
        %2828 = vmatpush1.bf16.msra.mxu0 0
        %2829 = vmatprep.subr.bf16.mxu0 0
        %2830 = vmatpush1.bf16.msra.mxu0 0
        %2831 = vmatprep.mubr.bf16.mxu0 0
        %2832 = vmatmul.mubr.bf16.gmra.mrb[0].mxu0 %v2797
        %v2833 = vpop.f32.mrb[0].mxu0
        %v2834 = vadd.f32 %v2769, %v2833
        %v2835 = vpop.f32.mrb[0].mxu0
        %v2836 = vpop.f32.mrb[0].mxu0
        %v2837 = vpop.f32.mrb[0].mxu0
        %2838 = vdwg.mxu0
        %v2839 = vadd.f32 %v2686, %v2834
        %v2840 = vld [vmem:[%s23] sm:$0x1]
        %v2841 = vld [vmem:[%s24] sm:$0x1]
        %v2842 = vsel %vm1051, %v2839, 0.0
        %2843 = vadd.xlane.f32.xlu0 %v2842
        %v2844 = vpop.xlane.xlu0 %2843
        %v2845 = vmul.f32 %v2844, %v1836
        %v2846 = vsub.f32 %v2839, %v2845
        %v2847 = vmul.f32 %v2846, %v2846
        %v2848 = vsel %vm1051, %v2847, 0.0
        %2849 = vadd.xlane.f32.xlu0 %v2848
        %v2850 = vpop.xlane.xlu0 %2849
        %v2851 = vmul.f32 %v2850, %v1836
        %v2852 = vadd.f32 %v2851, 1e-05
        %v2853 = vrsqrt.pop %v2852
        %v2854 = vmul.f32 %v2846, %v2853
        %v2856 = vlaneseq
        %v2857 = vshrl.u32 %v2856, 7
        %v2858 = vsub.s32 0, %v2857
        %v2859 = vrot.slane %v2840, %v2858
        %v2861 = vmul.f32 %v2854, %v2859
        %v2863 = vlaneseq
        %v2864 = vshrl.u32 %v2863, 7
        %v2865 = vsub.s32 0, %v2864
        %v2866 = vrot.slane %v2841, %v2865
        %v2868 = vadd.f32 %v2861, %v2866
        %2869 = vst.msk [vmem:[%s979] sm:$0xff] %vm1051, %v2868
        %s2870 = sand.u32 %s639, 1
        %s2871 = scalar_lea.sflag [#allocation5], %s2870
        %s2872 = sand.u32 %s639, 1
        %s2873 = smul.addr %s2872, 8
        %s2874 = scalar_lea.vmem [#allocation8], %s2873
        %s2875 = sand.u32 %s51, 1
        %s2876 = scalar_lea.sflag [#allocation10], %s2875
        %s2877 = sand.u32 %s667, 1
        %s2878 = smul.addr %s2877, 32
        %s2879 = scalar_lea.vmem [#allocation9], %s2878
        %s2880 = sand.u32 %s51, 1
        %s2881 = scalar_lea.sflag [#allocation10], %s2880
        %s2882 = sand.u32 %s695, 1
        %s2883 = smul.addr %s2882, 32
        %s2884 = scalar_lea.vmem [#allocation11], %s2883
        // Predicated region
        $region129: #{tpu_custom_call.1} parent=119 // pred_check
          %p2885 = pneg %p649
        $region130: #{tpu_custom_call.1} parent=119 // pred_check_branch
          %2887 = sbr.rel (%p2885) target = $region132
        $region131: #{tpu_custom_call.1} parent=119 // pred_region
          %s2889 = ssub.s32 128, 128
          %2890 = vsyncadd %s2871, %s2889
          %s2891 = sadd.s32 %s56, %s55
          %s2892 = smul.addr %s2891, 128
          %s2893 = scalar_lea.hbm %s25, %s2892
          %s2895 = sshll.u32 %s2874, 4
          %s2896 = int_to_ptr.vmem [resolvable:$true] %s2895
          %2898 = dma.vmem_to_hbm [thread:$0]  %s2896, 128, %s2893, %s2871
        $region132: #{tpu_custom_call.1} parent=119 // pred_fallthru
          _
        // Predicated region
        $region133: #{tpu_custom_call.1} parent=119 // pred_check
          %p2899 = pneg %p677
        $region134: #{tpu_custom_call.1} parent=119 // pred_check_branch
          %2901 = sbr.rel (%p2899) target = $region136
        $region135: #{tpu_custom_call.1} parent=119 // pred_region
          %s2903 = ssub.s32 512, 512
          %2904 = vsyncadd %s2876, %s2903
          %s2905 = smul.addr %s55, 4
          %s2906 = sadd.s32 %s56, %s2905
          %s2907 = smul.addr %s2906, 128
          %s2908 = scalar_lea.hbm %s26, %s2907
          %s2909 = sshll.u32 %s2879, 4
          %s2910 = int_to_ptr.vmem [resolvable:$true] %s2909
          %2915 = dma.vmem_to_hbm [thread:$0]  %s2910, 512, %s2908, %s2876, 128, 128, 8
        $region136: #{tpu_custom_call.1} parent=119 // pred_fallthru
          _
        // Predicated region
        $region137: #{tpu_custom_call.1} parent=119 // pred_check
          %p2916 = pneg %p705
        $region138: #{tpu_custom_call.1} parent=119 // pred_check_branch
          %2918 = sbr.rel (%p2916) target = $region140
        $region139: #{tpu_custom_call.1} parent=119 // pred_region
          %s2920 = ssub.s32 512, 512
          %2921 = vsyncadd %s2881, %s2920
          %s2922 = smul.addr %s55, 4
          %s2923 = sadd.s32 %s56, %s2922
          %s2924 = smul.addr %s2923, 128
          %s2925 = scalar_lea.hbm %s27, %s2924
          %s2926 = sshll.u32 %s2884, 4
          %s2927 = int_to_ptr.vmem [resolvable:$true] %s2926
          %2932 = dma.vmem_to_hbm [thread:$0]  %s2927, 512, %s2925, %s2881, 128, 128, 8
        $region140: #{tpu_custom_call.1} parent=119 // pred_fallthru
          _
      $region120: #{tpu_custom_call.1} parent=5 // pred_fallthru
        _
      %p2933 = scmp.le.s32.totalorder 2, %s46
      // Predicated region
      $region141: #{tpu_custom_call.1} parent=5 // pred_check
        %p2934 = pneg %p2933
      $region142: #{tpu_custom_call.1} parent=5 // pred_check_branch
        %2936 = sbr.rel (%p2934) target = $region144
      $region143: #{tpu_custom_call.1} parent=5 // pred_region
        %s2937 = ssub.s32 %s46, 2
        // Predicated region
        $region145: #{tpu_custom_call.1} parent=143 // pred_check
          %p2938 = pneg %p655
        $region146: #{tpu_custom_call.1} parent=143 // pred_check_branch
          %2940 = sbr.rel (%p2938) target = $region148
        $region147: #{tpu_custom_call.1} parent=143 // pred_region
          %s2941 = sand.u32 %s640, 1
          %s2942 = scalar_lea.sflag [#allocation5], %s2941
          %s2943 = sand.u32 %s640, 1
          %s2944 = smul.addr %s2943, 8
          %s2945 = scalar_lea.vmem [#allocation8], %s2944
          %2946 = dma.done %s2942, 128
        $region148: #{tpu_custom_call.1} parent=143 // pred_fallthru
          _
        // Predicated region
        $region149: #{tpu_custom_call.1} parent=143 // pred_check
          %p2947 = pneg %p683
        $region150: #{tpu_custom_call.1} parent=143 // pred_check_branch
          %2949 = sbr.rel (%p2947) target = $region152
        $region151: #{tpu_custom_call.1} parent=143 // pred_region
          %s2950 = sand.u32 %s52, 1
          %s2951 = scalar_lea.sflag [#allocation10], %s2950
          %s2952 = sand.u32 %s668, 1
          %s2953 = smul.addr %s2952, 32
          %s2954 = scalar_lea.vmem [#allocation9], %s2953
          %2955 = dma.done %s2951, 512
        $region152: #{tpu_custom_call.1} parent=143 // pred_fallthru
          _
        // Predicated region
        $region153: #{tpu_custom_call.1} parent=143 // pred_check
          %p2956 = pneg %p711
        $region154: #{tpu_custom_call.1} parent=143 // pred_check_branch
          %2958 = sbr.rel (%p2956) target = $region156
        $region155: #{tpu_custom_call.1} parent=143 // pred_region
          %s2959 = sand.u32 %s52, 1
          %s2960 = scalar_lea.sflag [#allocation10], %s2959
          %s2961 = sand.u32 %s696, 1
          %s2962 = smul.addr %s2961, 32
          %s2963 = scalar_lea.vmem [#allocation11], %s2962
          %2964 = dma.done %s2960, 512
        $region156: #{tpu_custom_call.1} parent=143 // pred_fallthru
          _
      $region144: #{tpu_custom_call.1} parent=5 // pred_fallthru
        _
    $region6: #{tpu_custom_call.1} parent=1 // loop_footer
      %s50 = sadd.s32 1, %s46
    $region7: #{tpu_custom_call.1} parent=1 // loop_footer_branch
      %45 = sbr.rel target = $region3
    $region8: #{tpu_custom_call.1} parent=1 // loop_exit
      _
    %2965 = vsyncpa [#allocation4], 1
    %s2966 = scalar_lea.sflag [#allocation4], 1
    %2967 = vsyncpa %s2966, 1
    %2968 = vsyncpa [#allocation7], 1
    %s2969 = scalar_lea.sflag [#allocation7], 1
    %2970 = vsyncpa %s2969, 1
    %2971 = vsyncpa [#allocation5], 1
    %s2972 = scalar_lea.sflag [#allocation5], 1
    %2973 = vsyncpa %s2972, 1
    %2974 = vsyncpa [#allocation10], 1
    %s2975 = scalar_lea.sflag [#allocation10], 1
    %2976 = vsyncpa %s2975, 1

</llo_original>
